<compile_context>
chip_gen: v7x
topology: tpu7x:2x2x1
jax: 0.10.0
libtpu: 0.0.40
codegen_flags: <defaults>
</compile_context>

<pallas_src>
import functools
import math

import jax
import jax.numpy as jnp
from jax.experimental import pallas as pl
from jax.experimental.pallas import tpu as pltpu


def _sigmoid(v):
    # sigmoid(x) = 0.5 * (tanh(0.5 x) + 1): one EUP push, no f32 divide.
    return 0.5 * (jnp.tanh(0.5 * v) + 1.0)


def _gru_bidir_kernel(x_ref, wih_ref, whhf_ref, whhb_ref, brz_ref, bn_ref,
                      y_ref, gxf_scr, gxb_scr, *, T, B, H):
    """Both directions of one GRU layer over the whole sequence, fused.

    Flat, lane-dense 2-D layouts:
      x_ref    : (T*B, I)   time-major inputs, row = t*B + b
      wih_ref  : (I, 6H)    [W_ih_fwd | W_ih_bwd], gate order [r, z, n]
      whhf_ref : (H, 3H)    forward  W_hh
      whhb_ref : (H, 3H)    backward W_hh
      brz_ref  : (1, 6H)    b_ih (all gates, both dirs) with b_hh folded in for r,z
      bn_ref   : (1, 2H)    [b_hh_n_fwd | b_hh_n_bwd]  (stays inside r*(...))
      y_ref    : (T*B, 2H)  output; fwd hidden in [:, :H], bwd hidden in [:, H:]
      gx*_scr  : (T*B, 3H)  precomputed input gates per direction (VMEM scratch)
    """
    H2, H3 = 2 * H, 3 * H

    # One fused MXU matmul: input projection for every timestep, all three
    # gates and both directions; b_ih (+ b_hh for r,z) folded in.
    gx = jnp.dot(x_ref[...], wih_ref[...],
                 preferred_element_type=jnp.float32) + brz_ref[...]
    gxf_scr[...] = gx[:, :H3]
    gxb_scr[...] = gx[:, H3:]

    whh_f = whhf_ref[...]
    whh_b = whhb_ref[...]
    # Hoist bias broadcasts out of the loop (JAX does not CSE broadcast_in_dim).
    bn_f = jnp.broadcast_to(bn_ref[:, :H], (B, H))
    bn_b = jnp.broadcast_to(bn_ref[:, H:], (B, H))

    def gate(gx_t, gh_t, bn, h):
        rz = _sigmoid(gx_t[:, :H2] + gh_t[:, :H2])     # one sigmoid for r and z
        r, z = rz[:, :H], rz[:, H:]
        n = jnp.tanh(gx_t[:, H2:] + r * (gh_t[:, H2:] + bn))
        return (1.0 - z) * n + z * h

    def step(i, carry):
        h_f, h_b = carry                               # hidden states live in vregs
        tf = pl.multiple_of(i * B, B)                  # forward  timestep i
        tb = pl.multiple_of((T - 1 - i) * B, B)        # backward timestep T-1-i
        gh_f = jnp.dot(h_f, whh_f, preferred_element_type=jnp.float32)
        gh_b = jnp.dot(h_b, whh_b, preferred_element_type=jnp.float32)
        h_f = gate(gxf_scr[pl.ds(tf, B), :], gh_f, bn_f, h_f)
        h_b = gate(gxb_scr[pl.ds(tb, B), :], gh_b, bn_b, h_b)
        y_ref[pl.ds(tf, B), :H] = h_f
        y_ref[pl.ds(tb, B), H:] = h_b
        return h_f, h_b

    h0 = jnp.zeros((B, H), jnp.float32)                # hidden=None -> zeros
    jax.lax.fori_loop(0, T, step, (h0, h0), unroll=min(T, 8))


def _gru_bidir_layer(x2d, packed, *, T, B):
    """x2d: (T*B, I) time-major flat.  Returns (T*B, 2H), dirs concatenated."""
    TB, I = x2d.shape
    H = packed["whh_f"].shape[0]
    H3, H6 = 3 * H, 6 * H

    # Size the scoped VMEM limit from the actual resident buffers
    # (x2 for pipeline double-buffering of the I/O blocks) + headroom.
    elems = (2 * (TB * I + I * H6 + 2 * H * H3 + H6 + 2 * H + TB * 2 * H)
             + 2 * TB * H3)
    vmem_limit = min(64 * 1024 * 1024, max(32 * 1024 * 1024, 4 * elems + (4 << 20)))
    # TODO(synk): for realistic T/B/H the (T*B, 3H) gx scratches and the output
    # block should be time-chunked (pltpu.emit_pipeline / manual double-buffer)
    # so VMEM residency stays under v7x's 64 MiB; small shapes fit as-is.

    kernel = functools.partial(_gru_bidir_kernel, T=T, B=B, H=H)
    return pl.pallas_call(
        kernel,
        out_shape=jax.ShapeDtypeStruct((TB, 2 * H), jnp.float32),
        grid=(1,),
        in_specs=[
            pl.BlockSpec((TB, I), lambda i: (0, 0)),      # x (shared by both dirs)
            pl.BlockSpec((I, H6), lambda i: (0, 0)),      # W_ih fwd|bwd
            pl.BlockSpec((H, H3), lambda i: (0, 0)),      # W_hh fwd
            pl.BlockSpec((H, H3), lambda i: (0, 0)),      # W_hh bwd
            pl.BlockSpec((1, H6), lambda i: (0, 0)),      # folded biases (r,z + b_ih)
            pl.BlockSpec((1, 2 * H), lambda i: (0, 0)),   # b_hh_n fwd|bwd
        ],
        out_specs=pl.BlockSpec((TB, 2 * H), lambda i: (0, 0)),
        scratch_shapes=[
            pltpu.VMEM((TB, H3), jnp.float32),            # gx forward
            pltpu.VMEM((TB, H3), jnp.float32),            # gx backward
        ],
        compiler_params=pltpu.CompilerParams(
            dimension_semantics=("arbitrary",),
            vmem_limit_bytes=int(vmem_limit)),
    )(x2d, packed["wih_cat"], packed["whh_f"], packed["whh_b"],
      packed["brz"], packed["bn"])


def _pack_layer(p):
    """Raw per-direction GRU params -> fused kernel layout (pure glue)."""
    H = p["whh"].shape[-1] // 3
    wih_cat = jnp.concatenate([p["wih"][0], p["wih"][1]], axis=1)          # (I, 6H)
    zeros_n = jnp.zeros((1, H), jnp.float32)
    brz = jnp.concatenate(
        [p["bih"][d] + jnp.concatenate([p["bhh"][d][:, :2 * H], zeros_n], axis=1)
         for d in range(2)], axis=1)                                       # (1, 6H)
    bn = jnp.concatenate([p["bhh"][0][:, 2 * H:], p["bhh"][1][:, 2 * H:]], axis=1)
    return dict(wih_cat=wih_cat, whh_f=p["whh"][0], whh_b=p["whh"][1],
                brz=brz, bn=bn)


def gru_forward(layers, x):
    """Equivalent of RNN.forward: out, _ = nn.GRU(...)(x, None); return out.

    x: (B, T, input_size) batch-first.  Returns (B, T, 2*hidden_size).
    """
    B, T, _ = x.shape
    H = layers[0]["whh"].shape[-1] // 3
    seq = jnp.transpose(x, (1, 0, 2)).reshape(T * B, -1)   # time-major flat (glue)
    for p in layers:
        seq = _gru_bidir_layer(seq, _pack_layer(p), T=T, B=B)   # (T*B, 2H)
        # TODO(synk): inter-layer dropout (nn.GRU dropout, training-mode only)
        # omitted — this is the deterministic eval/inference forward.
    return jnp.transpose(seq.reshape(T, B, 2 * H), (1, 0, 2))


# ----------------------------- parameter init --------------------------------

def init_gru_params(key, input_size, hidden_size, num_layers):
    """PyTorch-style U(-1/sqrt(H), 1/sqrt(H)) init; gate order [r, z, n].

    Weights stored pre-transposed as (in, 3H)/(H, 3H) and stacked over the two
    directions: wih (2, in_l, 3H), whh (2, H, 3H), biases (2, 1, 3H).
    """
    H = hidden_size
    bound = 1.0 / math.sqrt(H)
    layers = []
    for l in range(num_layers):
        in_l = input_size if l == 0 else 2 * H
        ws = {"wih": [], "whh": [], "bih": [], "bhh": []}
        for _ in range(2):                                  # directions
            key, k1, k2, k3, k4 = jax.random.split(key, 5)
            ws["wih"].append(jax.random.uniform(k1, (in_l, 3 * H), jnp.float32, -bound, bound))
            ws["whh"].append(jax.random.uniform(k2, (H, 3 * H), jnp.float32, -bound, bound))
            ws["bih"].append(jax.random.uniform(k3, (1, 3 * H), jnp.float32, -bound, bound))
            ws["bhh"].append(jax.random.uniform(k4, (1, 3 * H), jnp.float32, -bound, bound))
        layers.append({k: jnp.stack(v) for k, v in ws.items()})
    return layers


# ------------------------- pure-JAX reference (check) ------------------------

def gru_reference(layers, x):
    B, T, _ = x.shape
    H = layers[0]["whh"].shape[-1] // 3
    hp = jax.lax.Precision.HIGHEST
    seq = jnp.transpose(x, (1, 0, 2))                       # (T, B, feat)
    for p in layers:
        outs = []
        for d in range(2):
            wih, whh = p["wih"][d], p["whh"][d]
            bih, bhh = p["bih"][d], p["bhh"][d]

            def step(h, xt, wih=wih, whh=whh, bih=bih, bhh=bhh):
                gx = jnp.dot(xt, wih, precision=hp) + bih
                gh = jnp.dot(h, whh, precision=hp) + bhh
                r = jax.nn.sigmoid(gx[:, :H] + gh[:, :H])
                z = jax.nn.sigmoid(gx[:, H:2 * H] + gh[:, H:2 * H])
                n = jnp.tanh(gx[:, 2 * H:] + r * gh[:, 2 * H:])
                hn = (1.0 - z) * n + z * h
                return hn, hn

            xs = seq if d == 0 else seq[::-1]
            _, ys = jax.lax.scan(step, jnp.zeros((B, H), jnp.float32), xs)
            outs.append(ys if d == 0 else ys[::-1])
        seq = jnp.concatenate(outs, axis=-1)
    return jnp.transpose(seq, (1, 0, 2))


if __name__ == "__main__":
    INPUT_SIZE, HIDDEN_SIZE, NUM_LAYERS = 16, 32, 2
    BATCH, SEQ = 2, 8

    key = jax.random.PRNGKey(0)
    kp, kx = jax.random.split(key)
    layers = init_gru_params(kp, INPUT_SIZE, HIDDEN_SIZE, NUM_LAYERS)
    x = jax.random.normal(kx, (BATCH, SEQ, INPUT_SIZE), jnp.float32)

    fwd = jax.jit(gru_forward)
    out = jax.block_until_ready(fwd(layers, x))

    assert out.shape == (BATCH, SEQ, 2 * HIDDEN_SIZE), out.shape
    assert bool(jnp.all(jnp.isfinite(out)))

    ref = jax.jit(gru_reference)(layers, x)
    err = float(jnp.max(jnp.abs(out - ref)))
    # Kernel matmuls use default MXU precision; reference uses HIGHEST ->
    # allow a small numerical gap on real hardware.
    assert bool(jnp.allclose(out, ref, atol=2e-2, rtol=2e-2)), err

    print("KERNEL_OK")
</pallas_src>

<mosaic_0001>
module attributes {stable_mosaic.version = 11 : i64} {
  func.func @_gru_bidir_kernel(%arg0: i32, %arg1: memref<16x16xf32, #tpu.memory_space<vmem>>, %arg2: memref<16x192xf32, #tpu.memory_space<vmem>>, %arg3: memref<32x96xf32, #tpu.memory_space<vmem>>, %arg4: memref<32x96xf32, #tpu.memory_space<vmem>>, %arg5: memref<1x192xf32, #tpu.memory_space<vmem>>, %arg6: memref<1x64xf32, #tpu.memory_space<vmem>>, %arg7: memref<16x64xf32, #tpu.memory_space<vmem>>, %arg8: memref<16x96xf32, #tpu.memory_space<vmem>>, %arg9: memref<16x96xf32, #tpu.memory_space<vmem>>) attributes {dimension_semantics = [#tpu.dimension_semantics<arbitrary>], iteration_bounds = array<i64: 1>, scalar_prefetch = 0 : i64, scratch_operands = 2 : i64, tpu.core_type = #tpu.core_type<tc>, window_params = [{pipeline_mode = #tpu.pipeline_mode<synchronous>, transform_indices = @transform_0, window_bounds = array<i64: 16, 16>}, {pipeline_mode = #tpu.pipeline_mode<synchronous>, transform_indices = @transform_1, window_bounds = array<i64: 16, 192>}, {pipeline_mode = #tpu.pipeline_mode<synchronous>, transform_indices = @transform_2, window_bounds = array<i64: 32, 96>}, {pipeline_mode = #tpu.pipeline_mode<synchronous>, transform_indices = @transform_3, window_bounds = array<i64: 32, 96>}, {pipeline_mode = #tpu.pipeline_mode<synchronous>, transform_indices = @transform_4, window_bounds = array<i64: 1, 192>}, {pipeline_mode = #tpu.pipeline_mode<synchronous>, transform_indices = @transform_5, window_bounds = array<i64: 1, 64>}, {pipeline_mode = #tpu.pipeline_mode<synchronous>, transform_indices = @transform_6, window_bounds = array<i64: 16, 64>}]} {
    %c0 = arith.constant 0 : index
    %c0_0 = arith.constant 0 : index
    %0 = vector.load %arg1[%c0, %c0_0] : memref<16x16xf32, #tpu.memory_space<vmem>>, vector<16x16xf32>
    %c0_1 = arith.constant 0 : index
    %c0_2 = arith.constant 0 : index
    %1 = vector.load %arg2[%c0_1, %c0_2] : memref<16x192xf32, #tpu.memory_space<vmem>>, vector<16x192xf32>
    %cst = arith.constant dense<0.000000e+00> : vector<16x192xf32>
    %2 = tpu.matmul %0, %1, %cst {dimension_numbers = #tpu.dot_dimension_numbers<[1], [0], [0], [1], [0, 0, 1, 1], [], []>} : vector<16x16xf32>, vector<16x192xf32>, vector<16x192xf32> -> vector<16x192xf32>
    %c0_3 = arith.constant 0 : index
    %c0_4 = arith.constant 0 : index
    %3 = vector.load %arg5[%c0_3, %c0_4] : memref<1x192xf32, #tpu.memory_space<vmem>>, vector<1x192xf32>
    %4 = vector.broadcast %3 : vector<1x192xf32> to vector<16x192xf32>
    %5 = arith.addf %2, %4 : vector<16x192xf32>
    %6 = vector.extract_strided_slice %5 {offsets = [0, 0], sizes = [16, 96], strides = [1, 1]} : vector<16x192xf32> to vector<16x96xf32>
    %c0_5 = arith.constant 0 : index
    %c0_6 = arith.constant 0 : index
    %7 = vector.load %arg8[%c0_5, %c0_6] : memref<16x96xf32, #tpu.memory_space<vmem>>, vector<16x96xf32>
    tpu.vector_store %arg8[%c0_5, %c0_6], %6 {strides = array<i32>} : memref<16x96xf32, #tpu.memory_space<vmem>>, vector<16x96xf32>,
    %8 = vector.extract_strided_slice %5 {offsets = [0, 96], sizes = [16, 96], strides = [1, 1]} : vector<16x192xf32> to vector<16x96xf32>
    %c0_7 = arith.constant 0 : index
    %c0_8 = arith.constant 0 : index
    %9 = vector.load %arg9[%c0_7, %c0_8] : memref<16x96xf32, #tpu.memory_space<vmem>>, vector<16x96xf32>
    tpu.vector_store %arg9[%c0_7, %c0_8], %8 {strides = array<i32>} : memref<16x96xf32, #tpu.memory_space<vmem>>, vector<16x96xf32>,
    %c0_9 = arith.constant 0 : index
    %c0_10 = arith.constant 0 : index
    %10 = vector.load %arg3[%c0_9, %c0_10] : memref<32x96xf32, #tpu.memory_space<vmem>>, vector<32x96xf32>
    %c0_11 = arith.constant 0 : index
    %c0_12 = arith.constant 0 : index
    %11 = vector.load %arg4[%c0_11, %c0_12] : memref<32x96xf32, #tpu.memory_space<vmem>>, vector<32x96xf32>
    %c0_13 = arith.constant 0 : index
    %c0_14 = arith.constant 0 : index
    %12 = vector.load %arg6[%c0_13, %c0_14] : memref<1x64xf32, #tpu.memory_space<vmem>>, vector<1x32xf32>
    %13 = vector.shape_cast %12 : vector<1x32xf32> to vector<1x32xf32>
    %14 = vector.broadcast %13 : vector<1x32xf32> to vector<2x32xf32>
    %c0_15 = arith.constant 0 : index
    %c32 = arith.constant 32 : index
    %15 = vector.load %arg6[%c0_15, %c32] : memref<1x64xf32, #tpu.memory_space<vmem>>, vector<1x32xf32>
    %16 = vector.shape_cast %15 : vector<1x32xf32> to vector<1x32xf32>
    %17 = vector.broadcast %16 : vector<1x32xf32> to vector<2x32xf32>
    %cst_16 = arith.constant 0.000000e+00 : f32
    %18 = vector.broadcast %cst_16 : f32 to vector<2x32xf32>
    %c0_i32 = arith.constant 0 : i32
    %c2_i32 = arith.constant 2 : i32
    %19 = arith.muli %c0_i32, %c2_i32 : i32
    %20 = tpu.assume_multiple %19, 2 : i32
    %c7_i32 = arith.constant 7 : i32
    %21 = arith.subi %c7_i32, %c0_i32 : i32
    %c2_i32_17 = arith.constant 2 : i32
    %22 = arith.muli %21, %c2_i32_17 : i32
    %23 = tpu.assume_multiple %22, 2 : i32
    %cst_18 = arith.constant dense<0.000000e+00> : vector<2x96xf32>
    %24 = tpu.matmul %18, %10, %cst_18 {dimension_numbers = #tpu.dot_dimension_numbers<[1], [0], [0], [1], [0, 0, 1, 1], [], []>} : vector<2x32xf32>, vector<32x96xf32>, vector<2x96xf32> -> vector<2x96xf32>
    %cst_19 = arith.constant dense<0.000000e+00> : vector<2x96xf32>
    %25 = tpu.matmul %18, %11, %cst_19 {dimension_numbers = #tpu.dot_dimension_numbers<[1], [0], [0], [1], [0, 0, 1, 1], [], []>} : vector<2x32xf32>, vector<32x96xf32>, vector<2x96xf32> -> vector<2x96xf32>
    %26 = arith.index_cast %20 : i32 to index
    %c0_20 = arith.constant 0 : index
    %27 = vector.load %arg8[%26, %c0_20] : memref<16x96xf32, #tpu.memory_space<vmem>>, vector<2x96xf32>
    %28 = vector.extract_strided_slice %27 {offsets = [0, 0], sizes = [2, 64], strides = [1, 1]} : vector<2x96xf32> to vector<2x64xf32>
    %29 = vector.extract_strided_slice %24 {offsets = [0, 0], sizes = [2, 64], strides = [1, 1]} : vector<2x96xf32> to vector<2x64xf32>
    %30 = arith.addf %28, %29 : vector<2x64xf32>
    %cst_21 = arith.constant 5.000000e-01 : f32
    %31 = vector.broadcast %cst_21 : f32 to vector<2x64xf32>
    %32 = arith.mulf %31, %30 : vector<2x64xf32>
    %33 = math.tanh %32 : vector<2x64xf32>
    %cst_22 = arith.constant 1.000000e+00 : f32
    %34 = vector.broadcast %cst_22 : f32 to vector<2x64xf32>
    %35 = arith.addf %33, %34 : vector<2x64xf32>
    %cst_23 = arith.constant 5.000000e-01 : f32
    %36 = vector.broadcast %cst_23 : f32 to vector<2x64xf32>
    %37 = arith.mulf %36, %35 : vector<2x64xf32>
    %38 = vector.extract_strided_slice %37 {offsets = [0, 0], sizes = [2, 32], strides = [1, 1]} : vector<2x64xf32> to vector<2x32xf32>
    %39 = vector.extract_strided_slice %37 {offsets = [0, 32], sizes = [2, 32], strides = [1, 1]} : vector<2x64xf32> to vector<2x32xf32>
    %40 = vector.extract_strided_slice %27 {offsets = [0, 64], sizes = [2, 32], strides = [1, 1]} : vector<2x96xf32> to vector<2x32xf32>
    %41 = vector.extract_strided_slice %24 {offsets = [0, 64], sizes = [2, 32], strides = [1, 1]} : vector<2x96xf32> to vector<2x32xf32>
    %42 = arith.addf %41, %14 : vector<2x32xf32>
    %43 = arith.mulf %38, %42 : vector<2x32xf32>
    %44 = arith.addf %40, %43 : vector<2x32xf32>
    %45 = math.tanh %44 : vector<2x32xf32>
    %cst_24 = arith.constant 1.000000e+00 : f32
    %46 = vector.broadcast %cst_24 : f32 to vector<2x32xf32>
    %47 = arith.subf %46, %39 : vector<2x32xf32>
    %48 = arith.mulf %47, %45 : vector<2x32xf32>
    %49 = arith.mulf %39, %18 : vector<2x32xf32>
    %50 = arith.addf %48, %49 : vector<2x32xf32>
    %51 = arith.index_cast %23 : i32 to index
    %c0_25 = arith.constant 0 : index
    %52 = vector.load %arg9[%51, %c0_25] : memref<16x96xf32, #tpu.memory_space<vmem>>, vector<2x96xf32>
    %53 = vector.extract_strided_slice %52 {offsets = [0, 0], sizes = [2, 64], strides = [1, 1]} : vector<2x96xf32> to vector<2x64xf32>
    %54 = vector.extract_strided_slice %25 {offsets = [0, 0], sizes = [2, 64], strides = [1, 1]} : vector<2x96xf32> to vector<2x64xf32>
    %55 = arith.addf %53, %54 : vector<2x64xf32>
    %cst_26 = arith.constant 5.000000e-01 : f32
    %56 = vector.broadcast %cst_26 : f32 to vector<2x64xf32>
    %57 = arith.mulf %56, %55 : vector<2x64xf32>
    %58 = math.tanh %57 : vector<2x64xf32>
    %cst_27 = arith.constant 1.000000e+00 : f32
    %59 = vector.broadcast %cst_27 : f32 to vector<2x64xf32>
    %60 = arith.addf %58, %59 : vector<2x64xf32>
    %cst_28 = arith.constant 5.000000e-01 : f32
    %61 = vector.broadcast %cst_28 : f32 to vector<2x64xf32>
    %62 = arith.mulf %61, %60 : vector<2x64xf32>
    %63 = vector.extract_strided_slice %62 {offsets = [0, 0], sizes = [2, 32], strides = [1, 1]} : vector<2x64xf32> to vector<2x32xf32>
    %64 = vector.extract_strided_slice %62 {offsets = [0, 32], sizes = [2, 32], strides = [1, 1]} : vector<2x64xf32> to vector<2x32xf32>
    %65 = vector.extract_strided_slice %52 {offsets = [0, 64], sizes = [2, 32], strides = [1, 1]} : vector<2x96xf32> to vector<2x32xf32>
    %66 = vector.extract_strided_slice %25 {offsets = [0, 64], sizes = [2, 32], strides = [1, 1]} : vector<2x96xf32> to vector<2x32xf32>
    %67 = arith.addf %66, %17 : vector<2x32xf32>
    %68 = arith.mulf %63, %67 : vector<2x32xf32>
    %69 = arith.addf %65, %68 : vector<2x32xf32>
    %70 = math.tanh %69 : vector<2x32xf32>
    %cst_29 = arith.constant 1.000000e+00 : f32
    %71 = vector.broadcast %cst_29 : f32 to vector<2x32xf32>
    %72 = arith.subf %71, %64 : vector<2x32xf32>
    %73 = arith.mulf %72, %70 : vector<2x32xf32>
    %74 = arith.mulf %64, %18 : vector<2x32xf32>
    %75 = arith.addf %73, %74 : vector<2x32xf32>
    %76 = arith.index_cast %20 : i32 to index
    %c0_30 = arith.constant 0 : index
    %77 = vector.load %arg7[%76, %c0_30] : memref<16x64xf32, #tpu.memory_space<vmem>>, vector<2x32xf32>
    tpu.vector_store %arg7[%76, %c0_30], %50 {strides = array<i32>} : memref<16x64xf32, #tpu.memory_space<vmem>>, vector<2x32xf32>,
    %78 = arith.index_cast %23 : i32 to index
    %c32_31 = arith.constant 32 : index
    %79 = vector.load %arg7[%78, %c32_31] : memref<16x64xf32, #tpu.memory_space<vmem>>, vector<2x32xf32>
    tpu.vector_store %arg7[%78, %c32_31], %75 {strides = array<i32>} : memref<16x64xf32, #tpu.memory_space<vmem>>, vector<2x32xf32>,
    %c1_i32 = arith.constant 1 : i32
    %c2_i32_32 = arith.constant 2 : i32
    %80 = arith.muli %c1_i32, %c2_i32_32 : i32
    %81 = tpu.assume_multiple %80, 2 : i32
    %c7_i32_33 = arith.constant 7 : i32
    %82 = arith.subi %c7_i32_33, %c1_i32 : i32
    %c2_i32_34 = arith.constant 2 : i32
    %83 = arith.muli %82, %c2_i32_34 : i32
    %84 = tpu.assume_multiple %83, 2 : i32
    %cst_35 = arith.constant dense<0.000000e+00> : vector<2x96xf32>
    %85 = tpu.matmul %50, %10, %cst_35 {dimension_numbers = #tpu.dot_dimension_numbers<[1], [0], [0], [1], [0, 0, 1, 1], [], []>} : vector<2x32xf32>, vector<32x96xf32>, vector<2x96xf32> -> vector<2x96xf32>
    %cst_36 = arith.constant dense<0.000000e+00> : vector<2x96xf32>
    %86 = tpu.matmul %75, %11, %cst_36 {dimension_numbers = #tpu.dot_dimension_numbers<[1], [0], [0], [1], [0, 0, 1, 1], [], []>} : vector<2x32xf32>, vector<32x96xf32>, vector<2x96xf32> -> vector<2x96xf32>
    %87 = arith.index_cast %81 : i32 to index
    %c0_37 = arith.constant 0 : index
    %88 = vector.load %arg8[%87, %c0_37] : memref<16x96xf32, #tpu.memory_space<vmem>>, vector<2x96xf32>
    %89 = vector.extract_strided_slice %88 {offsets = [0, 0], sizes = [2, 64], strides = [1, 1]} : vector<2x96xf32> to vector<2x64xf32>
    %90 = vector.extract_strided_slice %85 {offsets = [0, 0], sizes = [2, 64], strides = [1, 1]} : vector<2x96xf32> to vector<2x64xf32>
    %91 = arith.addf %89, %90 : vector<2x64xf32>
    %cst_38 = arith.constant 5.000000e-01 : f32
    %92 = vector.broadcast %cst_38 : f32 to vector<2x64xf32>
    %93 = arith.mulf %92, %91 : vector<2x64xf32>
    %94 = math.tanh %93 : vector<2x64xf32>
    %cst_39 = arith.constant 1.000000e+00 : f32
    %95 = vector.broadcast %cst_39 : f32 to vector<2x64xf32>
    %96 = arith.addf %94, %95 : vector<2x64xf32>
    %cst_40 = arith.constant 5.000000e-01 : f32
    %97 = vector.broadcast %cst_40 : f32 to vector<2x64xf32>
    %98 = arith.mulf %97, %96 : vector<2x64xf32>
    %99 = vector.extract_strided_slice %98 {offsets = [0, 0], sizes = [2, 32], strides = [1, 1]} : vector<2x64xf32> to vector<2x32xf32>
    %100 = vector.extract_strided_slice %98 {offsets = [0, 32], sizes = [2, 32], strides = [1, 1]} : vector<2x64xf32> to vector<2x32xf32>
    %101 = vector.extract_strided_slice %88 {offsets = [0, 64], sizes = [2, 32], strides = [1, 1]} : vector<2x96xf32> to vector<2x32xf32>
    %102 = vector.extract_strided_slice %85 {offsets = [0, 64], sizes = [2, 32], strides = [1, 1]} : vector<2x96xf32> to vector<2x32xf32>
    %103 = arith.addf %102, %14 : vector<2x32xf32>
    %104 = arith.mulf %99, %103 : vector<2x32xf32>
    %105 = arith.addf %101, %104 : vector<2x32xf32>
    %106 = math.tanh %105 : vector<2x32xf32>
    %cst_41 = arith.constant 1.000000e+00 : f32
    %107 = vector.broadcast %cst_41 : f32 to vector<2x32xf32>
    %108 = arith.subf %107, %100 : vector<2x32xf32>
    %109 = arith.mulf %108, %106 : vector<2x32xf32>
    %110 = arith.mulf %100, %50 : vector<2x32xf32>
    %111 = arith.addf %109, %110 : vector<2x32xf32>
    %112 = arith.index_cast %84 : i32 to index
    %c0_42 = arith.constant 0 : index
    %113 = vector.load %arg9[%112, %c0_42] : memref<16x96xf32, #tpu.memory_space<vmem>>, vector<2x96xf32>
    %114 = vector.extract_strided_slice %113 {offsets = [0, 0], sizes = [2, 64], strides = [1, 1]} : vector<2x96xf32> to vector<2x64xf32>
    %115 = vector.extract_strided_slice %86 {offsets = [0, 0], sizes = [2, 64], strides = [1, 1]} : vector<2x96xf32> to vector<2x64xf32>
    %116 = arith.addf %114, %115 : vector<2x64xf32>
    %cst_43 = arith.constant 5.000000e-01 : f32
    %117 = vector.broadcast %cst_43 : f32 to vector<2x64xf32>
    %118 = arith.mulf %117, %116 : vector<2x64xf32>
    %119 = math.tanh %118 : vector<2x64xf32>
    %cst_44 = arith.constant 1.000000e+00 : f32
    %120 = vector.broadcast %cst_44 : f32 to vector<2x64xf32>
    %121 = arith.addf %119, %120 : vector<2x64xf32>
    %cst_45 = arith.constant 5.000000e-01 : f32
    %122 = vector.broadcast %cst_45 : f32 to vector<2x64xf32>
    %123 = arith.mulf %122, %121 : vector<2x64xf32>
    %124 = vector.extract_strided_slice %123 {offsets = [0, 0], sizes = [2, 32], strides = [1, 1]} : vector<2x64xf32> to vector<2x32xf32>
    %125 = vector.extract_strided_slice %123 {offsets = [0, 32], sizes = [2, 32], strides = [1, 1]} : vector<2x64xf32> to vector<2x32xf32>
    %126 = vector.extract_strided_slice %113 {offsets = [0, 64], sizes = [2, 32], strides = [1, 1]} : vector<2x96xf32> to vector<2x32xf32>
    %127 = vector.extract_strided_slice %86 {offsets = [0, 64], sizes = [2, 32], strides = [1, 1]} : vector<2x96xf32> to vector<2x32xf32>
    %128 = arith.addf %127, %17 : vector<2x32xf32>
    %129 = arith.mulf %124, %128 : vector<2x32xf32>
    %130 = arith.addf %126, %129 : vector<2x32xf32>
    %131 = math.tanh %130 : vector<2x32xf32>
    %cst_46 = arith.constant 1.000000e+00 : f32
    %132 = vector.broadcast %cst_46 : f32 to vector<2x32xf32>
    %133 = arith.subf %132, %125 : vector<2x32xf32>
    %134 = arith.mulf %133, %131 : vector<2x32xf32>
    %135 = arith.mulf %125, %75 : vector<2x32xf32>
    %136 = arith.addf %134, %135 : vector<2x32xf32>
    %137 = arith.index_cast %81 : i32 to index
    %c0_47 = arith.constant 0 : index
    %138 = vector.load %arg7[%137, %c0_47] : memref<16x64xf32, #tpu.memory_space<vmem>>, vector<2x32xf32>
    tpu.vector_store %arg7[%137, %c0_47], %111 {strides = array<i32>} : memref<16x64xf32, #tpu.memory_space<vmem>>, vector<2x32xf32>,
    %139 = arith.index_cast %84 : i32 to index
    %c32_48 = arith.constant 32 : index
    %140 = vector.load %arg7[%139, %c32_48] : memref<16x64xf32, #tpu.memory_space<vmem>>, vector<2x32xf32>
    tpu.vector_store %arg7[%139, %c32_48], %136 {strides = array<i32>} : memref<16x64xf32, #tpu.memory_space<vmem>>, vector<2x32xf32>,
    %c2_i32_49 = arith.constant 2 : i32
    %c2_i32_50 = arith.constant 2 : i32
    %141 = arith.muli %c2_i32_49, %c2_i32_50 : i32
    %142 = tpu.assume_multiple %141, 2 : i32
    %c7_i32_51 = arith.constant 7 : i32
    %143 = arith.subi %c7_i32_51, %c2_i32_49 : i32
    %c2_i32_52 = arith.constant 2 : i32
    %144 = arith.muli %143, %c2_i32_52 : i32
    %145 = tpu.assume_multiple %144, 2 : i32
    %cst_53 = arith.constant dense<0.000000e+00> : vector<2x96xf32>
    %146 = tpu.matmul %111, %10, %cst_53 {dimension_numbers = #tpu.dot_dimension_numbers<[1], [0], [0], [1], [0, 0, 1, 1], [], []>} : vector<2x32xf32>, vector<32x96xf32>, vector<2x96xf32> -> vector<2x96xf32>
    %cst_54 = arith.constant dense<0.000000e+00> : vector<2x96xf32>
    %147 = tpu.matmul %136, %11, %cst_54 {dimension_numbers = #tpu.dot_dimension_numbers<[1], [0], [0], [1], [0, 0, 1, 1], [], []>} : vector<2x32xf32>, vector<32x96xf32>, vector<2x96xf32> -> vector<2x96xf32>
    %148 = arith.index_cast %142 : i32 to index
    %c0_55 = arith.constant 0 : index
    %149 = vector.load %arg8[%148, %c0_55] : memref<16x96xf32, #tpu.memory_space<vmem>>, vector<2x96xf32>
    %150 = vector.extract_strided_slice %149 {offsets = [0, 0], sizes = [2, 64], strides = [1, 1]} : vector<2x96xf32> to vector<2x64xf32>
    %151 = vector.extract_strided_slice %146 {offsets = [0, 0], sizes = [2, 64], strides = [1, 1]} : vector<2x96xf32> to vector<2x64xf32>
    %152 = arith.addf %150, %151 : vector<2x64xf32>
    %cst_56 = arith.constant 5.000000e-01 : f32
    %153 = vector.broadcast %cst_56 : f32 to vector<2x64xf32>
    %154 = arith.mulf %153, %152 : vector<2x64xf32>
    %155 = math.tanh %154 : vector<2x64xf32>
    %cst_57 = arith.constant 1.000000e+00 : f32
    %156 = vector.broadcast %cst_57 : f32 to vector<2x64xf32>
    %157 = arith.addf %155, %156 : vector<2x64xf32>
    %cst_58 = arith.constant 5.000000e-01 : f32
    %158 = vector.broadcast %cst_58 : f32 to vector<2x64xf32>
    %159 = arith.mulf %158, %157 : vector<2x64xf32>
    %160 = vector.extract_strided_slice %159 {offsets = [0, 0], sizes = [2, 32], strides = [1, 1]} : vector<2x64xf32> to vector<2x32xf32>
    %161 = vector.extract_strided_slice %159 {offsets = [0, 32], sizes = [2, 32], strides = [1, 1]} : vector<2x64xf32> to vector<2x32xf32>
    %162 = vector.extract_strided_slice %149 {offsets = [0, 64], sizes = [2, 32], strides = [1, 1]} : vector<2x96xf32> to vector<2x32xf32>
    %163 = vector.extract_strided_slice %146 {offsets = [0, 64], sizes = [2, 32], strides = [1, 1]} : vector<2x96xf32> to vector<2x32xf32>
    %164 = arith.addf %163, %14 : vector<2x32xf32>
    %165 = arith.mulf %160, %164 : vector<2x32xf32>
    %166 = arith.addf %162, %165 : vector<2x32xf32>
    %167 = math.tanh %166 : vector<2x32xf32>
    %cst_59 = arith.constant 1.000000e+00 : f32
    %168 = vector.broadcast %cst_59 : f32 to vector<2x32xf32>
    %169 = arith.subf %168, %161 : vector<2x32xf32>
    %170 = arith.mulf %169, %167 : vector<2x32xf32>
    %171 = arith.mulf %161, %111 : vector<2x32xf32>
    %172 = arith.addf %170, %171 : vector<2x32xf32>
    %173 = arith.index_cast %145 : i32 to index
    %c0_60 = arith.constant 0 : index
    %174 = vector.load %arg9[%173, %c0_60] : memref<16x96xf32, #tpu.memory_space<vmem>>, vector<2x96xf32>
    %175 = vector.extract_strided_slice %174 {offsets = [0, 0], sizes = [2, 64], strides = [1, 1]} : vector<2x96xf32> to vector<2x64xf32>
    %176 = vector.extract_strided_slice %147 {offsets = [0, 0], sizes = [2, 64], strides = [1, 1]} : vector<2x96xf32> to vector<2x64xf32>
    %177 = arith.addf %175, %176 : vector<2x64xf32>
    %cst_61 = arith.constant 5.000000e-01 : f32
    %178 = vector.broadcast %cst_61 : f32 to vector<2x64xf32>
    %179 = arith.mulf %178, %177 : vector<2x64xf32>
    %180 = math.tanh %179 : vector<2x64xf32>
    %cst_62 = arith.constant 1.000000e+00 : f32
    %181 = vector.broadcast %cst_62 : f32 to vector<2x64xf32>
    %182 = arith.addf %180, %181 : vector<2x64xf32>
    %cst_63 = arith.constant 5.000000e-01 : f32
    %183 = vector.broadcast %cst_63 : f32 to vector<2x64xf32>
    %184 = arith.mulf %183, %182 : vector<2x64xf32>
    %185 = vector.extract_strided_slice %184 {offsets = [0, 0], sizes = [2, 32], strides = [1, 1]} : vector<2x64xf32> to vector<2x32xf32>
    %186 = vector.extract_strided_slice %184 {offsets = [0, 32], sizes = [2, 32], strides = [1, 1]} : vector<2x64xf32> to vector<2x32xf32>
    %187 = vector.extract_strided_slice %174 {offsets = [0, 64], sizes = [2, 32], strides = [1, 1]} : vector<2x96xf32> to vector<2x32xf32>
    %188 = vector.extract_strided_slice %147 {offsets = [0, 64], sizes = [2, 32], strides = [1, 1]} : vector<2x96xf32> to vector<2x32xf32>
    %189 = arith.addf %188, %17 : vector<2x32xf32>
    %190 = arith.mulf %185, %189 : vector<2x32xf32>
    %191 = arith.addf %187, %190 : vector<2x32xf32>
    %192 = math.tanh %191 : vector<2x32xf32>
    %cst_64 = arith.constant 1.000000e+00 : f32
    %193 = vector.broadcast %cst_64 : f32 to vector<2x32xf32>
    %194 = arith.subf %193, %186 : vector<2x32xf32>
    %195 = arith.mulf %194, %192 : vector<2x32xf32>
    %196 = arith.mulf %186, %136 : vector<2x32xf32>
    %197 = arith.addf %195, %196 : vector<2x32xf32>
    %198 = arith.index_cast %142 : i32 to index
    %c0_65 = arith.constant 0 : index
    %199 = vector.load %arg7[%198, %c0_65] : memref<16x64xf32, #tpu.memory_space<vmem>>, vector<2x32xf32>
    tpu.vector_store %arg7[%198, %c0_65], %172 {strides = array<i32>} : memref<16x64xf32, #tpu.memory_space<vmem>>, vector<2x32xf32>,
    %200 = arith.index_cast %145 : i32 to index
    %c32_66 = arith.constant 32 : index
    %201 = vector.load %arg7[%200, %c32_66] : memref<16x64xf32, #tpu.memory_space<vmem>>, vector<2x32xf32>
    tpu.vector_store %arg7[%200, %c32_66], %197 {strides = array<i32>} : memref<16x64xf32, #tpu.memory_space<vmem>>, vector<2x32xf32>,
    %c3_i32 = arith.constant 3 : i32
    %c2_i32_67 = arith.constant 2 : i32
    %202 = arith.muli %c3_i32, %c2_i32_67 : i32
    %203 = tpu.assume_multiple %202, 2 : i32
    %c7_i32_68 = arith.constant 7 : i32
    %204 = arith.subi %c7_i32_68, %c3_i32 : i32
    %c2_i32_69 = arith.constant 2 : i32
    %205 = arith.muli %204, %c2_i32_69 : i32
    %206 = tpu.assume_multiple %205, 2 : i32
    %cst_70 = arith.constant dense<0.000000e+00> : vector<2x96xf32>
    %207 = tpu.matmul %172, %10, %cst_70 {dimension_numbers = #tpu.dot_dimension_numbers<[1], [0], [0], [1], [0, 0, 1, 1], [], []>} : vector<2x32xf32>, vector<32x96xf32>, vector<2x96xf32> -> vector<2x96xf32>
    %cst_71 = arith.constant dense<0.000000e+00> : vector<2x96xf32>
    %208 = tpu.matmul %197, %11, %cst_71 {dimension_numbers = #tpu.dot_dimension_numbers<[1], [0], [0], [1], [0, 0, 1, 1], [], []>} : vector<2x32xf32>, vector<32x96xf32>, vector<2x96xf32> -> vector<2x96xf32>
    %209 = arith.index_cast %203 : i32 to index
    %c0_72 = arith.constant 0 : index
    %210 = vector.load %arg8[%209, %c0_72] : memref<16x96xf32, #tpu.memory_space<vmem>>, vector<2x96xf32>
    %211 = vector.extract_strided_slice %210 {offsets = [0, 0], sizes = [2, 64], strides = [1, 1]} : vector<2x96xf32> to vector<2x64xf32>
    %212 = vector.extract_strided_slice %207 {offsets = [0, 0], sizes = [2, 64], strides = [1, 1]} : vector<2x96xf32> to vector<2x64xf32>
    %213 = arith.addf %211, %212 : vector<2x64xf32>
    %cst_73 = arith.constant 5.000000e-01 : f32
    %214 = vector.broadcast %cst_73 : f32 to vector<2x64xf32>
    %215 = arith.mulf %214, %213 : vector<2x64xf32>
    %216 = math.tanh %215 : vector<2x64xf32>
    %cst_74 = arith.constant 1.000000e+00 : f32
    %217 = vector.broadcast %cst_74 : f32 to vector<2x64xf32>
    %218 = arith.addf %216, %217 : vector<2x64xf32>
    %cst_75 = arith.constant 5.000000e-01 : f32
    %219 = vector.broadcast %cst_75 : f32 to vector<2x64xf32>
    %220 = arith.mulf %219, %218 : vector<2x64xf32>
    %221 = vector.extract_strided_slice %220 {offsets = [0, 0], sizes = [2, 32], strides = [1, 1]} : vector<2x64xf32> to vector<2x32xf32>
    %222 = vector.extract_strided_slice %220 {offsets = [0, 32], sizes = [2, 32], strides = [1, 1]} : vector<2x64xf32> to vector<2x32xf32>
    %223 = vector.extract_strided_slice %210 {offsets = [0, 64], sizes = [2, 32], strides = [1, 1]} : vector<2x96xf32> to vector<2x32xf32>
    %224 = vector.extract_strided_slice %207 {offsets = [0, 64], sizes = [2, 32], strides = [1, 1]} : vector<2x96xf32> to vector<2x32xf32>
    %225 = arith.addf %224, %14 : vector<2x32xf32>
    %226 = arith.mulf %221, %225 : vector<2x32xf32>
    %227 = arith.addf %223, %226 : vector<2x32xf32>
    %228 = math.tanh %227 : vector<2x32xf32>
    %cst_76 = arith.constant 1.000000e+00 : f32
    %229 = vector.broadcast %cst_76 : f32 to vector<2x32xf32>
    %230 = arith.subf %229, %222 : vector<2x32xf32>
    %231 = arith.mulf %230, %228 : vector<2x32xf32>
    %232 = arith.mulf %222, %172 : vector<2x32xf32>
    %233 = arith.addf %231, %232 : vector<2x32xf32>
    %234 = arith.index_cast %206 : i32 to index
    %c0_77 = arith.constant 0 : index
    %235 = vector.load %arg9[%234, %c0_77] : memref<16x96xf32, #tpu.memory_space<vmem>>, vector<2x96xf32>
    %236 = vector.extract_strided_slice %235 {offsets = [0, 0], sizes = [2, 64], strides = [1, 1]} : vector<2x96xf32> to vector<2x64xf32>
    %237 = vector.extract_strided_slice %208 {offsets = [0, 0], sizes = [2, 64], strides = [1, 1]} : vector<2x96xf32> to vector<2x64xf32>
    %238 = arith.addf %236, %237 : vector<2x64xf32>
    %cst_78 = arith.constant 5.000000e-01 : f32
    %239 = vector.broadcast %cst_78 : f32 to vector<2x64xf32>
    %240 = arith.mulf %239, %238 : vector<2x64xf32>
    %241 = math.tanh %240 : vector<2x64xf32>
    %cst_79 = arith.constant 1.000000e+00 : f32
    %242 = vector.broadcast %cst_79 : f32 to vector<2x64xf32>
    %243 = arith.addf %241, %242 : vector<2x64xf32>
    %cst_80 = arith.constant 5.000000e-01 : f32
    %244 = vector.broadcast %cst_80 : f32 to vector<2x64xf32>
    %245 = arith.mulf %244, %243 : vector<2x64xf32>
    %246 = vector.extract_strided_slice %245 {offsets = [0, 0], sizes = [2, 32], strides = [1, 1]} : vector<2x64xf32> to vector<2x32xf32>
    %247 = vector.extract_strided_slice %245 {offsets = [0, 32], sizes = [2, 32], strides = [1, 1]} : vector<2x64xf32> to vector<2x32xf32>
    %248 = vector.extract_strided_slice %235 {offsets = [0, 64], sizes = [2, 32], strides = [1, 1]} : vector<2x96xf32> to vector<2x32xf32>
    %249 = vector.extract_strided_slice %208 {offsets = [0, 64], sizes = [2, 32], strides = [1, 1]} : vector<2x96xf32> to vector<2x32xf32>
    %250 = arith.addf %249, %17 : vector<2x32xf32>
    %251 = arith.mulf %246, %250 : vector<2x32xf32>
    %252 = arith.addf %248, %251 : vector<2x32xf32>
    %253 = math.tanh %252 : vector<2x32xf32>
    %cst_81 = arith.constant 1.000000e+00 : f32
    %254 = vector.broadcast %cst_81 : f32 to vector<2x32xf32>
    %255 = arith.subf %254, %247 : vector<2x32xf32>
    %256 = arith.mulf %255, %253 : vector<2x32xf32>
    %257 = arith.mulf %247, %197 : vector<2x32xf32>
    %258 = arith.addf %256, %257 : vector<2x32xf32>
    %259 = arith.index_cast %203 : i32 to index
    %c0_82 = arith.constant 0 : index
    %260 = vector.load %arg7[%259, %c0_82] : memref<16x64xf32, #tpu.memory_space<vmem>>, vector<2x32xf32>
    tpu.vector_store %arg7[%259, %c0_82], %233 {strides = array<i32>} : memref<16x64xf32, #tpu.memory_space<vmem>>, vector<2x32xf32>,
    %261 = arith.index_cast %206 : i32 to index
    %c32_83 = arith.constant 32 : index
    %262 = vector.load %arg7[%261, %c32_83] : memref<16x64xf32, #tpu.memory_space<vmem>>, vector<2x32xf32>
    tpu.vector_store %arg7[%261, %c32_83], %258 {strides = array<i32>} : memref<16x64xf32, #tpu.memory_space<vmem>>, vector<2x32xf32>,
    %c4_i32 = arith.constant 4 : i32
    %c2_i32_84 = arith.constant 2 : i32
    %263 = arith.muli %c4_i32, %c2_i32_84 : i32
    %264 = tpu.assume_multiple %263, 2 : i32
    %c7_i32_85 = arith.constant 7 : i32
    %265 = arith.subi %c7_i32_85, %c4_i32 : i32
    %c2_i32_86 = arith.constant 2 : i32
    %266 = arith.muli %265, %c2_i32_86 : i32
    %267 = tpu.assume_multiple %266, 2 : i32
    %cst_87 = arith.constant dense<0.000000e+00> : vector<2x96xf32>
    %268 = tpu.matmul %233, %10, %cst_87 {dimension_numbers = #tpu.dot_dimension_numbers<[1], [0], [0], [1], [0, 0, 1, 1], [], []>} : vector<2x32xf32>, vector<32x96xf32>, vector<2x96xf32> -> vector<2x96xf32>
    %cst_88 = arith.constant dense<0.000000e+00> : vector<2x96xf32>
    %269 = tpu.matmul %258, %11, %cst_88 {dimension_numbers = #tpu.dot_dimension_numbers<[1], [0], [0], [1], [0, 0, 1, 1], [], []>} : vector<2x32xf32>, vector<32x96xf32>, vector<2x96xf32> -> vector<2x96xf32>
    %270 = arith.index_cast %264 : i32 to index
    %c0_89 = arith.constant 0 : index
    %271 = vector.load %arg8[%270, %c0_89] : memref<16x96xf32, #tpu.memory_space<vmem>>, vector<2x96xf32>
    %272 = vector.extract_strided_slice %271 {offsets = [0, 0], sizes = [2, 64], strides = [1, 1]} : vector<2x96xf32> to vector<2x64xf32>
    %273 = vector.extract_strided_slice %268 {offsets = [0, 0], sizes = [2, 64], strides = [1, 1]} : vector<2x96xf32> to vector<2x64xf32>
    %274 = arith.addf %272, %273 : vector<2x64xf32>
    %cst_90 = arith.constant 5.000000e-01 : f32
    %275 = vector.broadcast %cst_90 : f32 to vector<2x64xf32>
    %276 = arith.mulf %275, %274 : vector<2x64xf32>
    %277 = math.tanh %276 : vector<2x64xf32>
    %cst_91 = arith.constant 1.000000e+00 : f32
    %278 = vector.broadcast %cst_91 : f32 to vector<2x64xf32>
    %279 = arith.addf %277, %278 : vector<2x64xf32>
    %cst_92 = arith.constant 5.000000e-01 : f32
    %280 = vector.broadcast %cst_92 : f32 to vector<2x64xf32>
    %281 = arith.mulf %280, %279 : vector<2x64xf32>
    %282 = vector.extract_strided_slice %281 {offsets = [0, 0], sizes = [2, 32], strides = [1, 1]} : vector<2x64xf32> to vector<2x32xf32>
    %283 = vector.extract_strided_slice %281 {offsets = [0, 32], sizes = [2, 32], strides = [1, 1]} : vector<2x64xf32> to vector<2x32xf32>
    %284 = vector.extract_strided_slice %271 {offsets = [0, 64], sizes = [2, 32], strides = [1, 1]} : vector<2x96xf32> to vector<2x32xf32>
    %285 = vector.extract_strided_slice %268 {offsets = [0, 64], sizes = [2, 32], strides = [1, 1]} : vector<2x96xf32> to vector<2x32xf32>
    %286 = arith.addf %285, %14 : vector<2x32xf32>
    %287 = arith.mulf %282, %286 : vector<2x32xf32>
    %288 = arith.addf %284, %287 : vector<2x32xf32>
    %289 = math.tanh %288 : vector<2x32xf32>
    %cst_93 = arith.constant 1.000000e+00 : f32
    %290 = vector.broadcast %cst_93 : f32 to vector<2x32xf32>
    %291 = arith.subf %290, %283 : vector<2x32xf32>
    %292 = arith.mulf %291, %289 : vector<2x32xf32>
    %293 = arith.mulf %283, %233 : vector<2x32xf32>
    %294 = arith.addf %292, %293 : vector<2x32xf32>
    %295 = arith.index_cast %267 : i32 to index
    %c0_94 = arith.constant 0 : index
    %296 = vector.load %arg9[%295, %c0_94] : memref<16x96xf32, #tpu.memory_space<vmem>>, vector<2x96xf32>
    %297 = vector.extract_strided_slice %296 {offsets = [0, 0], sizes = [2, 64], strides = [1, 1]} : vector<2x96xf32> to vector<2x64xf32>
    %298 = vector.extract_strided_slice %269 {offsets = [0, 0], sizes = [2, 64], strides = [1, 1]} : vector<2x96xf32> to vector<2x64xf32>
    %299 = arith.addf %297, %298 : vector<2x64xf32>
    %cst_95 = arith.constant 5.000000e-01 : f32
    %300 = vector.broadcast %cst_95 : f32 to vector<2x64xf32>
    %301 = arith.mulf %300, %299 : vector<2x64xf32>
    %302 = math.tanh %301 : vector<2x64xf32>
    %cst_96 = arith.constant 1.000000e+00 : f32
    %303 = vector.broadcast %cst_96 : f32 to vector<2x64xf32>
    %304 = arith.addf %302, %303 : vector<2x64xf32>
    %cst_97 = arith.constant 5.000000e-01 : f32
    %305 = vector.broadcast %cst_97 : f32 to vector<2x64xf32>
    %306 = arith.mulf %305, %304 : vector<2x64xf32>
    %307 = vector.extract_strided_slice %306 {offsets = [0, 0], sizes = [2, 32], strides = [1, 1]} : vector<2x64xf32> to vector<2x32xf32>
    %308 = vector.extract_strided_slice %306 {offsets = [0, 32], sizes = [2, 32], strides = [1, 1]} : vector<2x64xf32> to vector<2x32xf32>
    %309 = vector.extract_strided_slice %296 {offsets = [0, 64], sizes = [2, 32], strides = [1, 1]} : vector<2x96xf32> to vector<2x32xf32>
    %310 = vector.extract_strided_slice %269 {offsets = [0, 64], sizes = [2, 32], strides = [1, 1]} : vector<2x96xf32> to vector<2x32xf32>
    %311 = arith.addf %310, %17 : vector<2x32xf32>
    %312 = arith.mulf %307, %311 : vector<2x32xf32>
    %313 = arith.addf %309, %312 : vector<2x32xf32>
    %314 = math.tanh %313 : vector<2x32xf32>
    %cst_98 = arith.constant 1.000000e+00 : f32
    %315 = vector.broadcast %cst_98 : f32 to vector<2x32xf32>
    %316 = arith.subf %315, %308 : vector<2x32xf32>
    %317 = arith.mulf %316, %314 : vector<2x32xf32>
    %318 = arith.mulf %308, %258 : vector<2x32xf32>
    %319 = arith.addf %317, %318 : vector<2x32xf32>
    %320 = arith.index_cast %264 : i32 to index
    %c0_99 = arith.constant 0 : index
    %321 = vector.load %arg7[%320, %c0_99] : memref<16x64xf32, #tpu.memory_space<vmem>>, vector<2x32xf32>
    tpu.vector_store %arg7[%320, %c0_99], %294 {strides = array<i32>} : memref<16x64xf32, #tpu.memory_space<vmem>>, vector<2x32xf32>,
    %322 = arith.index_cast %267 : i32 to index
    %c32_100 = arith.constant 32 : index
    %323 = vector.load %arg7[%322, %c32_100] : memref<16x64xf32, #tpu.memory_space<vmem>>, vector<2x32xf32>
    tpu.vector_store %arg7[%322, %c32_100], %319 {strides = array<i32>} : memref<16x64xf32, #tpu.memory_space<vmem>>, vector<2x32xf32>,
    %c5_i32 = arith.constant 5 : i32
    %c2_i32_101 = arith.constant 2 : i32
    %324 = arith.muli %c5_i32, %c2_i32_101 : i32
    %325 = tpu.assume_multiple %324, 2 : i32
    %c7_i32_102 = arith.constant 7 : i32
    %326 = arith.subi %c7_i32_102, %c5_i32 : i32
    %c2_i32_103 = arith.constant 2 : i32
    %327 = arith.muli %326, %c2_i32_103 : i32
    %328 = tpu.assume_multiple %327, 2 : i32
    %cst_104 = arith.constant dense<0.000000e+00> : vector<2x96xf32>
    %329 = tpu.matmul %294, %10, %cst_104 {dimension_numbers = #tpu.dot_dimension_numbers<[1], [0], [0], [1], [0, 0, 1, 1], [], []>} : vector<2x32xf32>, vector<32x96xf32>, vector<2x96xf32> -> vector<2x96xf32>
    %cst_105 = arith.constant dense<0.000000e+00> : vector<2x96xf32>
    %330 = tpu.matmul %319, %11, %cst_105 {dimension_numbers = #tpu.dot_dimension_numbers<[1], [0], [0], [1], [0, 0, 1, 1], [], []>} : vector<2x32xf32>, vector<32x96xf32>, vector<2x96xf32> -> vector<2x96xf32>
    %331 = arith.index_cast %325 : i32 to index
    %c0_106 = arith.constant 0 : index
    %332 = vector.load %arg8[%331, %c0_106] : memref<16x96xf32, #tpu.memory_space<vmem>>, vector<2x96xf32>
    %333 = vector.extract_strided_slice %332 {offsets = [0, 0], sizes = [2, 64], strides = [1, 1]} : vector<2x96xf32> to vector<2x64xf32>
    %334 = vector.extract_strided_slice %329 {offsets = [0, 0], sizes = [2, 64], strides = [1, 1]} : vector<2x96xf32> to vector<2x64xf32>
    %335 = arith.addf %333, %334 : vector<2x64xf32>
    %cst_107 = arith.constant 5.000000e-01 : f32
    %336 = vector.broadcast %cst_107 : f32 to vector<2x64xf32>
    %337 = arith.mulf %336, %335 : vector<2x64xf32>
    %338 = math.tanh %337 : vector<2x64xf32>
    %cst_108 = arith.constant 1.000000e+00 : f32
    %339 = vector.broadcast %cst_108 : f32 to vector<2x64xf32>
    %340 = arith.addf %338, %339 : vector<2x64xf32>
    %cst_109 = arith.constant 5.000000e-01 : f32
    %341 = vector.broadcast %cst_109 : f32 to vector<2x64xf32>
    %342 = arith.mulf %341, %340 : vector<2x64xf32>
    %343 = vector.extract_strided_slice %342 {offsets = [0, 0], sizes = [2, 32], strides = [1, 1]} : vector<2x64xf32> to vector<2x32xf32>
    %344 = vector.extract_strided_slice %342 {offsets = [0, 32], sizes = [2, 32], strides = [1, 1]} : vector<2x64xf32> to vector<2x32xf32>
    %345 = vector.extract_strided_slice %332 {offsets = [0, 64], sizes = [2, 32], strides = [1, 1]} : vector<2x96xf32> to vector<2x32xf32>
    %346 = vector.extract_strided_slice %329 {offsets = [0, 64], sizes = [2, 32], strides = [1, 1]} : vector<2x96xf32> to vector<2x32xf32>
    %347 = arith.addf %346, %14 : vector<2x32xf32>
    %348 = arith.mulf %343, %347 : vector<2x32xf32>
    %349 = arith.addf %345, %348 : vector<2x32xf32>
    %350 = math.tanh %349 : vector<2x32xf32>
    %cst_110 = arith.constant 1.000000e+00 : f32
    %351 = vector.broadcast %cst_110 : f32 to vector<2x32xf32>
    %352 = arith.subf %351, %344 : vector<2x32xf32>
    %353 = arith.mulf %352, %350 : vector<2x32xf32>
    %354 = arith.mulf %344, %294 : vector<2x32xf32>
    %355 = arith.addf %353, %354 : vector<2x32xf32>
    %356 = arith.index_cast %328 : i32 to index
    %c0_111 = arith.constant 0 : index
    %357 = vector.load %arg9[%356, %c0_111] : memref<16x96xf32, #tpu.memory_space<vmem>>, vector<2x96xf32>
    %358 = vector.extract_strided_slice %357 {offsets = [0, 0], sizes = [2, 64], strides = [1, 1]} : vector<2x96xf32> to vector<2x64xf32>
    %359 = vector.extract_strided_slice %330 {offsets = [0, 0], sizes = [2, 64], strides = [1, 1]} : vector<2x96xf32> to vector<2x64xf32>
    %360 = arith.addf %358, %359 : vector<2x64xf32>
    %cst_112 = arith.constant 5.000000e-01 : f32
    %361 = vector.broadcast %cst_112 : f32 to vector<2x64xf32>
    %362 = arith.mulf %361, %360 : vector<2x64xf32>
    %363 = math.tanh %362 : vector<2x64xf32>
    %cst_113 = arith.constant 1.000000e+00 : f32
    %364 = vector.broadcast %cst_113 : f32 to vector<2x64xf32>
    %365 = arith.addf %363, %364 : vector<2x64xf32>
    %cst_114 = arith.constant 5.000000e-01 : f32
    %366 = vector.broadcast %cst_114 : f32 to vector<2x64xf32>
    %367 = arith.mulf %366, %365 : vector<2x64xf32>
    %368 = vector.extract_strided_slice %367 {offsets = [0, 0], sizes = [2, 32], strides = [1, 1]} : vector<2x64xf32> to vector<2x32xf32>
    %369 = vector.extract_strided_slice %367 {offsets = [0, 32], sizes = [2, 32], strides = [1, 1]} : vector<2x64xf32> to vector<2x32xf32>
    %370 = vector.extract_strided_slice %357 {offsets = [0, 64], sizes = [2, 32], strides = [1, 1]} : vector<2x96xf32> to vector<2x32xf32>
    %371 = vector.extract_strided_slice %330 {offsets = [0, 64], sizes = [2, 32], strides = [1, 1]} : vector<2x96xf32> to vector<2x32xf32>
    %372 = arith.addf %371, %17 : vector<2x32xf32>
    %373 = arith.mulf %368, %372 : vector<2x32xf32>
    %374 = arith.addf %370, %373 : vector<2x32xf32>
    %375 = math.tanh %374 : vector<2x32xf32>
    %cst_115 = arith.constant 1.000000e+00 : f32
    %376 = vector.broadcast %cst_115 : f32 to vector<2x32xf32>
    %377 = arith.subf %376, %369 : vector<2x32xf32>
    %378 = arith.mulf %377, %375 : vector<2x32xf32>
    %379 = arith.mulf %369, %319 : vector<2x32xf32>
    %380 = arith.addf %378, %379 : vector<2x32xf32>
    %381 = arith.index_cast %325 : i32 to index
    %c0_116 = arith.constant 0 : index
    %382 = vector.load %arg7[%381, %c0_116] : memref<16x64xf32, #tpu.memory_space<vmem>>, vector<2x32xf32>
    tpu.vector_store %arg7[%381, %c0_116], %355 {strides = array<i32>} : memref<16x64xf32, #tpu.memory_space<vmem>>, vector<2x32xf32>,
    %383 = arith.index_cast %328 : i32 to index
    %c32_117 = arith.constant 32 : index
    %384 = vector.load %arg7[%383, %c32_117] : memref<16x64xf32, #tpu.memory_space<vmem>>, vector<2x32xf32>
    tpu.vector_store %arg7[%383, %c32_117], %380 {strides = array<i32>} : memref<16x64xf32, #tpu.memory_space<vmem>>, vector<2x32xf32>,
    %c6_i32 = arith.constant 6 : i32
    %c2_i32_118 = arith.constant 2 : i32
    %385 = arith.muli %c6_i32, %c2_i32_118 : i32
    %386 = tpu.assume_multiple %385, 2 : i32
    %c7_i32_119 = arith.constant 7 : i32
    %387 = arith.subi %c7_i32_119, %c6_i32 : i32
    %c2_i32_120 = arith.constant 2 : i32
    %388 = arith.muli %387, %c2_i32_120 : i32
    %389 = tpu.assume_multiple %388, 2 : i32
    %cst_121 = arith.constant dense<0.000000e+00> : vector<2x96xf32>
    %390 = tpu.matmul %355, %10, %cst_121 {dimension_numbers = #tpu.dot_dimension_numbers<[1], [0], [0], [1], [0, 0, 1, 1], [], []>} : vector<2x32xf32>, vector<32x96xf32>, vector<2x96xf32> -> vector<2x96xf32>
    %cst_122 = arith.constant dense<0.000000e+00> : vector<2x96xf32>
    %391 = tpu.matmul %380, %11, %cst_122 {dimension_numbers = #tpu.dot_dimension_numbers<[1], [0], [0], [1], [0, 0, 1, 1], [], []>} : vector<2x32xf32>, vector<32x96xf32>, vector<2x96xf32> -> vector<2x96xf32>
    %392 = arith.index_cast %386 : i32 to index
    %c0_123 = arith.constant 0 : index
    %393 = vector.load %arg8[%392, %c0_123] : memref<16x96xf32, #tpu.memory_space<vmem>>, vector<2x96xf32>
    %394 = vector.extract_strided_slice %393 {offsets = [0, 0], sizes = [2, 64], strides = [1, 1]} : vector<2x96xf32> to vector<2x64xf32>
    %395 = vector.extract_strided_slice %390 {offsets = [0, 0], sizes = [2, 64], strides = [1, 1]} : vector<2x96xf32> to vector<2x64xf32>
    %396 = arith.addf %394, %395 : vector<2x64xf32>
    %cst_124 = arith.constant 5.000000e-01 : f32
    %397 = vector.broadcast %cst_124 : f32 to vector<2x64xf32>
    %398 = arith.mulf %397, %396 : vector<2x64xf32>
    %399 = math.tanh %398 : vector<2x64xf32>
    %cst_125 = arith.constant 1.000000e+00 : f32
    %400 = vector.broadcast %cst_125 : f32 to vector<2x64xf32>
    %401 = arith.addf %399, %400 : vector<2x64xf32>
    %cst_126 = arith.constant 5.000000e-01 : f32
    %402 = vector.broadcast %cst_126 : f32 to vector<2x64xf32>
    %403 = arith.mulf %402, %401 : vector<2x64xf32>
    %404 = vector.extract_strided_slice %403 {offsets = [0, 0], sizes = [2, 32], strides = [1, 1]} : vector<2x64xf32> to vector<2x32xf32>
    %405 = vector.extract_strided_slice %403 {offsets = [0, 32], sizes = [2, 32], strides = [1, 1]} : vector<2x64xf32> to vector<2x32xf32>
    %406 = vector.extract_strided_slice %393 {offsets = [0, 64], sizes = [2, 32], strides = [1, 1]} : vector<2x96xf32> to vector<2x32xf32>
    %407 = vector.extract_strided_slice %390 {offsets = [0, 64], sizes = [2, 32], strides = [1, 1]} : vector<2x96xf32> to vector<2x32xf32>
    %408 = arith.addf %407, %14 : vector<2x32xf32>
    %409 = arith.mulf %404, %408 : vector<2x32xf32>
    %410 = arith.addf %406, %409 : vector<2x32xf32>
    %411 = math.tanh %410 : vector<2x32xf32>
    %cst_127 = arith.constant 1.000000e+00 : f32
    %412 = vector.broadcast %cst_127 : f32 to vector<2x32xf32>
    %413 = arith.subf %412, %405 : vector<2x32xf32>
    %414 = arith.mulf %413, %411 : vector<2x32xf32>
    %415 = arith.mulf %405, %355 : vector<2x32xf32>
    %416 = arith.addf %414, %415 : vector<2x32xf32>
    %417 = arith.index_cast %389 : i32 to index
    %c0_128 = arith.constant 0 : index
    %418 = vector.load %arg9[%417, %c0_128] : memref<16x96xf32, #tpu.memory_space<vmem>>, vector<2x96xf32>
    %419 = vector.extract_strided_slice %418 {offsets = [0, 0], sizes = [2, 64], strides = [1, 1]} : vector<2x96xf32> to vector<2x64xf32>
    %420 = vector.extract_strided_slice %391 {offsets = [0, 0], sizes = [2, 64], strides = [1, 1]} : vector<2x96xf32> to vector<2x64xf32>
    %421 = arith.addf %419, %420 : vector<2x64xf32>
    %cst_129 = arith.constant 5.000000e-01 : f32
    %422 = vector.broadcast %cst_129 : f32 to vector<2x64xf32>
    %423 = arith.mulf %422, %421 : vector<2x64xf32>
    %424 = math.tanh %423 : vector<2x64xf32>
    %cst_130 = arith.constant 1.000000e+00 : f32
    %425 = vector.broadcast %cst_130 : f32 to vector<2x64xf32>
    %426 = arith.addf %424, %425 : vector<2x64xf32>
    %cst_131 = arith.constant 5.000000e-01 : f32
    %427 = vector.broadcast %cst_131 : f32 to vector<2x64xf32>
    %428 = arith.mulf %427, %426 : vector<2x64xf32>
    %429 = vector.extract_strided_slice %428 {offsets = [0, 0], sizes = [2, 32], strides = [1, 1]} : vector<2x64xf32> to vector<2x32xf32>
    %430 = vector.extract_strided_slice %428 {offsets = [0, 32], sizes = [2, 32], strides = [1, 1]} : vector<2x64xf32> to vector<2x32xf32>
    %431 = vector.extract_strided_slice %418 {offsets = [0, 64], sizes = [2, 32], strides = [1, 1]} : vector<2x96xf32> to vector<2x32xf32>
    %432 = vector.extract_strided_slice %391 {offsets = [0, 64], sizes = [2, 32], strides = [1, 1]} : vector<2x96xf32> to vector<2x32xf32>
    %433 = arith.addf %432, %17 : vector<2x32xf32>
    %434 = arith.mulf %429, %433 : vector<2x32xf32>
    %435 = arith.addf %431, %434 : vector<2x32xf32>
    %436 = math.tanh %435 : vector<2x32xf32>
    %cst_132 = arith.constant 1.000000e+00 : f32
    %437 = vector.broadcast %cst_132 : f32 to vector<2x32xf32>
    %438 = arith.subf %437, %430 : vector<2x32xf32>
    %439 = arith.mulf %438, %436 : vector<2x32xf32>
    %440 = arith.mulf %430, %380 : vector<2x32xf32>
    %441 = arith.addf %439, %440 : vector<2x32xf32>
    %442 = arith.index_cast %386 : i32 to index
    %c0_133 = arith.constant 0 : index
    %443 = vector.load %arg7[%442, %c0_133] : memref<16x64xf32, #tpu.memory_space<vmem>>, vector<2x32xf32>
    tpu.vector_store %arg7[%442, %c0_133], %416 {strides = array<i32>} : memref<16x64xf32, #tpu.memory_space<vmem>>, vector<2x32xf32>,
    %444 = arith.index_cast %389 : i32 to index
    %c32_134 = arith.constant 32 : index
    %445 = vector.load %arg7[%444, %c32_134] : memref<16x64xf32, #tpu.memory_space<vmem>>, vector<2x32xf32>
    tpu.vector_store %arg7[%444, %c32_134], %441 {strides = array<i32>} : memref<16x64xf32, #tpu.memory_space<vmem>>, vector<2x32xf32>,
    %c7_i32_135 = arith.constant 7 : i32
    %c2_i32_136 = arith.constant 2 : i32
    %446 = arith.muli %c7_i32_135, %c2_i32_136 : i32
    %447 = tpu.assume_multiple %446, 2 : i32
    %c7_i32_137 = arith.constant 7 : i32
    %448 = arith.subi %c7_i32_137, %c7_i32_135 : i32
    %c2_i32_138 = arith.constant 2 : i32
    %449 = arith.muli %448, %c2_i32_138 : i32
    %450 = tpu.assume_multiple %449, 2 : i32
    %cst_139 = arith.constant dense<0.000000e+00> : vector<2x96xf32>
    %451 = tpu.matmul %416, %10, %cst_139 {dimension_numbers = #tpu.dot_dimension_numbers<[1], [0], [0], [1], [0, 0, 1, 1], [], []>} : vector<2x32xf32>, vector<32x96xf32>, vector<2x96xf32> -> vector<2x96xf32>
    %cst_140 = arith.constant dense<0.000000e+00> : vector<2x96xf32>
    %452 = tpu.matmul %441, %11, %cst_140 {dimension_numbers = #tpu.dot_dimension_numbers<[1], [0], [0], [1], [0, 0, 1, 1], [], []>} : vector<2x32xf32>, vector<32x96xf32>, vector<2x96xf32> -> vector<2x96xf32>
    %453 = arith.index_cast %447 : i32 to index
    %c0_141 = arith.constant 0 : index
    %454 = vector.load %arg8[%453, %c0_141] : memref<16x96xf32, #tpu.memory_space<vmem>>, vector<2x96xf32>
    %455 = vector.extract_strided_slice %454 {offsets = [0, 0], sizes = [2, 64], strides = [1, 1]} : vector<2x96xf32> to vector<2x64xf32>
    %456 = vector.extract_strided_slice %451 {offsets = [0, 0], sizes = [2, 64], strides = [1, 1]} : vector<2x96xf32> to vector<2x64xf32>
    %457 = arith.addf %455, %456 : vector<2x64xf32>
    %cst_142 = arith.constant 5.000000e-01 : f32
    %458 = vector.broadcast %cst_142 : f32 to vector<2x64xf32>
    %459 = arith.mulf %458, %457 : vector<2x64xf32>
    %460 = math.tanh %459 : vector<2x64xf32>
    %cst_143 = arith.constant 1.000000e+00 : f32
    %461 = vector.broadcast %cst_143 : f32 to vector<2x64xf32>
    %462 = arith.addf %460, %461 : vector<2x64xf32>
    %cst_144 = arith.constant 5.000000e-01 : f32
    %463 = vector.broadcast %cst_144 : f32 to vector<2x64xf32>
    %464 = arith.mulf %463, %462 : vector<2x64xf32>
    %465 = vector.extract_strided_slice %464 {offsets = [0, 0], sizes = [2, 32], strides = [1, 1]} : vector<2x64xf32> to vector<2x32xf32>
    %466 = vector.extract_strided_slice %464 {offsets = [0, 32], sizes = [2, 32], strides = [1, 1]} : vector<2x64xf32> to vector<2x32xf32>
    %467 = vector.extract_strided_slice %454 {offsets = [0, 64], sizes = [2, 32], strides = [1, 1]} : vector<2x96xf32> to vector<2x32xf32>
    %468 = vector.extract_strided_slice %451 {offsets = [0, 64], sizes = [2, 32], strides = [1, 1]} : vector<2x96xf32> to vector<2x32xf32>
    %469 = arith.addf %468, %14 : vector<2x32xf32>
    %470 = arith.mulf %465, %469 : vector<2x32xf32>
    %471 = arith.addf %467, %470 : vector<2x32xf32>
    %472 = math.tanh %471 : vector<2x32xf32>
    %cst_145 = arith.constant 1.000000e+00 : f32
    %473 = vector.broadcast %cst_145 : f32 to vector<2x32xf32>
    %474 = arith.subf %473, %466 : vector<2x32xf32>
    %475 = arith.mulf %474, %472 : vector<2x32xf32>
    %476 = arith.mulf %466, %416 : vector<2x32xf32>
    %477 = arith.addf %475, %476 : vector<2x32xf32>
    %478 = arith.index_cast %450 : i32 to index
    %c0_146 = arith.constant 0 : index
    %479 = vector.load %arg9[%478, %c0_146] : memref<16x96xf32, #tpu.memory_space<vmem>>, vector<2x96xf32>
    %480 = vector.extract_strided_slice %479 {offsets = [0, 0], sizes = [2, 64], strides = [1, 1]} : vector<2x96xf32> to vector<2x64xf32>
    %481 = vector.extract_strided_slice %452 {offsets = [0, 0], sizes = [2, 64], strides = [1, 1]} : vector<2x96xf32> to vector<2x64xf32>
    %482 = arith.addf %480, %481 : vector<2x64xf32>
    %cst_147 = arith.constant 5.000000e-01 : f32
    %483 = vector.broadcast %cst_147 : f32 to vector<2x64xf32>
    %484 = arith.mulf %483, %482 : vector<2x64xf32>
    %485 = math.tanh %484 : vector<2x64xf32>
    %cst_148 = arith.constant 1.000000e+00 : f32
    %486 = vector.broadcast %cst_148 : f32 to vector<2x64xf32>
    %487 = arith.addf %485, %486 : vector<2x64xf32>
    %cst_149 = arith.constant 5.000000e-01 : f32
    %488 = vector.broadcast %cst_149 : f32 to vector<2x64xf32>
    %489 = arith.mulf %488, %487 : vector<2x64xf32>
    %490 = vector.extract_strided_slice %489 {offsets = [0, 0], sizes = [2, 32], strides = [1, 1]} : vector<2x64xf32> to vector<2x32xf32>
    %491 = vector.extract_strided_slice %489 {offsets = [0, 32], sizes = [2, 32], strides = [1, 1]} : vector<2x64xf32> to vector<2x32xf32>
    %492 = vector.extract_strided_slice %479 {offsets = [0, 64], sizes = [2, 32], strides = [1, 1]} : vector<2x96xf32> to vector<2x32xf32>
    %493 = vector.extract_strided_slice %452 {offsets = [0, 64], sizes = [2, 32], strides = [1, 1]} : vector<2x96xf32> to vector<2x32xf32>
    %494 = arith.addf %493, %17 : vector<2x32xf32>
    %495 = arith.mulf %490, %494 : vector<2x32xf32>
    %496 = arith.addf %492, %495 : vector<2x32xf32>
    %497 = math.tanh %496 : vector<2x32xf32>
    %cst_150 = arith.constant 1.000000e+00 : f32
    %498 = vector.broadcast %cst_150 : f32 to vector<2x32xf32>
    %499 = arith.subf %498, %491 : vector<2x32xf32>
    %500 = arith.mulf %499, %497 : vector<2x32xf32>
    %501 = arith.mulf %491, %441 : vector<2x32xf32>
    %502 = arith.addf %500, %501 : vector<2x32xf32>
    %503 = arith.index_cast %447 : i32 to index
    %c0_151 = arith.constant 0 : index
    %504 = vector.load %arg7[%503, %c0_151] : memref<16x64xf32, #tpu.memory_space<vmem>>, vector<2x32xf32>
    tpu.vector_store %arg7[%503, %c0_151], %477 {strides = array<i32>} : memref<16x64xf32, #tpu.memory_space<vmem>>, vector<2x32xf32>,
    %505 = arith.index_cast %450 : i32 to index
    %c32_152 = arith.constant 32 : index
    %506 = vector.load %arg7[%505, %c32_152] : memref<16x64xf32, #tpu.memory_space<vmem>>, vector<2x32xf32>
    tpu.vector_store %arg7[%505, %c32_152], %502 {strides = array<i32>} : memref<16x64xf32, #tpu.memory_space<vmem>>, vector<2x32xf32>,
    %c8_i32 = arith.constant 8 : i32
    return
  }
  func.func @transform_0(%arg0: i32) -> (i32, i32) {
    %c0_i32 = arith.constant 0 : i32
    %c0_i32_0 = arith.constant 0 : i32
    %c0_i32_1 = arith.constant 0 : i32
    return %c0_i32, %c0_i32_0 : i32, i32
  }
  func.func @transform_1(%arg0: i32) -> (i32, i32) {
    %c0_i32 = arith.constant 0 : i32
    %c0_i32_0 = arith.constant 0 : i32
    %c0_i32_1 = arith.constant 0 : i32
    return %c0_i32, %c0_i32_0 : i32, i32
  }
  func.func @transform_2(%arg0: i32) -> (i32, i32) {
    %c0_i32 = arith.constant 0 : i32
    %c0_i32_0 = arith.constant 0 : i32
    %c0_i32_1 = arith.constant 0 : i32
    return %c0_i32, %c0_i32_0 : i32, i32
  }
  func.func @transform_3(%arg0: i32) -> (i32, i32) {
    %c0_i32 = arith.constant 0 : i32
    %c0_i32_0 = arith.constant 0 : i32
    %c0_i32_1 = arith.constant 0 : i32
    return %c0_i32, %c0_i32_0 : i32, i32
  }
  func.func @transform_4(%arg0: i32) -> (i32, i32) {
    %c0_i32 = arith.constant 0 : i32
    %c0_i32_0 = arith.constant 0 : i32
    %c0_i32_1 = arith.constant 0 : i32
    return %c0_i32, %c0_i32_0 : i32, i32
  }
  func.func @transform_5(%arg0: i32) -> (i32, i32) {
    %c0_i32 = arith.constant 0 : i32
    %c0_i32_0 = arith.constant 0 : i32
    %c0_i32_1 = arith.constant 0 : i32
    return %c0_i32, %c0_i32_0 : i32, i32
  }
  func.func @transform_6(%arg0: i32) -> (i32, i32) {
    %c0_i32 = arith.constant 0 : i32
    %c0_i32_0 = arith.constant 0 : i32
    %c0_i32_1 = arith.constant 0 : i32
    return %c0_i32, %c0_i32_0 : i32, i32
  }
}

module attributes {stable_mosaic.version = 11 : i64} {
  func.func @_gru_bidir_kernel(%arg0: i32, %arg1: memref<16x64xf32, #tpu.memory_space<vmem>>, %arg2: memref<64x192xf32, #tpu.memory_space<vmem>>, %arg3: memref<32x96xf32, #tpu.memory_space<vmem>>, %arg4: memref<32x96xf32, #tpu.memory_space<vmem>>, %arg5: memref<1x192xf32, #tpu.memory_space<vmem>>, %arg6: memref<1x64xf32, #tpu.memory_space<vmem>>, %arg7: memref<16x64xf32, #tpu.memory_space<vmem>>, %arg8: memref<16x96xf32, #tpu.memory_space<vmem>>, %arg9: memref<16x96xf32, #tpu.memory_space<vmem>>) attributes {dimension_semantics = [#tpu.dimension_semantics<arbitrary>], iteration_bounds = array<i64: 1>, scalar_prefetch = 0 : i64, scratch_operands = 2 : i64, tpu.core_type = #tpu.core_type<tc>, window_params = [{pipeline_mode = #tpu.pipeline_mode<synchronous>, transform_indices = @transform_0, window_bounds = array<i64: 16, 64>}, {pipeline_mode = #tpu.pipeline_mode<synchronous>, transform_indices = @transform_1, window_bounds = array<i64: 64, 192>}, {pipeline_mode = #tpu.pipeline_mode<synchronous>, transform_indices = @transform_2, window_bounds = array<i64: 32, 96>}, {pipeline_mode = #tpu.pipeline_mode<synchronous>, transform_indices = @transform_3, window_bounds = array<i64: 32, 96>}, {pipeline_mode = #tpu.pipeline_mode<synchronous>, transform_indices = @transform_4, window_bounds = array<i64: 1, 192>}, {pipeline_mode = #tpu.pipeline_mode<synchronous>, transform_indices = @transform_5, window_bounds = array<i64: 1, 64>}, {pipeline_mode = #tpu.pipeline_mode<synchronous>, transform_indices = @transform_6, window_bounds = array<i64: 16, 64>}]} {
    %c0 = arith.constant 0 : index
    %c0_0 = arith.constant 0 : index
    %0 = vector.load %arg1[%c0, %c0_0] : memref<16x64xf32, #tpu.memory_space<vmem>>, vector<16x64xf32>
    %c0_1 = arith.constant 0 : index
    %c0_2 = arith.constant 0 : index
    %1 = vector.load %arg2[%c0_1, %c0_2] : memref<64x192xf32, #tpu.memory_space<vmem>>, vector<64x192xf32>
    %cst = arith.constant dense<0.000000e+00> : vector<16x192xf32>
    %2 = tpu.matmul %0, %1, %cst {dimension_numbers = #tpu.dot_dimension_numbers<[1], [0], [0], [1], [0, 0, 1, 1], [], []>} : vector<16x64xf32>, vector<64x192xf32>, vector<16x192xf32> -> vector<16x192xf32>
    %c0_3 = arith.constant 0 : index
    %c0_4 = arith.constant 0 : index
    %3 = vector.load %arg5[%c0_3, %c0_4] : memref<1x192xf32, #tpu.memory_space<vmem>>, vector<1x192xf32>
    %4 = vector.broadcast %3 : vector<1x192xf32> to vector<16x192xf32>
    %5 = arith.addf %2, %4 : vector<16x192xf32>
    %6 = vector.extract_strided_slice %5 {offsets = [0, 0], sizes = [16, 96], strides = [1, 1]} : vector<16x192xf32> to vector<16x96xf32>
    %c0_5 = arith.constant 0 : index
    %c0_6 = arith.constant 0 : index
    %7 = vector.load %arg8[%c0_5, %c0_6] : memref<16x96xf32, #tpu.memory_space<vmem>>, vector<16x96xf32>
    tpu.vector_store %arg8[%c0_5, %c0_6], %6 {strides = array<i32>} : memref<16x96xf32, #tpu.memory_space<vmem>>, vector<16x96xf32>,
    %8 = vector.extract_strided_slice %5 {offsets = [0, 96], sizes = [16, 96], strides = [1, 1]} : vector<16x192xf32> to vector<16x96xf32>
    %c0_7 = arith.constant 0 : index
    %c0_8 = arith.constant 0 : index
    %9 = vector.load %arg9[%c0_7, %c0_8] : memref<16x96xf32, #tpu.memory_space<vmem>>, vector<16x96xf32>
    tpu.vector_store %arg9[%c0_7, %c0_8], %8 {strides = array<i32>} : memref<16x96xf32, #tpu.memory_space<vmem>>, vector<16x96xf32>,
    %c0_9 = arith.constant 0 : index
    %c0_10 = arith.constant 0 : index
    %10 = vector.load %arg3[%c0_9, %c0_10] : memref<32x96xf32, #tpu.memory_space<vmem>>, vector<32x96xf32>
    %c0_11 = arith.constant 0 : index
    %c0_12 = arith.constant 0 : index
    %11 = vector.load %arg4[%c0_11, %c0_12] : memref<32x96xf32, #tpu.memory_space<vmem>>, vector<32x96xf32>
    %c0_13 = arith.constant 0 : index
    %c0_14 = arith.constant 0 : index
    %12 = vector.load %arg6[%c0_13, %c0_14] : memref<1x64xf32, #tpu.memory_space<vmem>>, vector<1x32xf32>
    %13 = vector.shape_cast %12 : vector<1x32xf32> to vector<1x32xf32>
    %14 = vector.broadcast %13 : vector<1x32xf32> to vector<2x32xf32>
    %c0_15 = arith.constant 0 : index
    %c32 = arith.constant 32 : index
    %15 = vector.load %arg6[%c0_15, %c32] : memref<1x64xf32, #tpu.memory_space<vmem>>, vector<1x32xf32>
    %16 = vector.shape_cast %15 : vector<1x32xf32> to vector<1x32xf32>
    %17 = vector.broadcast %16 : vector<1x32xf32> to vector<2x32xf32>
    %cst_16 = arith.constant 0.000000e+00 : f32
    %18 = vector.broadcast %cst_16 : f32 to vector<2x32xf32>
    %c0_i32 = arith.constant 0 : i32
    %c2_i32 = arith.constant 2 : i32
    %19 = arith.muli %c0_i32, %c2_i32 : i32
    %20 = tpu.assume_multiple %19, 2 : i32
    %c7_i32 = arith.constant 7 : i32
    %21 = arith.subi %c7_i32, %c0_i32 : i32
    %c2_i32_17 = arith.constant 2 : i32
    %22 = arith.muli %21, %c2_i32_17 : i32
    %23 = tpu.assume_multiple %22, 2 : i32
    %cst_18 = arith.constant dense<0.000000e+00> : vector<2x96xf32>
    %24 = tpu.matmul %18, %10, %cst_18 {dimension_numbers = #tpu.dot_dimension_numbers<[1], [0], [0], [1], [0, 0, 1, 1], [], []>} : vector<2x32xf32>, vector<32x96xf32>, vector<2x96xf32> -> vector<2x96xf32>
    %cst_19 = arith.constant dense<0.000000e+00> : vector<2x96xf32>
    %25 = tpu.matmul %18, %11, %cst_19 {dimension_numbers = #tpu.dot_dimension_numbers<[1], [0], [0], [1], [0, 0, 1, 1], [], []>} : vector<2x32xf32>, vector<32x96xf32>, vector<2x96xf32> -> vector<2x96xf32>
    %26 = arith.index_cast %20 : i32 to index
    %c0_20 = arith.constant 0 : index
    %27 = vector.load %arg8[%26, %c0_20] : memref<16x96xf32, #tpu.memory_space<vmem>>, vector<2x96xf32>
    %28 = vector.extract_strided_slice %27 {offsets = [0, 0], sizes = [2, 64], strides = [1, 1]} : vector<2x96xf32> to vector<2x64xf32>
    %29 = vector.extract_strided_slice %24 {offsets = [0, 0], sizes = [2, 64], strides = [1, 1]} : vector<2x96xf32> to vector<2x64xf32>
    %30 = arith.addf %28, %29 : vector<2x64xf32>
    %cst_21 = arith.constant 5.000000e-01 : f32
    %31 = vector.broadcast %cst_21 : f32 to vector<2x64xf32>
    %32 = arith.mulf %31, %30 : vector<2x64xf32>
    %33 = math.tanh %32 : vector<2x64xf32>
    %cst_22 = arith.constant 1.000000e+00 : f32
    %34 = vector.broadcast %cst_22 : f32 to vector<2x64xf32>
    %35 = arith.addf %33, %34 : vector<2x64xf32>
    %cst_23 = arith.constant 5.000000e-01 : f32
    %36 = vector.broadcast %cst_23 : f32 to vector<2x64xf32>
    %37 = arith.mulf %36, %35 : vector<2x64xf32>
    %38 = vector.extract_strided_slice %37 {offsets = [0, 0], sizes = [2, 32], strides = [1, 1]} : vector<2x64xf32> to vector<2x32xf32>
    %39 = vector.extract_strided_slice %37 {offsets = [0, 32], sizes = [2, 32], strides = [1, 1]} : vector<2x64xf32> to vector<2x32xf32>
    %40 = vector.extract_strided_slice %27 {offsets = [0, 64], sizes = [2, 32], strides = [1, 1]} : vector<2x96xf32> to vector<2x32xf32>
    %41 = vector.extract_strided_slice %24 {offsets = [0, 64], sizes = [2, 32], strides = [1, 1]} : vector<2x96xf32> to vector<2x32xf32>
    %42 = arith.addf %41, %14 : vector<2x32xf32>
    %43 = arith.mulf %38, %42 : vector<2x32xf32>
    %44 = arith.addf %40, %43 : vector<2x32xf32>
    %45 = math.tanh %44 : vector<2x32xf32>
    %cst_24 = arith.constant 1.000000e+00 : f32
    %46 = vector.broadcast %cst_24 : f32 to vector<2x32xf32>
    %47 = arith.subf %46, %39 : vector<2x32xf32>
    %48 = arith.mulf %47, %45 : vector<2x32xf32>
    %49 = arith.mulf %39, %18 : vector<2x32xf32>
    %50 = arith.addf %48, %49 : vector<2x32xf32>
    %51 = arith.index_cast %23 : i32 to index
    %c0_25 = arith.constant 0 : index
    %52 = vector.load %arg9[%51, %c0_25] : memref<16x96xf32, #tpu.memory_space<vmem>>, vector<2x96xf32>
    %53 = vector.extract_strided_slice %52 {offsets = [0, 0], sizes = [2, 64], strides = [1, 1]} : vector<2x96xf32> to vector<2x64xf32>
    %54 = vector.extract_strided_slice %25 {offsets = [0, 0], sizes = [2, 64], strides = [1, 1]} : vector<2x96xf32> to vector<2x64xf32>
    %55 = arith.addf %53, %54 : vector<2x64xf32>
    %cst_26 = arith.constant 5.000000e-01 : f32
    %56 = vector.broadcast %cst_26 : f32 to vector<2x64xf32>
    %57 = arith.mulf %56, %55 : vector<2x64xf32>
    %58 = math.tanh %57 : vector<2x64xf32>
    %cst_27 = arith.constant 1.000000e+00 : f32
    %59 = vector.broadcast %cst_27 : f32 to vector<2x64xf32>
    %60 = arith.addf %58, %59 : vector<2x64xf32>
    %cst_28 = arith.constant 5.000000e-01 : f32
    %61 = vector.broadcast %cst_28 : f32 to vector<2x64xf32>
    %62 = arith.mulf %61, %60 : vector<2x64xf32>
    %63 = vector.extract_strided_slice %62 {offsets = [0, 0], sizes = [2, 32], strides = [1, 1]} : vector<2x64xf32> to vector<2x32xf32>
    %64 = vector.extract_strided_slice %62 {offsets = [0, 32], sizes = [2, 32], strides = [1, 1]} : vector<2x64xf32> to vector<2x32xf32>
    %65 = vector.extract_strided_slice %52 {offsets = [0, 64], sizes = [2, 32], strides = [1, 1]} : vector<2x96xf32> to vector<2x32xf32>
    %66 = vector.extract_strided_slice %25 {offsets = [0, 64], sizes = [2, 32], strides = [1, 1]} : vector<2x96xf32> to vector<2x32xf32>
    %67 = arith.addf %66, %17 : vector<2x32xf32>
    %68 = arith.mulf %63, %67 : vector<2x32xf32>
    %69 = arith.addf %65, %68 : vector<2x32xf32>
    %70 = math.tanh %69 : vector<2x32xf32>
    %cst_29 = arith.constant 1.000000e+00 : f32
    %71 = vector.broadcast %cst_29 : f32 to vector<2x32xf32>
    %72 = arith.subf %71, %64 : vector<2x32xf32>
    %73 = arith.mulf %72, %70 : vector<2x32xf32>
    %74 = arith.mulf %64, %18 : vector<2x32xf32>
    %75 = arith.addf %73, %74 : vector<2x32xf32>
    %76 = arith.index_cast %20 : i32 to index
    %c0_30 = arith.constant 0 : index
    %77 = vector.load %arg7[%76, %c0_30] : memref<16x64xf32, #tpu.memory_space<vmem>>, vector<2x32xf32>
    tpu.vector_store %arg7[%76, %c0_30], %50 {strides = array<i32>} : memref<16x64xf32, #tpu.memory_space<vmem>>, vector<2x32xf32>,
    %78 = arith.index_cast %23 : i32 to index
    %c32_31 = arith.constant 32 : index
    %79 = vector.load %arg7[%78, %c32_31] : memref<16x64xf32, #tpu.memory_space<vmem>>, vector<2x32xf32>
    tpu.vector_store %arg7[%78, %c32_31], %75 {strides = array<i32>} : memref<16x64xf32, #tpu.memory_space<vmem>>, vector<2x32xf32>,
    %c1_i32 = arith.constant 1 : i32
    %c2_i32_32 = arith.constant 2 : i32
    %80 = arith.muli %c1_i32, %c2_i32_32 : i32
    %81 = tpu.assume_multiple %80, 2 : i32
    %c7_i32_33 = arith.constant 7 : i32
    %82 = arith.subi %c7_i32_33, %c1_i32 : i32
    %c2_i32_34 = arith.constant 2 : i32
    %83 = arith.muli %82, %c2_i32_34 : i32
    %84 = tpu.assume_multiple %83, 2 : i32
    %cst_35 = arith.constant dense<0.000000e+00> : vector<2x96xf32>
    %85 = tpu.matmul %50, %10, %cst_35 {dimension_numbers = #tpu.dot_dimension_numbers<[1], [0], [0], [1], [0, 0, 1, 1], [], []>} : vector<2x32xf32>, vector<32x96xf32>, vector<2x96xf32> -> vector<2x96xf32>
    %cst_36 = arith.constant dense<0.000000e+00> : vector<2x96xf32>
    %86 = tpu.matmul %75, %11, %cst_36 {dimension_numbers = #tpu.dot_dimension_numbers<[1], [0], [0], [1], [0, 0, 1, 1], [], []>} : vector<2x32xf32>, vector<32x96xf32>, vector<2x96xf32> -> vector<2x96xf32>
    %87 = arith.index_cast %81 : i32 to index
    %c0_37 = arith.constant 0 : index
    %88 = vector.load %arg8[%87, %c0_37] : memref<16x96xf32, #tpu.memory_space<vmem>>, vector<2x96xf32>
    %89 = vector.extract_strided_slice %88 {offsets = [0, 0], sizes = [2, 64], strides = [1, 1]} : vector<2x96xf32> to vector<2x64xf32>
    %90 = vector.extract_strided_slice %85 {offsets = [0, 0], sizes = [2, 64], strides = [1, 1]} : vector<2x96xf32> to vector<2x64xf32>
    %91 = arith.addf %89, %90 : vector<2x64xf32>
    %cst_38 = arith.constant 5.000000e-01 : f32
    %92 = vector.broadcast %cst_38 : f32 to vector<2x64xf32>
    %93 = arith.mulf %92, %91 : vector<2x64xf32>
    %94 = math.tanh %93 : vector<2x64xf32>
    %cst_39 = arith.constant 1.000000e+00 : f32
    %95 = vector.broadcast %cst_39 : f32 to vector<2x64xf32>
    %96 = arith.addf %94, %95 : vector<2x64xf32>
    %cst_40 = arith.constant 5.000000e-01 : f32
    %97 = vector.broadcast %cst_40 : f32 to vector<2x64xf32>
    %98 = arith.mulf %97, %96 : vector<2x64xf32>
    %99 = vector.extract_strided_slice %98 {offsets = [0, 0], sizes = [2, 32], strides = [1, 1]} : vector<2x64xf32> to vector<2x32xf32>
    %100 = vector.extract_strided_slice %98 {offsets = [0, 32], sizes = [2, 32], strides = [1, 1]} : vector<2x64xf32> to vector<2x32xf32>
    %101 = vector.extract_strided_slice %88 {offsets = [0, 64], sizes = [2, 32], strides = [1, 1]} : vector<2x96xf32> to vector<2x32xf32>
    %102 = vector.extract_strided_slice %85 {offsets = [0, 64], sizes = [2, 32], strides = [1, 1]} : vector<2x96xf32> to vector<2x32xf32>
    %103 = arith.addf %102, %14 : vector<2x32xf32>
    %104 = arith.mulf %99, %103 : vector<2x32xf32>
    %105 = arith.addf %101, %104 : vector<2x32xf32>
    %106 = math.tanh %105 : vector<2x32xf32>
    %cst_41 = arith.constant 1.000000e+00 : f32
    %107 = vector.broadcast %cst_41 : f32 to vector<2x32xf32>
    %108 = arith.subf %107, %100 : vector<2x32xf32>
    %109 = arith.mulf %108, %106 : vector<2x32xf32>
    %110 = arith.mulf %100, %50 : vector<2x32xf32>
    %111 = arith.addf %109, %110 : vector<2x32xf32>
    %112 = arith.index_cast %84 : i32 to index
    %c0_42 = arith.constant 0 : index
    %113 = vector.load %arg9[%112, %c0_42] : memref<16x96xf32, #tpu.memory_space<vmem>>, vector<2x96xf32>
    %114 = vector.extract_strided_slice %113 {offsets = [0, 0], sizes = [2, 64], strides = [1, 1]} : vector<2x96xf32> to vector<2x64xf32>
    %115 = vector.extract_strided_slice %86 {offsets = [0, 0], sizes = [2, 64], strides = [1, 1]} : vector<2x96xf32> to vector<2x64xf32>
    %116 = arith.addf %114, %115 : vector<2x64xf32>
    %cst_43 = arith.constant 5.000000e-01 : f32
    %117 = vector.broadcast %cst_43 : f32 to vector<2x64xf32>
    %118 = arith.mulf %117, %116 : vector<2x64xf32>
    %119 = math.tanh %118 : vector<2x64xf32>
    %cst_44 = arith.constant 1.000000e+00 : f32
    %120 = vector.broadcast %cst_44 : f32 to vector<2x64xf32>
    %121 = arith.addf %119, %120 : vector<2x64xf32>
    %cst_45 = arith.constant 5.000000e-01 : f32
    %122 = vector.broadcast %cst_45 : f32 to vector<2x64xf32>
    %123 = arith.mulf %122, %121 : vector<2x64xf32>
    %124 = vector.extract_strided_slice %123 {offsets = [0, 0], sizes = [2, 32], strides = [1, 1]} : vector<2x64xf32> to vector<2x32xf32>
    %125 = vector.extract_strided_slice %123 {offsets = [0, 32], sizes = [2, 32], strides = [1, 1]} : vector<2x64xf32> to vector<2x32xf32>
    %126 = vector.extract_strided_slice %113 {offsets = [0, 64], sizes = [2, 32], strides = [1, 1]} : vector<2x96xf32> to vector<2x32xf32>
    %127 = vector.extract_strided_slice %86 {offsets = [0, 64], sizes = [2, 32], strides = [1, 1]} : vector<2x96xf32> to vector<2x32xf32>
    %128 = arith.addf %127, %17 : vector<2x32xf32>
    %129 = arith.mulf %124, %128 : vector<2x32xf32>
    %130 = arith.addf %126, %129 : vector<2x32xf32>
    %131 = math.tanh %130 : vector<2x32xf32>
    %cst_46 = arith.constant 1.000000e+00 : f32
    %132 = vector.broadcast %cst_46 : f32 to vector<2x32xf32>
    %133 = arith.subf %132, %125 : vector<2x32xf32>
    %134 = arith.mulf %133, %131 : vector<2x32xf32>
    %135 = arith.mulf %125, %75 : vector<2x32xf32>
    %136 = arith.addf %134, %135 : vector<2x32xf32>
    %137 = arith.index_cast %81 : i32 to index
    %c0_47 = arith.constant 0 : index
    %138 = vector.load %arg7[%137, %c0_47] : memref<16x64xf32, #tpu.memory_space<vmem>>, vector<2x32xf32>
    tpu.vector_store %arg7[%137, %c0_47], %111 {strides = array<i32>} : memref<16x64xf32, #tpu.memory_space<vmem>>, vector<2x32xf32>,
    %139 = arith.index_cast %84 : i32 to index
    %c32_48 = arith.constant 32 : index
    %140 = vector.load %arg7[%139, %c32_48] : memref<16x64xf32, #tpu.memory_space<vmem>>, vector<2x32xf32>
    tpu.vector_store %arg7[%139, %c32_48], %136 {strides = array<i32>} : memref<16x64xf32, #tpu.memory_space<vmem>>, vector<2x32xf32>,
    %c2_i32_49 = arith.constant 2 : i32
    %c2_i32_50 = arith.constant 2 : i32
    %141 = arith.muli %c2_i32_49, %c2_i32_50 : i32
    %142 = tpu.assume_multiple %141, 2 : i32
    %c7_i32_51 = arith.constant 7 : i32
    %143 = arith.subi %c7_i32_51, %c2_i32_49 : i32
    %c2_i32_52 = arith.constant 2 : i32
    %144 = arith.muli %143, %c2_i32_52 : i32
    %145 = tpu.assume_multiple %144, 2 : i32
    %cst_53 = arith.constant dense<0.000000e+00> : vector<2x96xf32>
    %146 = tpu.matmul %111, %10, %cst_53 {dimension_numbers = #tpu.dot_dimension_numbers<[1], [0], [0], [1], [0, 0, 1, 1], [], []>} : vector<2x32xf32>, vector<32x96xf32>, vector<2x96xf32> -> vector<2x96xf32>
    %cst_54 = arith.constant dense<0.000000e+00> : vector<2x96xf32>
    %147 = tpu.matmul %136, %11, %cst_54 {dimension_numbers = #tpu.dot_dimension_numbers<[1], [0], [0], [1], [0, 0, 1, 1], [], []>} : vector<2x32xf32>, vector<32x96xf32>, vector<2x96xf32> -> vector<2x96xf32>
    %148 = arith.index_cast %142 : i32 to index
    %c0_55 = arith.constant 0 : index
    %149 = vector.load %arg8[%148, %c0_55] : memref<16x96xf32, #tpu.memory_space<vmem>>, vector<2x96xf32>
    %150 = vector.extract_strided_slice %149 {offsets = [0, 0], sizes = [2, 64], strides = [1, 1]} : vector<2x96xf32> to vector<2x64xf32>
    %151 = vector.extract_strided_slice %146 {offsets = [0, 0], sizes = [2, 64], strides = [1, 1]} : vector<2x96xf32> to vector<2x64xf32>
    %152 = arith.addf %150, %151 : vector<2x64xf32>
    %cst_56 = arith.constant 5.000000e-01 : f32
    %153 = vector.broadcast %cst_56 : f32 to vector<2x64xf32>
    %154 = arith.mulf %153, %152 : vector<2x64xf32>
    %155 = math.tanh %154 : vector<2x64xf32>
    %cst_57 = arith.constant 1.000000e+00 : f32
    %156 = vector.broadcast %cst_57 : f32 to vector<2x64xf32>
    %157 = arith.addf %155, %156 : vector<2x64xf32>
    %cst_58 = arith.constant 5.000000e-01 : f32
    %158 = vector.broadcast %cst_58 : f32 to vector<2x64xf32>
    %159 = arith.mulf %158, %157 : vector<2x64xf32>
    %160 = vector.extract_strided_slice %159 {offsets = [0, 0], sizes = [2, 32], strides = [1, 1]} : vector<2x64xf32> to vector<2x32xf32>
    %161 = vector.extract_strided_slice %159 {offsets = [0, 32], sizes = [2, 32], strides = [1, 1]} : vector<2x64xf32> to vector<2x32xf32>
    %162 = vector.extract_strided_slice %149 {offsets = [0, 64], sizes = [2, 32], strides = [1, 1]} : vector<2x96xf32> to vector<2x32xf32>
    %163 = vector.extract_strided_slice %146 {offsets = [0, 64], sizes = [2, 32], strides = [1, 1]} : vector<2x96xf32> to vector<2x32xf32>
    %164 = arith.addf %163, %14 : vector<2x32xf32>
    %165 = arith.mulf %160, %164 : vector<2x32xf32>
    %166 = arith.addf %162, %165 : vector<2x32xf32>
    %167 = math.tanh %166 : vector<2x32xf32>
    %cst_59 = arith.constant 1.000000e+00 : f32
    %168 = vector.broadcast %cst_59 : f32 to vector<2x32xf32>
    %169 = arith.subf %168, %161 : vector<2x32xf32>
    %170 = arith.mulf %169, %167 : vector<2x32xf32>
    %171 = arith.mulf %161, %111 : vector<2x32xf32>
    %172 = arith.addf %170, %171 : vector<2x32xf32>
    %173 = arith.index_cast %145 : i32 to index
    %c0_60 = arith.constant 0 : index
    %174 = vector.load %arg9[%173, %c0_60] : memref<16x96xf32, #tpu.memory_space<vmem>>, vector<2x96xf32>
    %175 = vector.extract_strided_slice %174 {offsets = [0, 0], sizes = [2, 64], strides = [1, 1]} : vector<2x96xf32> to vector<2x64xf32>
    %176 = vector.extract_strided_slice %147 {offsets = [0, 0], sizes = [2, 64], strides = [1, 1]} : vector<2x96xf32> to vector<2x64xf32>
    %177 = arith.addf %175, %176 : vector<2x64xf32>
    %cst_61 = arith.constant 5.000000e-01 : f32
    %178 = vector.broadcast %cst_61 : f32 to vector<2x64xf32>
    %179 = arith.mulf %178, %177 : vector<2x64xf32>
    %180 = math.tanh %179 : vector<2x64xf32>
    %cst_62 = arith.constant 1.000000e+00 : f32
    %181 = vector.broadcast %cst_62 : f32 to vector<2x64xf32>
    %182 = arith.addf %180, %181 : vector<2x64xf32>
    %cst_63 = arith.constant 5.000000e-01 : f32
    %183 = vector.broadcast %cst_63 : f32 to vector<2x64xf32>
    %184 = arith.mulf %183, %182 : vector<2x64xf32>
    %185 = vector.extract_strided_slice %184 {offsets = [0, 0], sizes = [2, 32], strides = [1, 1]} : vector<2x64xf32> to vector<2x32xf32>
    %186 = vector.extract_strided_slice %184 {offsets = [0, 32], sizes = [2, 32], strides = [1, 1]} : vector<2x64xf32> to vector<2x32xf32>
    %187 = vector.extract_strided_slice %174 {offsets = [0, 64], sizes = [2, 32], strides = [1, 1]} : vector<2x96xf32> to vector<2x32xf32>
    %188 = vector.extract_strided_slice %147 {offsets = [0, 64], sizes = [2, 32], strides = [1, 1]} : vector<2x96xf32> to vector<2x32xf32>
    %189 = arith.addf %188, %17 : vector<2x32xf32>
    %190 = arith.mulf %185, %189 : vector<2x32xf32>
    %191 = arith.addf %187, %190 : vector<2x32xf32>
    %192 = math.tanh %191 : vector<2x32xf32>
    %cst_64 = arith.constant 1.000000e+00 : f32
    %193 = vector.broadcast %cst_64 : f32 to vector<2x32xf32>
    %194 = arith.subf %193, %186 : vector<2x32xf32>
    %195 = arith.mulf %194, %192 : vector<2x32xf32>
    %196 = arith.mulf %186, %136 : vector<2x32xf32>
    %197 = arith.addf %195, %196 : vector<2x32xf32>
    %198 = arith.index_cast %142 : i32 to index
    %c0_65 = arith.constant 0 : index
    %199 = vector.load %arg7[%198, %c0_65] : memref<16x64xf32, #tpu.memory_space<vmem>>, vector<2x32xf32>
    tpu.vector_store %arg7[%198, %c0_65], %172 {strides = array<i32>} : memref<16x64xf32, #tpu.memory_space<vmem>>, vector<2x32xf32>,
    %200 = arith.index_cast %145 : i32 to index
    %c32_66 = arith.constant 32 : index
    %201 = vector.load %arg7[%200, %c32_66] : memref<16x64xf32, #tpu.memory_space<vmem>>, vector<2x32xf32>
    tpu.vector_store %arg7[%200, %c32_66], %197 {strides = array<i32>} : memref<16x64xf32, #tpu.memory_space<vmem>>, vector<2x32xf32>,
    %c3_i32 = arith.constant 3 : i32
    %c2_i32_67 = arith.constant 2 : i32
    %202 = arith.muli %c3_i32, %c2_i32_67 : i32
    %203 = tpu.assume_multiple %202, 2 : i32
    %c7_i32_68 = arith.constant 7 : i32
    %204 = arith.subi %c7_i32_68, %c3_i32 : i32
    %c2_i32_69 = arith.constant 2 : i32
    %205 = arith.muli %204, %c2_i32_69 : i32
    %206 = tpu.assume_multiple %205, 2 : i32
    %cst_70 = arith.constant dense<0.000000e+00> : vector<2x96xf32>
    %207 = tpu.matmul %172, %10, %cst_70 {dimension_numbers = #tpu.dot_dimension_numbers<[1], [0], [0], [1], [0, 0, 1, 1], [], []>} : vector<2x32xf32>, vector<32x96xf32>, vector<2x96xf32> -> vector<2x96xf32>
    %cst_71 = arith.constant dense<0.000000e+00> : vector<2x96xf32>
    %208 = tpu.matmul %197, %11, %cst_71 {dimension_numbers = #tpu.dot_dimension_numbers<[1], [0], [0], [1], [0, 0, 1, 1], [], []>} : vector<2x32xf32>, vector<32x96xf32>, vector<2x96xf32> -> vector<2x96xf32>
    %209 = arith.index_cast %203 : i32 to index
    %c0_72 = arith.constant 0 : index
    %210 = vector.load %arg8[%209, %c0_72] : memref<16x96xf32, #tpu.memory_space<vmem>>, vector<2x96xf32>
    %211 = vector.extract_strided_slice %210 {offsets = [0, 0], sizes = [2, 64], strides = [1, 1]} : vector<2x96xf32> to vector<2x64xf32>
    %212 = vector.extract_strided_slice %207 {offsets = [0, 0], sizes = [2, 64], strides = [1, 1]} : vector<2x96xf32> to vector<2x64xf32>
    %213 = arith.addf %211, %212 : vector<2x64xf32>
    %cst_73 = arith.constant 5.000000e-01 : f32
    %214 = vector.broadcast %cst_73 : f32 to vector<2x64xf32>
    %215 = arith.mulf %214, %213 : vector<2x64xf32>
    %216 = math.tanh %215 : vector<2x64xf32>
    %cst_74 = arith.constant 1.000000e+00 : f32
    %217 = vector.broadcast %cst_74 : f32 to vector<2x64xf32>
    %218 = arith.addf %216, %217 : vector<2x64xf32>
    %cst_75 = arith.constant 5.000000e-01 : f32
    %219 = vector.broadcast %cst_75 : f32 to vector<2x64xf32>
    %220 = arith.mulf %219, %218 : vector<2x64xf32>
    %221 = vector.extract_strided_slice %220 {offsets = [0, 0], sizes = [2, 32], strides = [1, 1]} : vector<2x64xf32> to vector<2x32xf32>
    %222 = vector.extract_strided_slice %220 {offsets = [0, 32], sizes = [2, 32], strides = [1, 1]} : vector<2x64xf32> to vector<2x32xf32>
    %223 = vector.extract_strided_slice %210 {offsets = [0, 64], sizes = [2, 32], strides = [1, 1]} : vector<2x96xf32> to vector<2x32xf32>
    %224 = vector.extract_strided_slice %207 {offsets = [0, 64], sizes = [2, 32], strides = [1, 1]} : vector<2x96xf32> to vector<2x32xf32>
    %225 = arith.addf %224, %14 : vector<2x32xf32>
    %226 = arith.mulf %221, %225 : vector<2x32xf32>
    %227 = arith.addf %223, %226 : vector<2x32xf32>
    %228 = math.tanh %227 : vector<2x32xf32>
    %cst_76 = arith.constant 1.000000e+00 : f32
    %229 = vector.broadcast %cst_76 : f32 to vector<2x32xf32>
    %230 = arith.subf %229, %222 : vector<2x32xf32>
    %231 = arith.mulf %230, %228 : vector<2x32xf32>
    %232 = arith.mulf %222, %172 : vector<2x32xf32>
    %233 = arith.addf %231, %232 : vector<2x32xf32>
    %234 = arith.index_cast %206 : i32 to index
    %c0_77 = arith.constant 0 : index
    %235 = vector.load %arg9[%234, %c0_77] : memref<16x96xf32, #tpu.memory_space<vmem>>, vector<2x96xf32>
    %236 = vector.extract_strided_slice %235 {offsets = [0, 0], sizes = [2, 64], strides = [1, 1]} : vector<2x96xf32> to vector<2x64xf32>
    %237 = vector.extract_strided_slice %208 {offsets = [0, 0], sizes = [2, 64], strides = [1, 1]} : vector<2x96xf32> to vector<2x64xf32>
    %238 = arith.addf %236, %237 : vector<2x64xf32>
    %cst_78 = arith.constant 5.000000e-01 : f32
    %239 = vector.broadcast %cst_78 : f32 to vector<2x64xf32>
    %240 = arith.mulf %239, %238 : vector<2x64xf32>
    %241 = math.tanh %240 : vector<2x64xf32>
    %cst_79 = arith.constant 1.000000e+00 : f32
    %242 = vector.broadcast %cst_79 : f32 to vector<2x64xf32>
    %243 = arith.addf %241, %242 : vector<2x64xf32>
    %cst_80 = arith.constant 5.000000e-01 : f32
    %244 = vector.broadcast %cst_80 : f32 to vector<2x64xf32>
    %245 = arith.mulf %244, %243 : vector<2x64xf32>
    %246 = vector.extract_strided_slice %245 {offsets = [0, 0], sizes = [2, 32], strides = [1, 1]} : vector<2x64xf32> to vector<2x32xf32>
    %247 = vector.extract_strided_slice %245 {offsets = [0, 32], sizes = [2, 32], strides = [1, 1]} : vector<2x64xf32> to vector<2x32xf32>
    %248 = vector.extract_strided_slice %235 {offsets = [0, 64], sizes = [2, 32], strides = [1, 1]} : vector<2x96xf32> to vector<2x32xf32>
    %249 = vector.extract_strided_slice %208 {offsets = [0, 64], sizes = [2, 32], strides = [1, 1]} : vector<2x96xf32> to vector<2x32xf32>
    %250 = arith.addf %249, %17 : vector<2x32xf32>
    %251 = arith.mulf %246, %250 : vector<2x32xf32>
    %252 = arith.addf %248, %251 : vector<2x32xf32>
    %253 = math.tanh %252 : vector<2x32xf32>
    %cst_81 = arith.constant 1.000000e+00 : f32
    %254 = vector.broadcast %cst_81 : f32 to vector<2x32xf32>
    %255 = arith.subf %254, %247 : vector<2x32xf32>
    %256 = arith.mulf %255, %253 : vector<2x32xf32>
    %257 = arith.mulf %247, %197 : vector<2x32xf32>
    %258 = arith.addf %256, %257 : vector<2x32xf32>
    %259 = arith.index_cast %203 : i32 to index
    %c0_82 = arith.constant 0 : index
    %260 = vector.load %arg7[%259, %c0_82] : memref<16x64xf32, #tpu.memory_space<vmem>>, vector<2x32xf32>
    tpu.vector_store %arg7[%259, %c0_82], %233 {strides = array<i32>} : memref<16x64xf32, #tpu.memory_space<vmem>>, vector<2x32xf32>,
    %261 = arith.index_cast %206 : i32 to index
    %c32_83 = arith.constant 32 : index
    %262 = vector.load %arg7[%261, %c32_83] : memref<16x64xf32, #tpu.memory_space<vmem>>, vector<2x32xf32>
    tpu.vector_store %arg7[%261, %c32_83], %258 {strides = array<i32>} : memref<16x64xf32, #tpu.memory_space<vmem>>, vector<2x32xf32>,
    %c4_i32 = arith.constant 4 : i32
    %c2_i32_84 = arith.constant 2 : i32
    %263 = arith.muli %c4_i32, %c2_i32_84 : i32
    %264 = tpu.assume_multiple %263, 2 : i32
    %c7_i32_85 = arith.constant 7 : i32
    %265 = arith.subi %c7_i32_85, %c4_i32 : i32
    %c2_i32_86 = arith.constant 2 : i32
    %266 = arith.muli %265, %c2_i32_86 : i32
    %267 = tpu.assume_multiple %266, 2 : i32
    %cst_87 = arith.constant dense<0.000000e+00> : vector<2x96xf32>
    %268 = tpu.matmul %233, %10, %cst_87 {dimension_numbers = #tpu.dot_dimension_numbers<[1], [0], [0], [1], [0, 0, 1, 1], [], []>} : vector<2x32xf32>, vector<32x96xf32>, vector<2x96xf32> -> vector<2x96xf32>
    %cst_88 = arith.constant dense<0.000000e+00> : vector<2x96xf32>
    %269 = tpu.matmul %258, %11, %cst_88 {dimension_numbers = #tpu.dot_dimension_numbers<[1], [0], [0], [1], [0, 0, 1, 1], [], []>} : vector<2x32xf32>, vector<32x96xf32>, vector<2x96xf32> -> vector<2x96xf32>
    %270 = arith.index_cast %264 : i32 to index
    %c0_89 = arith.constant 0 : index
    %271 = vector.load %arg8[%270, %c0_89] : memref<16x96xf32, #tpu.memory_space<vmem>>, vector<2x96xf32>
    %272 = vector.extract_strided_slice %271 {offsets = [0, 0], sizes = [2, 64], strides = [1, 1]} : vector<2x96xf32> to vector<2x64xf32>
    %273 = vector.extract_strided_slice %268 {offsets = [0, 0], sizes = [2, 64], strides = [1, 1]} : vector<2x96xf32> to vector<2x64xf32>
    %274 = arith.addf %272, %273 : vector<2x64xf32>
    %cst_90 = arith.constant 5.000000e-01 : f32
    %275 = vector.broadcast %cst_90 : f32 to vector<2x64xf32>
    %276 = arith.mulf %275, %274 : vector<2x64xf32>
    %277 = math.tanh %276 : vector<2x64xf32>
    %cst_91 = arith.constant 1.000000e+00 : f32
    %278 = vector.broadcast %cst_91 : f32 to vector<2x64xf32>
    %279 = arith.addf %277, %278 : vector<2x64xf32>
    %cst_92 = arith.constant 5.000000e-01 : f32
    %280 = vector.broadcast %cst_92 : f32 to vector<2x64xf32>
    %281 = arith.mulf %280, %279 : vector<2x64xf32>
    %282 = vector.extract_strided_slice %281 {offsets = [0, 0], sizes = [2, 32], strides = [1, 1]} : vector<2x64xf32> to vector<2x32xf32>
    %283 = vector.extract_strided_slice %281 {offsets = [0, 32], sizes = [2, 32], strides = [1, 1]} : vector<2x64xf32> to vector<2x32xf32>
    %284 = vector.extract_strided_slice %271 {offsets = [0, 64], sizes = [2, 32], strides = [1, 1]} : vector<2x96xf32> to vector<2x32xf32>
    %285 = vector.extract_strided_slice %268 {offsets = [0, 64], sizes = [2, 32], strides = [1, 1]} : vector<2x96xf32> to vector<2x32xf32>
    %286 = arith.addf %285, %14 : vector<2x32xf32>
    %287 = arith.mulf %282, %286 : vector<2x32xf32>
    %288 = arith.addf %284, %287 : vector<2x32xf32>
    %289 = math.tanh %288 : vector<2x32xf32>
    %cst_93 = arith.constant 1.000000e+00 : f32
    %290 = vector.broadcast %cst_93 : f32 to vector<2x32xf32>
    %291 = arith.subf %290, %283 : vector<2x32xf32>
    %292 = arith.mulf %291, %289 : vector<2x32xf32>
    %293 = arith.mulf %283, %233 : vector<2x32xf32>
    %294 = arith.addf %292, %293 : vector<2x32xf32>
    %295 = arith.index_cast %267 : i32 to index
    %c0_94 = arith.constant 0 : index
    %296 = vector.load %arg9[%295, %c0_94] : memref<16x96xf32, #tpu.memory_space<vmem>>, vector<2x96xf32>
    %297 = vector.extract_strided_slice %296 {offsets = [0, 0], sizes = [2, 64], strides = [1, 1]} : vector<2x96xf32> to vector<2x64xf32>
    %298 = vector.extract_strided_slice %269 {offsets = [0, 0], sizes = [2, 64], strides = [1, 1]} : vector<2x96xf32> to vector<2x64xf32>
    %299 = arith.addf %297, %298 : vector<2x64xf32>
    %cst_95 = arith.constant 5.000000e-01 : f32
    %300 = vector.broadcast %cst_95 : f32 to vector<2x64xf32>
    %301 = arith.mulf %300, %299 : vector<2x64xf32>
    %302 = math.tanh %301 : vector<2x64xf32>
    %cst_96 = arith.constant 1.000000e+00 : f32
    %303 = vector.broadcast %cst_96 : f32 to vector<2x64xf32>
    %304 = arith.addf %302, %303 : vector<2x64xf32>
    %cst_97 = arith.constant 5.000000e-01 : f32
    %305 = vector.broadcast %cst_97 : f32 to vector<2x64xf32>
    %306 = arith.mulf %305, %304 : vector<2x64xf32>
    %307 = vector.extract_strided_slice %306 {offsets = [0, 0], sizes = [2, 32], strides = [1, 1]} : vector<2x64xf32> to vector<2x32xf32>
    %308 = vector.extract_strided_slice %306 {offsets = [0, 32], sizes = [2, 32], strides = [1, 1]} : vector<2x64xf32> to vector<2x32xf32>
    %309 = vector.extract_strided_slice %296 {offsets = [0, 64], sizes = [2, 32], strides = [1, 1]} : vector<2x96xf32> to vector<2x32xf32>
    %310 = vector.extract_strided_slice %269 {offsets = [0, 64], sizes = [2, 32], strides = [1, 1]} : vector<2x96xf32> to vector<2x32xf32>
    %311 = arith.addf %310, %17 : vector<2x32xf32>
    %312 = arith.mulf %307, %311 : vector<2x32xf32>
    %313 = arith.addf %309, %312 : vector<2x32xf32>
    %314 = math.tanh %313 : vector<2x32xf32>
    %cst_98 = arith.constant 1.000000e+00 : f32
    %315 = vector.broadcast %cst_98 : f32 to vector<2x32xf32>
    %316 = arith.subf %315, %308 : vector<2x32xf32>
    %317 = arith.mulf %316, %314 : vector<2x32xf32>
    %318 = arith.mulf %308, %258 : vector<2x32xf32>
    %319 = arith.addf %317, %318 : vector<2x32xf32>
    %320 = arith.index_cast %264 : i32 to index
    %c0_99 = arith.constant 0 : index
    %321 = vector.load %arg7[%320, %c0_99] : memref<16x64xf32, #tpu.memory_space<vmem>>, vector<2x32xf32>
    tpu.vector_store %arg7[%320, %c0_99], %294 {strides = array<i32>} : memref<16x64xf32, #tpu.memory_space<vmem>>, vector<2x32xf32>,
    %322 = arith.index_cast %267 : i32 to index
    %c32_100 = arith.constant 32 : index
    %323 = vector.load %arg7[%322, %c32_100] : memref<16x64xf32, #tpu.memory_space<vmem>>, vector<2x32xf32>
    tpu.vector_store %arg7[%322, %c32_100], %319 {strides = array<i32>} : memref<16x64xf32, #tpu.memory_space<vmem>>, vector<2x32xf32>,
    %c5_i32 = arith.constant 5 : i32
    %c2_i32_101 = arith.constant 2 : i32
    %324 = arith.muli %c5_i32, %c2_i32_101 : i32
    %325 = tpu.assume_multiple %324, 2 : i32
    %c7_i32_102 = arith.constant 7 : i32
    %326 = arith.subi %c7_i32_102, %c5_i32 : i32
    %c2_i32_103 = arith.constant 2 : i32
    %327 = arith.muli %326, %c2_i32_103 : i32
    %328 = tpu.assume_multiple %327, 2 : i32
    %cst_104 = arith.constant dense<0.000000e+00> : vector<2x96xf32>
    %329 = tpu.matmul %294, %10, %cst_104 {dimension_numbers = #tpu.dot_dimension_numbers<[1], [0], [0], [1], [0, 0, 1, 1], [], []>} : vector<2x32xf32>, vector<32x96xf32>, vector<2x96xf32> -> vector<2x96xf32>
    %cst_105 = arith.constant dense<0.000000e+00> : vector<2x96xf32>
    %330 = tpu.matmul %319, %11, %cst_105 {dimension_numbers = #tpu.dot_dimension_numbers<[1], [0], [0], [1], [0, 0, 1, 1], [], []>} : vector<2x32xf32>, vector<32x96xf32>, vector<2x96xf32> -> vector<2x96xf32>
    %331 = arith.index_cast %325 : i32 to index
    %c0_106 = arith.constant 0 : index
    %332 = vector.load %arg8[%331, %c0_106] : memref<16x96xf32, #tpu.memory_space<vmem>>, vector<2x96xf32>
    %333 = vector.extract_strided_slice %332 {offsets = [0, 0], sizes = [2, 64], strides = [1, 1]} : vector<2x96xf32> to vector<2x64xf32>
    %334 = vector.extract_strided_slice %329 {offsets = [0, 0], sizes = [2, 64], strides = [1, 1]} : vector<2x96xf32> to vector<2x64xf32>
    %335 = arith.addf %333, %334 : vector<2x64xf32>
    %cst_107 = arith.constant 5.000000e-01 : f32
    %336 = vector.broadcast %cst_107 : f32 to vector<2x64xf32>
    %337 = arith.mulf %336, %335 : vector<2x64xf32>
    %338 = math.tanh %337 : vector<2x64xf32>
    %cst_108 = arith.constant 1.000000e+00 : f32
    %339 = vector.broadcast %cst_108 : f32 to vector<2x64xf32>
    %340 = arith.addf %338, %339 : vector<2x64xf32>
    %cst_109 = arith.constant 5.000000e-01 : f32
    %341 = vector.broadcast %cst_109 : f32 to vector<2x64xf32>
    %342 = arith.mulf %341, %340 : vector<2x64xf32>
    %343 = vector.extract_strided_slice %342 {offsets = [0, 0], sizes = [2, 32], strides = [1, 1]} : vector<2x64xf32> to vector<2x32xf32>
    %344 = vector.extract_strided_slice %342 {offsets = [0, 32], sizes = [2, 32], strides = [1, 1]} : vector<2x64xf32> to vector<2x32xf32>
    %345 = vector.extract_strided_slice %332 {offsets = [0, 64], sizes = [2, 32], strides = [1, 1]} : vector<2x96xf32> to vector<2x32xf32>
    %346 = vector.extract_strided_slice %329 {offsets = [0, 64], sizes = [2, 32], strides = [1, 1]} : vector<2x96xf32> to vector<2x32xf32>
    %347 = arith.addf %346, %14 : vector<2x32xf32>
    %348 = arith.mulf %343, %347 : vector<2x32xf32>
    %349 = arith.addf %345, %348 : vector<2x32xf32>
    %350 = math.tanh %349 : vector<2x32xf32>
    %cst_110 = arith.constant 1.000000e+00 : f32
    %351 = vector.broadcast %cst_110 : f32 to vector<2x32xf32>
    %352 = arith.subf %351, %344 : vector<2x32xf32>
    %353 = arith.mulf %352, %350 : vector<2x32xf32>
    %354 = arith.mulf %344, %294 : vector<2x32xf32>
    %355 = arith.addf %353, %354 : vector<2x32xf32>
    %356 = arith.index_cast %328 : i32 to index
    %c0_111 = arith.constant 0 : index
    %357 = vector.load %arg9[%356, %c0_111] : memref<16x96xf32, #tpu.memory_space<vmem>>, vector<2x96xf32>
    %358 = vector.extract_strided_slice %357 {offsets = [0, 0], sizes = [2, 64], strides = [1, 1]} : vector<2x96xf32> to vector<2x64xf32>
    %359 = vector.extract_strided_slice %330 {offsets = [0, 0], sizes = [2, 64], strides = [1, 1]} : vector<2x96xf32> to vector<2x64xf32>
    %360 = arith.addf %358, %359 : vector<2x64xf32>
    %cst_112 = arith.constant 5.000000e-01 : f32
    %361 = vector.broadcast %cst_112 : f32 to vector<2x64xf32>
    %362 = arith.mulf %361, %360 : vector<2x64xf32>
    %363 = math.tanh %362 : vector<2x64xf32>
    %cst_113 = arith.constant 1.000000e+00 : f32
    %364 = vector.broadcast %cst_113 : f32 to vector<2x64xf32>
    %365 = arith.addf %363, %364 : vector<2x64xf32>
    %cst_114 = arith.constant 5.000000e-01 : f32
    %366 = vector.broadcast %cst_114 : f32 to vector<2x64xf32>
    %367 = arith.mulf %366, %365 : vector<2x64xf32>
    %368 = vector.extract_strided_slice %367 {offsets = [0, 0], sizes = [2, 32], strides = [1, 1]} : vector<2x64xf32> to vector<2x32xf32>
    %369 = vector.extract_strided_slice %367 {offsets = [0, 32], sizes = [2, 32], strides = [1, 1]} : vector<2x64xf32> to vector<2x32xf32>
    %370 = vector.extract_strided_slice %357 {offsets = [0, 64], sizes = [2, 32], strides = [1, 1]} : vector<2x96xf32> to vector<2x32xf32>
    %371 = vector.extract_strided_slice %330 {offsets = [0, 64], sizes = [2, 32], strides = [1, 1]} : vector<2x96xf32> to vector<2x32xf32>
    %372 = arith.addf %371, %17 : vector<2x32xf32>
    %373 = arith.mulf %368, %372 : vector<2x32xf32>
    %374 = arith.addf %370, %373 : vector<2x32xf32>
    %375 = math.tanh %374 : vector<2x32xf32>
    %cst_115 = arith.constant 1.000000e+00 : f32
    %376 = vector.broadcast %cst_115 : f32 to vector<2x32xf32>
    %377 = arith.subf %376, %369 : vector<2x32xf32>
    %378 = arith.mulf %377, %375 : vector<2x32xf32>
    %379 = arith.mulf %369, %319 : vector<2x32xf32>
    %380 = arith.addf %378, %379 : vector<2x32xf32>
    %381 = arith.index_cast %325 : i32 to index
    %c0_116 = arith.constant 0 : index
    %382 = vector.load %arg7[%381, %c0_116] : memref<16x64xf32, #tpu.memory_space<vmem>>, vector<2x32xf32>
    tpu.vector_store %arg7[%381, %c0_116], %355 {strides = array<i32>} : memref<16x64xf32, #tpu.memory_space<vmem>>, vector<2x32xf32>,
    %383 = arith.index_cast %328 : i32 to index
    %c32_117 = arith.constant 32 : index
    %384 = vector.load %arg7[%383, %c32_117] : memref<16x64xf32, #tpu.memory_space<vmem>>, vector<2x32xf32>
    tpu.vector_store %arg7[%383, %c32_117], %380 {strides = array<i32>} : memref<16x64xf32, #tpu.memory_space<vmem>>, vector<2x32xf32>,
    %c6_i32 = arith.constant 6 : i32
    %c2_i32_118 = arith.constant 2 : i32
    %385 = arith.muli %c6_i32, %c2_i32_118 : i32
    %386 = tpu.assume_multiple %385, 2 : i32
    %c7_i32_119 = arith.constant 7 : i32
    %387 = arith.subi %c7_i32_119, %c6_i32 : i32
    %c2_i32_120 = arith.constant 2 : i32
    %388 = arith.muli %387, %c2_i32_120 : i32
    %389 = tpu.assume_multiple %388, 2 : i32
    %cst_121 = arith.constant dense<0.000000e+00> : vector<2x96xf32>
    %390 = tpu.matmul %355, %10, %cst_121 {dimension_numbers = #tpu.dot_dimension_numbers<[1], [0], [0], [1], [0, 0, 1, 1], [], []>} : vector<2x32xf32>, vector<32x96xf32>, vector<2x96xf32> -> vector<2x96xf32>
    %cst_122 = arith.constant dense<0.000000e+00> : vector<2x96xf32>
    %391 = tpu.matmul %380, %11, %cst_122 {dimension_numbers = #tpu.dot_dimension_numbers<[1], [0], [0], [1], [0, 0, 1, 1], [], []>} : vector<2x32xf32>, vector<32x96xf32>, vector<2x96xf32> -> vector<2x96xf32>
    %392 = arith.index_cast %386 : i32 to index
    %c0_123 = arith.constant 0 : index
    %393 = vector.load %arg8[%392, %c0_123] : memref<16x96xf32, #tpu.memory_space<vmem>>, vector<2x96xf32>
    %394 = vector.extract_strided_slice %393 {offsets = [0, 0], sizes = [2, 64], strides = [1, 1]} : vector<2x96xf32> to vector<2x64xf32>
    %395 = vector.extract_strided_slice %390 {offsets = [0, 0], sizes = [2, 64], strides = [1, 1]} : vector<2x96xf32> to vector<2x64xf32>
    %396 = arith.addf %394, %395 : vector<2x64xf32>
    %cst_124 = arith.constant 5.000000e-01 : f32
    %397 = vector.broadcast %cst_124 : f32 to vector<2x64xf32>
    %398 = arith.mulf %397, %396 : vector<2x64xf32>
    %399 = math.tanh %398 : vector<2x64xf32>
    %cst_125 = arith.constant 1.000000e+00 : f32
    %400 = vector.broadcast %cst_125 : f32 to vector<2x64xf32>
    %401 = arith.addf %399, %400 : vector<2x64xf32>
    %cst_126 = arith.constant 5.000000e-01 : f32
    %402 = vector.broadcast %cst_126 : f32 to vector<2x64xf32>
    %403 = arith.mulf %402, %401 : vector<2x64xf32>
    %404 = vector.extract_strided_slice %403 {offsets = [0, 0], sizes = [2, 32], strides = [1, 1]} : vector<2x64xf32> to vector<2x32xf32>
    %405 = vector.extract_strided_slice %403 {offsets = [0, 32], sizes = [2, 32], strides = [1, 1]} : vector<2x64xf32> to vector<2x32xf32>
    %406 = vector.extract_strided_slice %393 {offsets = [0, 64], sizes = [2, 32], strides = [1, 1]} : vector<2x96xf32> to vector<2x32xf32>
    %407 = vector.extract_strided_slice %390 {offsets = [0, 64], sizes = [2, 32], strides = [1, 1]} : vector<2x96xf32> to vector<2x32xf32>
    %408 = arith.addf %407, %14 : vector<2x32xf32>
    %409 = arith.mulf %404, %408 : vector<2x32xf32>
    %410 = arith.addf %406, %409 : vector<2x32xf32>
    %411 = math.tanh %410 : vector<2x32xf32>
    %cst_127 = arith.constant 1.000000e+00 : f32
    %412 = vector.broadcast %cst_127 : f32 to vector<2x32xf32>
    %413 = arith.subf %412, %405 : vector<2x32xf32>
    %414 = arith.mulf %413, %411 : vector<2x32xf32>
    %415 = arith.mulf %405, %355 : vector<2x32xf32>
    %416 = arith.addf %414, %415 : vector<2x32xf32>
    %417 = arith.index_cast %389 : i32 to index
    %c0_128 = arith.constant 0 : index
    %418 = vector.load %arg9[%417, %c0_128] : memref<16x96xf32, #tpu.memory_space<vmem>>, vector<2x96xf32>
    %419 = vector.extract_strided_slice %418 {offsets = [0, 0], sizes = [2, 64], strides = [1, 1]} : vector<2x96xf32> to vector<2x64xf32>
    %420 = vector.extract_strided_slice %391 {offsets = [0, 0], sizes = [2, 64], strides = [1, 1]} : vector<2x96xf32> to vector<2x64xf32>
    %421 = arith.addf %419, %420 : vector<2x64xf32>
    %cst_129 = arith.constant 5.000000e-01 : f32
    %422 = vector.broadcast %cst_129 : f32 to vector<2x64xf32>
    %423 = arith.mulf %422, %421 : vector<2x64xf32>
    %424 = math.tanh %423 : vector<2x64xf32>
    %cst_130 = arith.constant 1.000000e+00 : f32
    %425 = vector.broadcast %cst_130 : f32 to vector<2x64xf32>
    %426 = arith.addf %424, %425 : vector<2x64xf32>
    %cst_131 = arith.constant 5.000000e-01 : f32
    %427 = vector.broadcast %cst_131 : f32 to vector<2x64xf32>
    %428 = arith.mulf %427, %426 : vector<2x64xf32>
    %429 = vector.extract_strided_slice %428 {offsets = [0, 0], sizes = [2, 32], strides = [1, 1]} : vector<2x64xf32> to vector<2x32xf32>
    %430 = vector.extract_strided_slice %428 {offsets = [0, 32], sizes = [2, 32], strides = [1, 1]} : vector<2x64xf32> to vector<2x32xf32>
    %431 = vector.extract_strided_slice %418 {offsets = [0, 64], sizes = [2, 32], strides = [1, 1]} : vector<2x96xf32> to vector<2x32xf32>
    %432 = vector.extract_strided_slice %391 {offsets = [0, 64], sizes = [2, 32], strides = [1, 1]} : vector<2x96xf32> to vector<2x32xf32>
    %433 = arith.addf %432, %17 : vector<2x32xf32>
    %434 = arith.mulf %429, %433 : vector<2x32xf32>
    %435 = arith.addf %431, %434 : vector<2x32xf32>
    %436 = math.tanh %435 : vector<2x32xf32>
    %cst_132 = arith.constant 1.000000e+00 : f32
    %437 = vector.broadcast %cst_132 : f32 to vector<2x32xf32>
    %438 = arith.subf %437, %430 : vector<2x32xf32>
    %439 = arith.mulf %438, %436 : vector<2x32xf32>
    %440 = arith.mulf %430, %380 : vector<2x32xf32>
    %441 = arith.addf %439, %440 : vector<2x32xf32>
    %442 = arith.index_cast %386 : i32 to index
    %c0_133 = arith.constant 0 : index
    %443 = vector.load %arg7[%442, %c0_133] : memref<16x64xf32, #tpu.memory_space<vmem>>, vector<2x32xf32>
    tpu.vector_store %arg7[%442, %c0_133], %416 {strides = array<i32>} : memref<16x64xf32, #tpu.memory_space<vmem>>, vector<2x32xf32>,
    %444 = arith.index_cast %389 : i32 to index
    %c32_134 = arith.constant 32 : index
    %445 = vector.load %arg7[%444, %c32_134] : memref<16x64xf32, #tpu.memory_space<vmem>>, vector<2x32xf32>
    tpu.vector_store %arg7[%444, %c32_134], %441 {strides = array<i32>} : memref<16x64xf32, #tpu.memory_space<vmem>>, vector<2x32xf32>,
    %c7_i32_135 = arith.constant 7 : i32
    %c2_i32_136 = arith.constant 2 : i32
    %446 = arith.muli %c7_i32_135, %c2_i32_136 : i32
    %447 = tpu.assume_multiple %446, 2 : i32
    %c7_i32_137 = arith.constant 7 : i32
    %448 = arith.subi %c7_i32_137, %c7_i32_135 : i32
    %c2_i32_138 = arith.constant 2 : i32
    %449 = arith.muli %448, %c2_i32_138 : i32
    %450 = tpu.assume_multiple %449, 2 : i32
    %cst_139 = arith.constant dense<0.000000e+00> : vector<2x96xf32>
    %451 = tpu.matmul %416, %10, %cst_139 {dimension_numbers = #tpu.dot_dimension_numbers<[1], [0], [0], [1], [0, 0, 1, 1], [], []>} : vector<2x32xf32>, vector<32x96xf32>, vector<2x96xf32> -> vector<2x96xf32>
    %cst_140 = arith.constant dense<0.000000e+00> : vector<2x96xf32>
    %452 = tpu.matmul %441, %11, %cst_140 {dimension_numbers = #tpu.dot_dimension_numbers<[1], [0], [0], [1], [0, 0, 1, 1], [], []>} : vector<2x32xf32>, vector<32x96xf32>, vector<2x96xf32> -> vector<2x96xf32>
    %453 = arith.index_cast %447 : i32 to index
    %c0_141 = arith.constant 0 : index
    %454 = vector.load %arg8[%453, %c0_141] : memref<16x96xf32, #tpu.memory_space<vmem>>, vector<2x96xf32>
    %455 = vector.extract_strided_slice %454 {offsets = [0, 0], sizes = [2, 64], strides = [1, 1]} : vector<2x96xf32> to vector<2x64xf32>
    %456 = vector.extract_strided_slice %451 {offsets = [0, 0], sizes = [2, 64], strides = [1, 1]} : vector<2x96xf32> to vector<2x64xf32>
    %457 = arith.addf %455, %456 : vector<2x64xf32>
    %cst_142 = arith.constant 5.000000e-01 : f32
    %458 = vector.broadcast %cst_142 : f32 to vector<2x64xf32>
    %459 = arith.mulf %458, %457 : vector<2x64xf32>
    %460 = math.tanh %459 : vector<2x64xf32>
    %cst_143 = arith.constant 1.000000e+00 : f32
    %461 = vector.broadcast %cst_143 : f32 to vector<2x64xf32>
    %462 = arith.addf %460, %461 : vector<2x64xf32>
    %cst_144 = arith.constant 5.000000e-01 : f32
    %463 = vector.broadcast %cst_144 : f32 to vector<2x64xf32>
    %464 = arith.mulf %463, %462 : vector<2x64xf32>
    %465 = vector.extract_strided_slice %464 {offsets = [0, 0], sizes = [2, 32], strides = [1, 1]} : vector<2x64xf32> to vector<2x32xf32>
    %466 = vector.extract_strided_slice %464 {offsets = [0, 32], sizes = [2, 32], strides = [1, 1]} : vector<2x64xf32> to vector<2x32xf32>
    %467 = vector.extract_strided_slice %454 {offsets = [0, 64], sizes = [2, 32], strides = [1, 1]} : vector<2x96xf32> to vector<2x32xf32>
    %468 = vector.extract_strided_slice %451 {offsets = [0, 64], sizes = [2, 32], strides = [1, 1]} : vector<2x96xf32> to vector<2x32xf32>
    %469 = arith.addf %468, %14 : vector<2x32xf32>
    %470 = arith.mulf %465, %469 : vector<2x32xf32>
    %471 = arith.addf %467, %470 : vector<2x32xf32>
    %472 = math.tanh %471 : vector<2x32xf32>
    %cst_145 = arith.constant 1.000000e+00 : f32
    %473 = vector.broadcast %cst_145 : f32 to vector<2x32xf32>
    %474 = arith.subf %473, %466 : vector<2x32xf32>
    %475 = arith.mulf %474, %472 : vector<2x32xf32>
    %476 = arith.mulf %466, %416 : vector<2x32xf32>
    %477 = arith.addf %475, %476 : vector<2x32xf32>
    %478 = arith.index_cast %450 : i32 to index
    %c0_146 = arith.constant 0 : index
    %479 = vector.load %arg9[%478, %c0_146] : memref<16x96xf32, #tpu.memory_space<vmem>>, vector<2x96xf32>
    %480 = vector.extract_strided_slice %479 {offsets = [0, 0], sizes = [2, 64], strides = [1, 1]} : vector<2x96xf32> to vector<2x64xf32>
    %481 = vector.extract_strided_slice %452 {offsets = [0, 0], sizes = [2, 64], strides = [1, 1]} : vector<2x96xf32> to vector<2x64xf32>
    %482 = arith.addf %480, %481 : vector<2x64xf32>
    %cst_147 = arith.constant 5.000000e-01 : f32
    %483 = vector.broadcast %cst_147 : f32 to vector<2x64xf32>
    %484 = arith.mulf %483, %482 : vector<2x64xf32>
    %485 = math.tanh %484 : vector<2x64xf32>
    %cst_148 = arith.constant 1.000000e+00 : f32
    %486 = vector.broadcast %cst_148 : f32 to vector<2x64xf32>
    %487 = arith.addf %485, %486 : vector<2x64xf32>
    %cst_149 = arith.constant 5.000000e-01 : f32
    %488 = vector.broadcast %cst_149 : f32 to vector<2x64xf32>
    %489 = arith.mulf %488, %487 : vector<2x64xf32>
    %490 = vector.extract_strided_slice %489 {offsets = [0, 0], sizes = [2, 32], strides = [1, 1]} : vector<2x64xf32> to vector<2x32xf32>
    %491 = vector.extract_strided_slice %489 {offsets = [0, 32], sizes = [2, 32], strides = [1, 1]} : vector<2x64xf32> to vector<2x32xf32>
    %492 = vector.extract_strided_slice %479 {offsets = [0, 64], sizes = [2, 32], strides = [1, 1]} : vector<2x96xf32> to vector<2x32xf32>
    %493 = vector.extract_strided_slice %452 {offsets = [0, 64], sizes = [2, 32], strides = [1, 1]} : vector<2x96xf32> to vector<2x32xf32>
    %494 = arith.addf %493, %17 : vector<2x32xf32>
    %495 = arith.mulf %490, %494 : vector<2x32xf32>
    %496 = arith.addf %492, %495 : vector<2x32xf32>
    %497 = math.tanh %496 : vector<2x32xf32>
    %cst_150 = arith.constant 1.000000e+00 : f32
    %498 = vector.broadcast %cst_150 : f32 to vector<2x32xf32>
    %499 = arith.subf %498, %491 : vector<2x32xf32>
    %500 = arith.mulf %499, %497 : vector<2x32xf32>
    %501 = arith.mulf %491, %441 : vector<2x32xf32>
    %502 = arith.addf %500, %501 : vector<2x32xf32>
    %503 = arith.index_cast %447 : i32 to index
    %c0_151 = arith.constant 0 : index
    %504 = vector.load %arg7[%503, %c0_151] : memref<16x64xf32, #tpu.memory_space<vmem>>, vector<2x32xf32>
    tpu.vector_store %arg7[%503, %c0_151], %477 {strides = array<i32>} : memref<16x64xf32, #tpu.memory_space<vmem>>, vector<2x32xf32>,
    %505 = arith.index_cast %450 : i32 to index
    %c32_152 = arith.constant 32 : index
    %506 = vector.load %arg7[%505, %c32_152] : memref<16x64xf32, #tpu.memory_space<vmem>>, vector<2x32xf32>
    tpu.vector_store %arg7[%505, %c32_152], %502 {strides = array<i32>} : memref<16x64xf32, #tpu.memory_space<vmem>>, vector<2x32xf32>,
    %c8_i32 = arith.constant 8 : i32
    return
  }
  func.func @transform_0(%arg0: i32) -> (i32, i32) {
    %c0_i32 = arith.constant 0 : i32
    %c0_i32_0 = arith.constant 0 : i32
    %c0_i32_1 = arith.constant 0 : i32
    return %c0_i32, %c0_i32_0 : i32, i32
  }
  func.func @transform_1(%arg0: i32) -> (i32, i32) {
    %c0_i32 = arith.constant 0 : i32
    %c0_i32_0 = arith.constant 0 : i32
    %c0_i32_1 = arith.constant 0 : i32
    return %c0_i32, %c0_i32_0 : i32, i32
  }
  func.func @transform_2(%arg0: i32) -> (i32, i32) {
    %c0_i32 = arith.constant 0 : i32
    %c0_i32_0 = arith.constant 0 : i32
    %c0_i32_1 = arith.constant 0 : i32
    return %c0_i32, %c0_i32_0 : i32, i32
  }
  func.func @transform_3(%arg0: i32) -> (i32, i32) {
    %c0_i32 = arith.constant 0 : i32
    %c0_i32_0 = arith.constant 0 : i32
    %c0_i32_1 = arith.constant 0 : i32
    return %c0_i32, %c0_i32_0 : i32, i32
  }
  func.func @transform_4(%arg0: i32) -> (i32, i32) {
    %c0_i32 = arith.constant 0 : i32
    %c0_i32_0 = arith.constant 0 : i32
    %c0_i32_1 = arith.constant 0 : i32
    return %c0_i32, %c0_i32_0 : i32, i32
  }
  func.func @transform_5(%arg0: i32) -> (i32, i32) {
    %c0_i32 = arith.constant 0 : i32
    %c0_i32_0 = arith.constant 0 : i32
    %c0_i32_1 = arith.constant 0 : i32
    return %c0_i32, %c0_i32_0 : i32, i32
  }
  func.func @transform_6(%arg0: i32) -> (i32, i32) {
    %c0_i32 = arith.constant 0 : i32
    %c0_i32_0 = arith.constant 0 : i32
    %c0_i32_1 = arith.constant 0 : i32
    return %c0_i32, %c0_i32_0 : i32, i32
  }
}

</mosaic_0001>

<llo_original>
// kernel: gru_forward.3
$region0: #{gru_forward.3}
  #allocation0 [shape = 'u32[]', space=smem, size = 0x4, offset = 0x4, fixed_abs, tag = 'smem constant byte address 0x4 - core index']
  #allocation1 [shape = 'u32[144,128]{1,0:T(1,128)}', space=vmem, size = 0x12000, scoped, tag = 'internal scratch']
  #allocation2 [shape = 'f32[16,96]{1,0:T(8,128)}', space=vmem, size = 0x2000, scoped, tag = 'scratch operand']
  #allocation3 [shape = 'f32[16,96]{1,0:T(8,128)}', space=vmem, size = 0x2000, scoped, tag = 'scratch operand']
  %s0 = inlined_call_operand.vmem [shape: f32[16,64], index: 0, kind: input, shape index: {}]
  %s1 = inlined_call_operand.vmem [shape: f32[64,192], index: 1, kind: input, shape index: {}]
  %s2 = inlined_call_operand.vmem [shape: f32[32,96], index: 2, kind: input, shape index: {}]
  %s3 = inlined_call_operand.vmem [shape: f32[32,96], index: 3, kind: input, shape index: {}]
  %s4 = inlined_call_operand.vmem [shape: f32[1,192], index: 4, kind: input, shape index: {}]
  %s5 = inlined_call_operand.vmem [shape: f32[1,64], index: 5, kind: input, shape index: {}]
  %s6 = inlined_call_operand.vmem [shape: f32[16,64], index: 6, kind: output, shape index: {}]
  %s7 = sld [smem:[#allocation0]]
  $region34: #{gru_forward.3} parent=0
    _
  %s9 = ssub.s32 1, %s7
  %s10 = scalar_select 0, %s9, %s7
  // Predicated region
  $region2: #{gru_forward.3} parent=0 // pred_check
    _
  $region3: #{gru_forward.3} parent=0 // pred_check_branch
    %12 = sbr.rel (0) target = $region5
  $region4: #{gru_forward.3} parent=0 // pred_region
    _
  $region5: #{gru_forward.3} parent=0 // pred_fallthru
    _
  // Predicated region
  $region6: #{gru_forward.3} parent=0 // pred_check
    _
  $region7: #{gru_forward.3} parent=0 // pred_check_branch
    %14 = sbr.rel (0) target = $region9
  $region8: #{gru_forward.3} parent=0 // pred_region
    _
  $region9: #{gru_forward.3} parent=0 // pred_fallthru
    _
  // Predicated region
  $region10: #{gru_forward.3} parent=0 // pred_check
    _
  $region11: #{gru_forward.3} parent=0 // pred_check_branch
    %16 = sbr.rel (0) target = $region13
  $region12: #{gru_forward.3} parent=0 // pred_region
    _
  $region13: #{gru_forward.3} parent=0 // pred_fallthru
    _
  // Predicated region
  $region14: #{gru_forward.3} parent=0 // pred_check
    _
  $region15: #{gru_forward.3} parent=0 // pred_check_branch
    %18 = sbr.rel (0) target = $region17
  $region16: #{gru_forward.3} parent=0 // pred_region
    _
  $region17: #{gru_forward.3} parent=0 // pred_fallthru
    _
  // Predicated region
  $region18: #{gru_forward.3} parent=0 // pred_check
    _
  $region19: #{gru_forward.3} parent=0 // pred_check_branch
    %20 = sbr.rel (0) target = $region21
  $region20: #{gru_forward.3} parent=0 // pred_region
    _
  $region21: #{gru_forward.3} parent=0 // pred_fallthru
    _
  // Predicated region
  $region22: #{gru_forward.3} parent=0 // pred_check
    _
  $region23: #{gru_forward.3} parent=0 // pred_check_branch
    %22 = sbr.rel (0) target = $region25
  $region24: #{gru_forward.3} parent=0 // pred_region
    _
  $region25: #{gru_forward.3} parent=0 // pred_fallthru
    _
  %v23 = vld [vmem:[%s0] sm:$0xff]
  %v24 = vld [vmem:[%s0 + $0x8] sm:$0xff]
  %v25 = vld [vmem:[%s1] sm:$0xff]
  %v26 = vld [vmem:[%s1 + $0x8] sm:$0xff]
  %v27 = vld [vmem:[%s1 + $0x10] sm:$0xff]
  %v28 = vld [vmem:[%s1 + $0x18] sm:$0xff]
  %v29 = vld [vmem:[%s1 + $0x20] sm:$0xff]
  %v30 = vld [vmem:[%s1 + $0x28] sm:$0xff]
  %v31 = vld [vmem:[%s1 + $0x30] sm:$0xff]
  %v32 = vld [vmem:[%s1 + $0x38] sm:$0xff]
  %v33 = vld [vmem:[%s1 + $0x40] sm:$0xff]
  %v34 = vld [vmem:[%s1 + $0x48] sm:$0xff]
  %v35 = vld [vmem:[%s1 + $0x50] sm:$0xff]
  %v36 = vld [vmem:[%s1 + $0x58] sm:$0xff]
  %v37 = vld [vmem:[%s1 + $0x60] sm:$0xff]
  %v38 = vld [vmem:[%s1 + $0x68] sm:$0xff]
  %v39 = vld [vmem:[%s1 + $0x70] sm:$0xff]
  %v40 = vld [vmem:[%s1 + $0x78] sm:$0xff]
  %v41 = vld [vmem:[%s4] sm:$0x3]
  %v43 = vlaneseq
  %v44 = vshrl.u32 %v43, 7
  %v45 = vsub.s32 0, %v44
  %v46 = vrot.slane %v41, %v45
  %v47 = vlaneseq
  %v48 = vshrl.u32 %v47, 7
  %v49 = vsub.s32 1, %v48
  %v50 = vrot.slane %v41, %v49
  %vm53 = vcmask 523264
  %v55 = vsel %vm53, %v23, 0
  %v58 = vsel %vm53, %v24, 0
  %60 = vmatprep.subr.mxu0 %v26
  %61 = vmatpush1.msra.mxu0 %v25
  %62 = vmatprep.subr.mxu0 %v28
  %63 = vmatpush1.msra.mxu0 %v27
  %64 = vmatprep.subr.mxu0 %v30
  %65 = vmatpush1.msra.mxu0 %v29
  %66 = vmatprep.subr.mxu0 %v32
  %67 = vmatpush1.msra.mxu0 %v31
  %68 = vmatprep.subr.mxu0 %v34
  %69 = vmatpush1.msra.mxu0 %v33
  %70 = vmatprep.subr.mxu0 %v36
  %71 = vmatpush1.msra.mxu0 %v35
  %72 = vmatprep.subr.mxu0 %v38
  %73 = vmatpush1.msra.mxu0 %v37
  %74 = vmatprep.subr.mxu0 %v40
  %75 = vmatpush1.msra.mxu0 %v39
  %76 = vmatprep.subr.mxu0 0.0
  %77 = vmatpush1.msra.mxu0 0.0
  %78 = vmatprep.subr.mxu0 0.0
  %79 = vmatpush1.msra.mxu0 0.0
  %80 = vmatprep.subr.mxu0 0.0
  %81 = vmatpush1.msra.mxu0 0.0
  %82 = vmatprep.subr.mxu0 0.0
  %83 = vmatpush1.msra.mxu0 0.0
  %84 = vmatprep.subr.mxu0 0.0
  %85 = vmatpush1.msra.mxu0 0.0
  %86 = vmatprep.subr.mxu0 0.0
  %87 = vmatpush1.msra.mxu0 0.0
  %88 = vmatprep.subr.mxu0 0.0
  %89 = vmatpush1.msra.mxu0 0.0
  %90 = vmatprep.subr.mxu0 0.0
  %91 = vmatpush1.msra.mxu0 0.0
  %92 = vmatprep.subr.mxu0 0.0
  %93 = vmatpush1.msra.mxu0 0.0
  %94 = vmatprep.subr.mxu0 0.0
  %95 = vmatpush1.msra.mxu0 0.0
  %96 = vmatprep.subr.mxu0 0.0
  %97 = vmatpush1.msra.mxu0 0.0
  %98 = vmatprep.subr.mxu0 0.0
  %99 = vmatpush1.msra.mxu0 0.0
  %100 = vmatprep.subr.mxu0 0.0
  %101 = vmatpush1.msra.mxu0 0.0
  %102 = vmatprep.subr.mxu0 0.0
  %103 = vmatpush1.msra.mxu0 0.0
  %104 = vmatprep.subr.mxu0 0.0
  %105 = vmatpush1.msra.mxu0 0.0
  %106 = vmatprep.subr.mxu0 0.0
  %107 = vmatpush1.msra.mxu0 0.0
  %108 = vmatprep.subr.mxu0 0.0
  %109 = vmatpush1.msra.mxu0 0.0
  %110 = vmatprep.subr.mxu0 0.0
  %111 = vmatpush1.msra.mxu0 0.0
  %112 = vmatprep.subr.mxu0 0.0
  %113 = vmatpush1.msra.mxu0 0.0
  %114 = vmatprep.subr.mxu0 0.0
  %115 = vmatpush1.msra.mxu0 0.0
  %116 = vmatprep.subr.mxu0 0.0
  %117 = vmatpush1.msra.mxu0 0.0
  %118 = vmatprep.subr.mxu0 0.0
  %119 = vmatpush1.msra.mxu0 0.0
  %120 = vmatprep.subr.mxu0 0.0
  %121 = vmatpush1.msra.mxu0 0.0
  %122 = vmatprep.subr.mxu0 0.0
  %123 = vmatpush1.msra.mxu0 0.0
  %124 = vmatprep.mubr.f32.mxu0 0.0
  %125 = vmatmul.mubr.f32.gmra.mrb[0].mxu0 %v55
  %v126 = vpop.f32.mrb[0].mxu0
  %v127 = vadd.f32 %v46, %v126
  %v128 = vpop.f32.mrb[0].mxu0
  %v129 = vadd.f32 %v50, %v128
  %130 = vmatprep.mubr.f32.mxu0 0.0
  %131 = vmatmul.mubr.f32.gmra.mrb[0].mxu0 %v58
  %v132 = vpop.f32.mrb[0].mxu0
  %v133 = vadd.f32 %v46, %v132
  %v134 = vpop.f32.mrb[0].mxu0
  %v135 = vadd.f32 %v50, %v134
  %136 = vdwg.mxu0
  %vm137 = vcmask 785408
  %138 = vst.msk [vmem:[#allocation2] sm:$0xff] %vm137, %v127
  %139 = vst.msk [vmem:[#allocation2 + $0x8] sm:$0xff] %vm137, %v133
  %144 = vrot.lane.b32.xlu0 %v127, 32
  %v145 = vpop.permute.xlu0 %144
  %146 = vrot.lane.b32.xlu0 %v129, 32
  %v147 = vpop.permute.xlu0 %146
  %148 = vrot.lane.b32.xlu0 %v133, 32
  %v149 = vpop.permute.xlu0 %148
  %150 = vrot.lane.b32.xlu0 %v135, 32
  %v151 = vpop.permute.xlu0 %150
  %vm152 = vcmask 261120
  %v153 = vsel %vm152, %v145, %v147
  %v154 = vsel %vm152, %v149, %v151
  %157 = vst.msk [vmem:[#allocation3] sm:$0xff] %vm137, %v153
  %158 = vst.msk [vmem:[#allocation3 + $0x8] sm:$0xff] %vm137, %v154
  %v159 = vld [vmem:[%s2] sm:$0xff]
  %v160 = vld [vmem:[%s2 + $0x8] sm:$0xff]
  %v161 = vld [vmem:[%s2 + $0x10] sm:$0xff]
  %v162 = vld [vmem:[%s2 + $0x18] sm:$0xff]
  %v163 = vld [vmem:[%s3] sm:$0xff]
  %v164 = vld [vmem:[%s3 + $0x8] sm:$0xff]
  %v165 = vld [vmem:[%s3 + $0x10] sm:$0xff]
  %v166 = vld [vmem:[%s3 + $0x18] sm:$0xff]
  %v167 = vld [vmem:[%s5] sm:$0x1]
  %v169 = vlaneseq
  %v170 = vshrl.u32 %v169, 7
  %v171 = vsub.s32 0, %v170
  %v172 = vrot.slane %v167, %v171
  %v174 = vsel %vm152, 0.0, 0
  %176 = vmatprep.subr.mxu0 0.0
  %177 = vmatpush1.msra.mxu0 %v159
  %178 = vmatprep.subr.mxu0 0.0
  %179 = vmatpush1.msra.mxu0 %v160
  %180 = vmatprep.subr.mxu0 0.0
  %181 = vmatpush1.msra.mxu0 %v161
  %182 = vmatprep.subr.mxu0 0.0
  %183 = vmatpush1.msra.mxu0 %v162
  %184 = vmatprep.subr.mxu0 0.0
  %185 = vmatpush1.msra.mxu0 0.0
  %186 = vmatprep.subr.mxu0 0.0
  %187 = vmatpush1.msra.mxu0 0.0
  %188 = vmatprep.subr.mxu0 0.0
  %189 = vmatpush1.msra.mxu0 0.0
  %190 = vmatprep.subr.mxu0 0.0
  %191 = vmatpush1.msra.mxu0 0.0
  %192 = vmatprep.subr.mxu0 0.0
  %193 = vmatpush1.msra.mxu0 0.0
  %194 = vmatprep.subr.mxu0 0.0
  %195 = vmatpush1.msra.mxu0 0.0
  %196 = vmatprep.subr.mxu0 0.0
  %197 = vmatpush1.msra.mxu0 0.0
  %198 = vmatprep.subr.mxu0 0.0
  %199 = vmatpush1.msra.mxu0 0.0
  %200 = vmatprep.subr.mxu0 0.0
  %201 = vmatpush1.msra.mxu0 0.0
  %202 = vmatprep.subr.mxu0 0.0
  %203 = vmatpush1.msra.mxu0 0.0
  %204 = vmatprep.subr.mxu0 0.0
  %205 = vmatpush1.msra.mxu0 0.0
  %206 = vmatprep.subr.mxu0 0.0
  %207 = vmatpush1.msra.mxu0 0.0
  %208 = vmatprep.subr.mxu0 0.0
  %209 = vmatpush1.msra.mxu0 0.0
  %210 = vmatprep.subr.mxu0 0.0
  %211 = vmatpush1.msra.mxu0 0.0
  %212 = vmatprep.subr.mxu0 0.0
  %213 = vmatpush1.msra.mxu0 0.0
  %214 = vmatprep.subr.mxu0 0.0
  %215 = vmatpush1.msra.mxu0 0.0
  %216 = vmatprep.subr.mxu0 0.0
  %217 = vmatpush1.msra.mxu0 0.0
  %218 = vmatprep.subr.mxu0 0.0
  %219 = vmatpush1.msra.mxu0 0.0
  %220 = vmatprep.subr.mxu0 0.0
  %221 = vmatpush1.msra.mxu0 0.0
  %222 = vmatprep.subr.mxu0 0.0
  %223 = vmatpush1.msra.mxu0 0.0
  %224 = vmatprep.subr.mxu0 0.0
  %225 = vmatpush1.msra.mxu0 0.0
  %226 = vmatprep.subr.mxu0 0.0
  %227 = vmatpush1.msra.mxu0 0.0
  %228 = vmatprep.subr.mxu0 0.0
  %229 = vmatpush1.msra.mxu0 0.0
  %230 = vmatprep.subr.mxu0 0.0
  %231 = vmatpush1.msra.mxu0 0.0
  %232 = vmatprep.subr.mxu0 0.0
  %233 = vmatpush1.msra.mxu0 0.0
  %234 = vmatprep.subr.mxu0 0.0
  %235 = vmatpush1.msra.mxu0 0.0
  %236 = vmatprep.subr.mxu0 0.0
  %237 = vmatpush1.msra.mxu0 0.0
  %238 = vmatprep.subr.mxu0 0.0
  %239 = vmatpush1.msra.mxu0 0.0
  %240 = vmatprep.mubr.f32.mxu0 0.0
  %241 = vmatmul.mubr.f32.gmra.mrb[0].mxu0 %v174
  %v242 = vpop.f32.mrb[0].mxu0
  %v243 = vadd.f32 0.0, %v242
  %v244 = vpop.f32.mrb[0].mxu0
  %245 = vdwg.mxu0
  %246 = vmatprep.subr.mxu0 0.0
  %247 = vmatpush1.msra.mxu0 %v163
  %248 = vmatprep.subr.mxu0 0.0
  %249 = vmatpush1.msra.mxu0 %v164
  %250 = vmatprep.subr.mxu0 0.0
  %251 = vmatpush1.msra.mxu0 %v165
  %252 = vmatprep.subr.mxu0 0.0
  %253 = vmatpush1.msra.mxu0 %v166
  %254 = vmatprep.subr.mxu0 0.0
  %255 = vmatpush1.msra.mxu0 0.0
  %256 = vmatprep.subr.mxu0 0.0
  %257 = vmatpush1.msra.mxu0 0.0
  %258 = vmatprep.subr.mxu0 0.0
  %259 = vmatpush1.msra.mxu0 0.0
  %260 = vmatprep.subr.mxu0 0.0
  %261 = vmatpush1.msra.mxu0 0.0
  %262 = vmatprep.subr.mxu0 0.0
  %263 = vmatpush1.msra.mxu0 0.0
  %264 = vmatprep.subr.mxu0 0.0
  %265 = vmatpush1.msra.mxu0 0.0
  %266 = vmatprep.subr.mxu0 0.0
  %267 = vmatpush1.msra.mxu0 0.0
  %268 = vmatprep.subr.mxu0 0.0
  %269 = vmatpush1.msra.mxu0 0.0
  %270 = vmatprep.subr.mxu0 0.0
  %271 = vmatpush1.msra.mxu0 0.0
  %272 = vmatprep.subr.mxu0 0.0
  %273 = vmatpush1.msra.mxu0 0.0
  %274 = vmatprep.subr.mxu0 0.0
  %275 = vmatpush1.msra.mxu0 0.0
  %276 = vmatprep.subr.mxu0 0.0
  %277 = vmatpush1.msra.mxu0 0.0
  %278 = vmatprep.subr.mxu0 0.0
  %279 = vmatpush1.msra.mxu0 0.0
  %280 = vmatprep.subr.mxu0 0.0
  %281 = vmatpush1.msra.mxu0 0.0
  %282 = vmatprep.subr.mxu0 0.0
  %283 = vmatpush1.msra.mxu0 0.0
  %284 = vmatprep.subr.mxu0 0.0
  %285 = vmatpush1.msra.mxu0 0.0
  %286 = vmatprep.subr.mxu0 0.0
  %287 = vmatpush1.msra.mxu0 0.0
  %288 = vmatprep.subr.mxu0 0.0
  %289 = vmatpush1.msra.mxu0 0.0
  %290 = vmatprep.subr.mxu0 0.0
  %291 = vmatpush1.msra.mxu0 0.0
  %292 = vmatprep.subr.mxu0 0.0
  %293 = vmatpush1.msra.mxu0 0.0
  %294 = vmatprep.subr.mxu0 0.0
  %295 = vmatpush1.msra.mxu0 0.0
  %296 = vmatprep.subr.mxu0 0.0
  %297 = vmatpush1.msra.mxu0 0.0
  %298 = vmatprep.subr.mxu0 0.0
  %299 = vmatpush1.msra.mxu0 0.0
  %300 = vmatprep.subr.mxu0 0.0
  %301 = vmatpush1.msra.mxu0 0.0
  %302 = vmatprep.subr.mxu0 0.0
  %303 = vmatpush1.msra.mxu0 0.0
  %304 = vmatprep.subr.mxu0 0.0
  %305 = vmatpush1.msra.mxu0 0.0
  %306 = vmatprep.subr.mxu0 0.0
  %307 = vmatpush1.msra.mxu0 0.0
  %308 = vmatprep.subr.mxu0 0.0
  %309 = vmatpush1.msra.mxu0 0.0
  %310 = vmatprep.mubr.f32.mxu0 0.0
  %311 = vmatmul.mubr.f32.gmra.mrb[0].mxu0 %v174
  %v312 = vpop.f32.mrb[0].mxu0
  %v313 = vadd.f32 0.0, %v312
  %v314 = vpop.f32.mrb[0].mxu0
  %315 = vdwg.mxu0
  %v316 = vld [vmem:[#allocation2] sm:$0x3]
  %v317 = vadd.f32 %v316, %v243
  %v318 = vmul.f32 %v317, 0.5
  %v319 = vtanh.pop %v318
  %v320 = vadd.f32 %v319, 1.0
  %v321 = vmul.f32 %v320, 0.5
  %322 = vrot.lane.b32.xlu0 %v172, 64
  %v323 = vpop.permute.xlu0 %322
  %v325 = vadd.f32 %v243, %v323
  %327 = vrot.lane.b32.xlu0 %v325, 64
  %v328 = vpop.permute.xlu0 %327
  %v330 = vmul.f32 %v321, %v328
  %332 = vrot.lane.b32.xlu0 %v330, 64
  %v333 = vpop.permute.xlu0 %332
  %v335 = vadd.f32 %v316, %v333
  %v336 = vtanh.pop %v335
  %v337 = vsub.f32 1.0, %v321
  %339 = vrot.lane.b32.xlu0 %v336, 96
  %v340 = vpop.permute.xlu0 %339
  %v342 = vmul.f32 %v337, %v340
  %v343 = vmul.f32 %v321, 0.0
  %v344 = vadd.f32 %v342, %v343
  %s345 = scalar_lea.vmem [#allocation3], 14
  %v346 = vld [vmem:[%s345] sm:$0x3]
  %v347 = vadd.f32 %v346, %v313
  %v348 = vmul.f32 %v347, 0.5
  %v349 = vtanh.pop %v348
  %v350 = vadd.f32 %v349, 1.0
  %v351 = vmul.f32 %v350, 0.5
  %352 = vrot.lane.b32.xlu0 %v172, 32
  %v353 = vpop.permute.xlu0 %352
  %v355 = vadd.f32 %v313, %v353
  %357 = vrot.lane.b32.xlu0 %v355, 64
  %v358 = vpop.permute.xlu0 %357
  %v360 = vmul.f32 %v351, %v358
  %362 = vrot.lane.b32.xlu0 %v360, 64
  %v363 = vpop.permute.xlu0 %362
  %v365 = vadd.f32 %v346, %v363
  %v366 = vtanh.pop %v365
  %v367 = vsub.f32 1.0, %v351
  %369 = vrot.lane.b32.xlu0 %v366, 96
  %v370 = vpop.permute.xlu0 %369
  %v372 = vmul.f32 %v367, %v370
  %v373 = vmul.f32 %v351, 0.0
  %v374 = vadd.f32 %v372, %v373
  %376 = vrot.lane.b32.xlu0 %v344, 96
  %v377 = vpop.permute.xlu0 %376
  %vm379 = vcmask 254976
  %380 = vst.msk [vmem:[%s6] sm:$0x3] %vm379, %v377
  %s381 = scalar_lea.vmem %s6, 14
  %vm382 = vcmask 517376
  %383 = vst.msk [vmem:[%s381] sm:$0x3] %vm382, %v374
  %v384 = vsel %vm152, %v377, 0
  %386 = vmatprep.subr.mxu0 0.0
  %387 = vmatpush1.msra.mxu0 %v159
  %388 = vmatprep.subr.mxu0 0.0
  %389 = vmatpush1.msra.mxu0 %v160
  %390 = vmatprep.subr.mxu0 0.0
  %391 = vmatpush1.msra.mxu0 %v161
  %392 = vmatprep.subr.mxu0 0.0
  %393 = vmatpush1.msra.mxu0 %v162
  %394 = vmatprep.subr.mxu0 0.0
  %395 = vmatpush1.msra.mxu0 0.0
  %396 = vmatprep.subr.mxu0 0.0
  %397 = vmatpush1.msra.mxu0 0.0
  %398 = vmatprep.subr.mxu0 0.0
  %399 = vmatpush1.msra.mxu0 0.0
  %400 = vmatprep.subr.mxu0 0.0
  %401 = vmatpush1.msra.mxu0 0.0
  %402 = vmatprep.subr.mxu0 0.0
  %403 = vmatpush1.msra.mxu0 0.0
  %404 = vmatprep.subr.mxu0 0.0
  %405 = vmatpush1.msra.mxu0 0.0
  %406 = vmatprep.subr.mxu0 0.0
  %407 = vmatpush1.msra.mxu0 0.0
  %408 = vmatprep.subr.mxu0 0.0
  %409 = vmatpush1.msra.mxu0 0.0
  %410 = vmatprep.subr.mxu0 0.0
  %411 = vmatpush1.msra.mxu0 0.0
  %412 = vmatprep.subr.mxu0 0.0
  %413 = vmatpush1.msra.mxu0 0.0
  %414 = vmatprep.subr.mxu0 0.0
  %415 = vmatpush1.msra.mxu0 0.0
  %416 = vmatprep.subr.mxu0 0.0
  %417 = vmatpush1.msra.mxu0 0.0
  %418 = vmatprep.subr.mxu0 0.0
  %419 = vmatpush1.msra.mxu0 0.0
  %420 = vmatprep.subr.mxu0 0.0
  %421 = vmatpush1.msra.mxu0 0.0
  %422 = vmatprep.subr.mxu0 0.0
  %423 = vmatpush1.msra.mxu0 0.0
  %424 = vmatprep.subr.mxu0 0.0
  %425 = vmatpush1.msra.mxu0 0.0
  %426 = vmatprep.subr.mxu0 0.0
  %427 = vmatpush1.msra.mxu0 0.0
  %428 = vmatprep.subr.mxu0 0.0
  %429 = vmatpush1.msra.mxu0 0.0
  %430 = vmatprep.subr.mxu0 0.0
  %431 = vmatpush1.msra.mxu0 0.0
  %432 = vmatprep.subr.mxu0 0.0
  %433 = vmatpush1.msra.mxu0 0.0
  %434 = vmatprep.subr.mxu0 0.0
  %435 = vmatpush1.msra.mxu0 0.0
  %436 = vmatprep.subr.mxu0 0.0
  %437 = vmatpush1.msra.mxu0 0.0
  %438 = vmatprep.subr.mxu0 0.0
  %439 = vmatpush1.msra.mxu0 0.0
  %440 = vmatprep.subr.mxu0 0.0
  %441 = vmatpush1.msra.mxu0 0.0
  %442 = vmatprep.subr.mxu0 0.0
  %443 = vmatpush1.msra.mxu0 0.0
  %444 = vmatprep.subr.mxu0 0.0
  %445 = vmatpush1.msra.mxu0 0.0
  %446 = vmatprep.subr.mxu0 0.0
  %447 = vmatpush1.msra.mxu0 0.0
  %448 = vmatprep.subr.mxu0 0.0
  %449 = vmatpush1.msra.mxu0 0.0
  %450 = vmatprep.mubr.f32.mxu0 0.0
  %451 = vmatmul.mubr.f32.gmra.mrb[0].mxu0 %v384
  %v452 = vpop.f32.mrb[0].mxu0
  %v453 = vadd.f32 0.0, %v452
  %v454 = vpop.f32.mrb[0].mxu0
  %455 = vdwg.mxu0
  %457 = vrot.lane.b32.xlu0 %v374, 96
  %v458 = vpop.permute.xlu0 %457
  %v459 = vsel %vm152, %v458, 0
  %461 = vmatprep.subr.mxu0 0.0
  %462 = vmatpush1.msra.mxu0 %v163
  %463 = vmatprep.subr.mxu0 0.0
  %464 = vmatpush1.msra.mxu0 %v164
  %465 = vmatprep.subr.mxu0 0.0
  %466 = vmatpush1.msra.mxu0 %v165
  %467 = vmatprep.subr.mxu0 0.0
  %468 = vmatpush1.msra.mxu0 %v166
  %469 = vmatprep.subr.mxu0 0.0
  %470 = vmatpush1.msra.mxu0 0.0
  %471 = vmatprep.subr.mxu0 0.0
  %472 = vmatpush1.msra.mxu0 0.0
  %473 = vmatprep.subr.mxu0 0.0
  %474 = vmatpush1.msra.mxu0 0.0
  %475 = vmatprep.subr.mxu0 0.0
  %476 = vmatpush1.msra.mxu0 0.0
  %477 = vmatprep.subr.mxu0 0.0
  %478 = vmatpush1.msra.mxu0 0.0
  %479 = vmatprep.subr.mxu0 0.0
  %480 = vmatpush1.msra.mxu0 0.0
  %481 = vmatprep.subr.mxu0 0.0
  %482 = vmatpush1.msra.mxu0 0.0
  %483 = vmatprep.subr.mxu0 0.0
  %484 = vmatpush1.msra.mxu0 0.0
  %485 = vmatprep.subr.mxu0 0.0
  %486 = vmatpush1.msra.mxu0 0.0
  %487 = vmatprep.subr.mxu0 0.0
  %488 = vmatpush1.msra.mxu0 0.0
  %489 = vmatprep.subr.mxu0 0.0
  %490 = vmatpush1.msra.mxu0 0.0
  %491 = vmatprep.subr.mxu0 0.0
  %492 = vmatpush1.msra.mxu0 0.0
  %493 = vmatprep.subr.mxu0 0.0
  %494 = vmatpush1.msra.mxu0 0.0
  %495 = vmatprep.subr.mxu0 0.0
  %496 = vmatpush1.msra.mxu0 0.0
  %497 = vmatprep.subr.mxu0 0.0
  %498 = vmatpush1.msra.mxu0 0.0
  %499 = vmatprep.subr.mxu0 0.0
  %500 = vmatpush1.msra.mxu0 0.0
  %501 = vmatprep.subr.mxu0 0.0
  %502 = vmatpush1.msra.mxu0 0.0
  %503 = vmatprep.subr.mxu0 0.0
  %504 = vmatpush1.msra.mxu0 0.0
  %505 = vmatprep.subr.mxu0 0.0
  %506 = vmatpush1.msra.mxu0 0.0
  %507 = vmatprep.subr.mxu0 0.0
  %508 = vmatpush1.msra.mxu0 0.0
  %509 = vmatprep.subr.mxu0 0.0
  %510 = vmatpush1.msra.mxu0 0.0
  %511 = vmatprep.subr.mxu0 0.0
  %512 = vmatpush1.msra.mxu0 0.0
  %513 = vmatprep.subr.mxu0 0.0
  %514 = vmatpush1.msra.mxu0 0.0
  %515 = vmatprep.subr.mxu0 0.0
  %516 = vmatpush1.msra.mxu0 0.0
  %517 = vmatprep.subr.mxu0 0.0
  %518 = vmatpush1.msra.mxu0 0.0
  %519 = vmatprep.subr.mxu0 0.0
  %520 = vmatpush1.msra.mxu0 0.0
  %521 = vmatprep.subr.mxu0 0.0
  %522 = vmatpush1.msra.mxu0 0.0
  %523 = vmatprep.subr.mxu0 0.0
  %524 = vmatpush1.msra.mxu0 0.0
  %525 = vmatprep.mubr.f32.mxu0 0.0
  %526 = vmatmul.mubr.f32.gmra.mrb[0].mxu0 %v459
  %v527 = vpop.f32.mrb[0].mxu0
  %v528 = vadd.f32 0.0, %v527
  %v529 = vpop.f32.mrb[0].mxu0
  %530 = vdwg.mxu0
  %s531 = scalar_lea.vmem [#allocation2], 2
  %v532 = vld [vmem:[%s531] sm:$0x3]
  %v533 = vadd.f32 %v532, %v453
  %v534 = vmul.f32 %v533, 0.5
  %v535 = vtanh.pop %v534
  %v536 = vadd.f32 %v535, 1.0
  %v537 = vmul.f32 %v536, 0.5
  %v538 = vadd.f32 %v453, %v323
  %540 = vrot.lane.b32.xlu0 %v538, 64
  %v541 = vpop.permute.xlu0 %540
  %v543 = vmul.f32 %v537, %v541
  %545 = vrot.lane.b32.xlu0 %v543, 64
  %v546 = vpop.permute.xlu0 %545
  %v548 = vadd.f32 %v532, %v546
  %v549 = vtanh.pop %v548
  %v550 = vsub.f32 1.0, %v537
  %552 = vrot.lane.b32.xlu0 %v549, 96
  %v553 = vpop.permute.xlu0 %552
  %v555 = vmul.f32 %v550, %v553
  %v556 = vmul.f32 %v537, %v344
  %v557 = vadd.f32 %v555, %v556
  %s558 = scalar_lea.vmem [#allocation3], 12
  %v559 = vld [vmem:[%s558] sm:$0x3]
  %v560 = vadd.f32 %v559, %v528
  %v561 = vmul.f32 %v560, 0.5
  %v562 = vtanh.pop %v561
  %v563 = vadd.f32 %v562, 1.0
  %v564 = vmul.f32 %v563, 0.5
  %v565 = vadd.f32 %v528, %v353
  %567 = vrot.lane.b32.xlu0 %v565, 64
  %v568 = vpop.permute.xlu0 %567
  %v570 = vmul.f32 %v564, %v568
  %572 = vrot.lane.b32.xlu0 %v570, 64
  %v573 = vpop.permute.xlu0 %572
  %v575 = vadd.f32 %v559, %v573
  %v576 = vtanh.pop %v575
  %v577 = vsub.f32 1.0, %v564
  %579 = vrot.lane.b32.xlu0 %v576, 96
  %v580 = vpop.permute.xlu0 %579
  %v582 = vmul.f32 %v577, %v580
  %v583 = vmul.f32 %v564, %v374
  %v584 = vadd.f32 %v582, %v583
  %586 = vrot.lane.b32.xlu0 %v557, 96
  %v587 = vpop.permute.xlu0 %586
  %s589 = scalar_lea.vmem %s6, 2
  %590 = vst.msk [vmem:[%s589] sm:$0x3] %vm379, %v587
  %s591 = scalar_lea.vmem %s6, 12
  %592 = vst.msk [vmem:[%s591] sm:$0x3] %vm382, %v584
  %v593 = vsel %vm152, %v587, 0
  %595 = vmatprep.subr.mxu0 0.0
  %596 = vmatpush1.msra.mxu0 %v159
  %597 = vmatprep.subr.mxu0 0.0
  %598 = vmatpush1.msra.mxu0 %v160
  %599 = vmatprep.subr.mxu0 0.0
  %600 = vmatpush1.msra.mxu0 %v161
  %601 = vmatprep.subr.mxu0 0.0
  %602 = vmatpush1.msra.mxu0 %v162
  %603 = vmatprep.subr.mxu0 0.0
  %604 = vmatpush1.msra.mxu0 0.0
  %605 = vmatprep.subr.mxu0 0.0
  %606 = vmatpush1.msra.mxu0 0.0
  %607 = vmatprep.subr.mxu0 0.0
  %608 = vmatpush1.msra.mxu0 0.0
  %609 = vmatprep.subr.mxu0 0.0
  %610 = vmatpush1.msra.mxu0 0.0
  %611 = vmatprep.subr.mxu0 0.0
  %612 = vmatpush1.msra.mxu0 0.0
  %613 = vmatprep.subr.mxu0 0.0
  %614 = vmatpush1.msra.mxu0 0.0
  %615 = vmatprep.subr.mxu0 0.0
  %616 = vmatpush1.msra.mxu0 0.0
  %617 = vmatprep.subr.mxu0 0.0
  %618 = vmatpush1.msra.mxu0 0.0
  %619 = vmatprep.subr.mxu0 0.0
  %620 = vmatpush1.msra.mxu0 0.0
  %621 = vmatprep.subr.mxu0 0.0
  %622 = vmatpush1.msra.mxu0 0.0
  %623 = vmatprep.subr.mxu0 0.0
  %624 = vmatpush1.msra.mxu0 0.0
  %625 = vmatprep.subr.mxu0 0.0
  %626 = vmatpush1.msra.mxu0 0.0
  %627 = vmatprep.subr.mxu0 0.0
  %628 = vmatpush1.msra.mxu0 0.0
  %629 = vmatprep.subr.mxu0 0.0
  %630 = vmatpush1.msra.mxu0 0.0
  %631 = vmatprep.subr.mxu0 0.0
  %632 = vmatpush1.msra.mxu0 0.0
  %633 = vmatprep.subr.mxu0 0.0
  %634 = vmatpush1.msra.mxu0 0.0
  %635 = vmatprep.subr.mxu0 0.0
  %636 = vmatpush1.msra.mxu0 0.0
  %637 = vmatprep.subr.mxu0 0.0
  %638 = vmatpush1.msra.mxu0 0.0
  %639 = vmatprep.subr.mxu0 0.0
  %640 = vmatpush1.msra.mxu0 0.0
  %641 = vmatprep.subr.mxu0 0.0
  %642 = vmatpush1.msra.mxu0 0.0
  %643 = vmatprep.subr.mxu0 0.0
  %644 = vmatpush1.msra.mxu0 0.0
  %645 = vmatprep.subr.mxu0 0.0
  %646 = vmatpush1.msra.mxu0 0.0
  %647 = vmatprep.subr.mxu0 0.0
  %648 = vmatpush1.msra.mxu0 0.0
  %649 = vmatprep.subr.mxu0 0.0
  %650 = vmatpush1.msra.mxu0 0.0
  %651 = vmatprep.subr.mxu0 0.0
  %652 = vmatpush1.msra.mxu0 0.0
  %653 = vmatprep.subr.mxu0 0.0
  %654 = vmatpush1.msra.mxu0 0.0
  %655 = vmatprep.subr.mxu0 0.0
  %656 = vmatpush1.msra.mxu0 0.0
  %657 = vmatprep.subr.mxu0 0.0
  %658 = vmatpush1.msra.mxu0 0.0
  %659 = vmatprep.mubr.f32.mxu0 0.0
  %660 = vmatmul.mubr.f32.gmra.mrb[0].mxu0 %v593
  %v661 = vpop.f32.mrb[0].mxu0
  %v662 = vadd.f32 0.0, %v661
  %v663 = vpop.f32.mrb[0].mxu0
  %664 = vdwg.mxu0
  %666 = vrot.lane.b32.xlu0 %v584, 96
  %v667 = vpop.permute.xlu0 %666
  %v668 = vsel %vm152, %v667, 0
  %670 = vmatprep.subr.mxu0 0.0
  %671 = vmatpush1.msra.mxu0 %v163
  %672 = vmatprep.subr.mxu0 0.0
  %673 = vmatpush1.msra.mxu0 %v164
  %674 = vmatprep.subr.mxu0 0.0
  %675 = vmatpush1.msra.mxu0 %v165
  %676 = vmatprep.subr.mxu0 0.0
  %677 = vmatpush1.msra.mxu0 %v166
  %678 = vmatprep.subr.mxu0 0.0
  %679 = vmatpush1.msra.mxu0 0.0
  %680 = vmatprep.subr.mxu0 0.0
  %681 = vmatpush1.msra.mxu0 0.0
  %682 = vmatprep.subr.mxu0 0.0
  %683 = vmatpush1.msra.mxu0 0.0
  %684 = vmatprep.subr.mxu0 0.0
  %685 = vmatpush1.msra.mxu0 0.0
  %686 = vmatprep.subr.mxu0 0.0
  %687 = vmatpush1.msra.mxu0 0.0
  %688 = vmatprep.subr.mxu0 0.0
  %689 = vmatpush1.msra.mxu0 0.0
  %690 = vmatprep.subr.mxu0 0.0
  %691 = vmatpush1.msra.mxu0 0.0
  %692 = vmatprep.subr.mxu0 0.0
  %693 = vmatpush1.msra.mxu0 0.0
  %694 = vmatprep.subr.mxu0 0.0
  %695 = vmatpush1.msra.mxu0 0.0
  %696 = vmatprep.subr.mxu0 0.0
  %697 = vmatpush1.msra.mxu0 0.0
  %698 = vmatprep.subr.mxu0 0.0
  %699 = vmatpush1.msra.mxu0 0.0
  %700 = vmatprep.subr.mxu0 0.0
  %701 = vmatpush1.msra.mxu0 0.0
  %702 = vmatprep.subr.mxu0 0.0
  %703 = vmatpush1.msra.mxu0 0.0
  %704 = vmatprep.subr.mxu0 0.0
  %705 = vmatpush1.msra.mxu0 0.0
  %706 = vmatprep.subr.mxu0 0.0
  %707 = vmatpush1.msra.mxu0 0.0
  %708 = vmatprep.subr.mxu0 0.0
  %709 = vmatpush1.msra.mxu0 0.0
  %710 = vmatprep.subr.mxu0 0.0
  %711 = vmatpush1.msra.mxu0 0.0
  %712 = vmatprep.subr.mxu0 0.0
  %713 = vmatpush1.msra.mxu0 0.0
  %714 = vmatprep.subr.mxu0 0.0
  %715 = vmatpush1.msra.mxu0 0.0
  %716 = vmatprep.subr.mxu0 0.0
  %717 = vmatpush1.msra.mxu0 0.0
  %718 = vmatprep.subr.mxu0 0.0
  %719 = vmatpush1.msra.mxu0 0.0
  %720 = vmatprep.subr.mxu0 0.0
  %721 = vmatpush1.msra.mxu0 0.0
  %722 = vmatprep.subr.mxu0 0.0
  %723 = vmatpush1.msra.mxu0 0.0
  %724 = vmatprep.subr.mxu0 0.0
  %725 = vmatpush1.msra.mxu0 0.0
  %726 = vmatprep.subr.mxu0 0.0
  %727 = vmatpush1.msra.mxu0 0.0
  %728 = vmatprep.subr.mxu0 0.0
  %729 = vmatpush1.msra.mxu0 0.0
  %730 = vmatprep.subr.mxu0 0.0
  %731 = vmatpush1.msra.mxu0 0.0
  %732 = vmatprep.subr.mxu0 0.0
  %733 = vmatpush1.msra.mxu0 0.0
  %734 = vmatprep.mubr.f32.mxu0 0.0
  %735 = vmatmul.mubr.f32.gmra.mrb[0].mxu0 %v668
  %v736 = vpop.f32.mrb[0].mxu0
  %v737 = vadd.f32 0.0, %v736
  %v738 = vpop.f32.mrb[0].mxu0
  %739 = vdwg.mxu0
  %s740 = scalar_lea.vmem [#allocation2], 4
  %v741 = vld [vmem:[%s740] sm:$0x3]
  %v742 = vadd.f32 %v741, %v662
  %v743 = vmul.f32 %v742, 0.5
  %v744 = vtanh.pop %v743
  %v745 = vadd.f32 %v744, 1.0
  %v746 = vmul.f32 %v745, 0.5
  %v747 = vadd.f32 %v662, %v323
  %749 = vrot.lane.b32.xlu0 %v747, 64
  %v750 = vpop.permute.xlu0 %749
  %v752 = vmul.f32 %v746, %v750
  %754 = vrot.lane.b32.xlu0 %v752, 64
  %v755 = vpop.permute.xlu0 %754
  %v757 = vadd.f32 %v741, %v755
  %v758 = vtanh.pop %v757
  %v759 = vsub.f32 1.0, %v746
  %761 = vrot.lane.b32.xlu0 %v758, 96
  %v762 = vpop.permute.xlu0 %761
  %v764 = vmul.f32 %v759, %v762
  %v765 = vmul.f32 %v746, %v557
  %v766 = vadd.f32 %v764, %v765
  %s767 = scalar_lea.vmem [#allocation3], 10
  %v768 = vld [vmem:[%s767] sm:$0x3]
  %v769 = vadd.f32 %v768, %v737
  %v770 = vmul.f32 %v769, 0.5
  %v771 = vtanh.pop %v770
  %v772 = vadd.f32 %v771, 1.0
  %v773 = vmul.f32 %v772, 0.5
  %v774 = vadd.f32 %v737, %v353
  %776 = vrot.lane.b32.xlu0 %v774, 64
  %v777 = vpop.permute.xlu0 %776
  %v779 = vmul.f32 %v773, %v777
  %781 = vrot.lane.b32.xlu0 %v779, 64
  %v782 = vpop.permute.xlu0 %781
  %v784 = vadd.f32 %v768, %v782
  %v785 = vtanh.pop %v784
  %v786 = vsub.f32 1.0, %v773
  %788 = vrot.lane.b32.xlu0 %v785, 96
  %v789 = vpop.permute.xlu0 %788
  %v791 = vmul.f32 %v786, %v789
  %v792 = vmul.f32 %v773, %v584
  %v793 = vadd.f32 %v791, %v792
  %795 = vrot.lane.b32.xlu0 %v766, 96
  %v796 = vpop.permute.xlu0 %795
  %s798 = scalar_lea.vmem %s6, 4
  %799 = vst.msk [vmem:[%s798] sm:$0x3] %vm379, %v796
  %s800 = scalar_lea.vmem %s6, 10
  %801 = vst.msk [vmem:[%s800] sm:$0x3] %vm382, %v793
  %v802 = vsel %vm152, %v796, 0
  %804 = vmatprep.subr.mxu0 0.0
  %805 = vmatpush1.msra.mxu0 %v159
  %806 = vmatprep.subr.mxu0 0.0
  %807 = vmatpush1.msra.mxu0 %v160
  %808 = vmatprep.subr.mxu0 0.0
  %809 = vmatpush1.msra.mxu0 %v161
  %810 = vmatprep.subr.mxu0 0.0
  %811 = vmatpush1.msra.mxu0 %v162
  %812 = vmatprep.subr.mxu0 0.0
  %813 = vmatpush1.msra.mxu0 0.0
  %814 = vmatprep.subr.mxu0 0.0
  %815 = vmatpush1.msra.mxu0 0.0
  %816 = vmatprep.subr.mxu0 0.0
  %817 = vmatpush1.msra.mxu0 0.0
  %818 = vmatprep.subr.mxu0 0.0
  %819 = vmatpush1.msra.mxu0 0.0
  %820 = vmatprep.subr.mxu0 0.0
  %821 = vmatpush1.msra.mxu0 0.0
  %822 = vmatprep.subr.mxu0 0.0
  %823 = vmatpush1.msra.mxu0 0.0
  %824 = vmatprep.subr.mxu0 0.0
  %825 = vmatpush1.msra.mxu0 0.0
  %826 = vmatprep.subr.mxu0 0.0
  %827 = vmatpush1.msra.mxu0 0.0
  %828 = vmatprep.subr.mxu0 0.0
  %829 = vmatpush1.msra.mxu0 0.0
  %830 = vmatprep.subr.mxu0 0.0
  %831 = vmatpush1.msra.mxu0 0.0
  %832 = vmatprep.subr.mxu0 0.0
  %833 = vmatpush1.msra.mxu0 0.0
  %834 = vmatprep.subr.mxu0 0.0
  %835 = vmatpush1.msra.mxu0 0.0
  %836 = vmatprep.subr.mxu0 0.0
  %837 = vmatpush1.msra.mxu0 0.0
  %838 = vmatprep.subr.mxu0 0.0
  %839 = vmatpush1.msra.mxu0 0.0
  %840 = vmatprep.subr.mxu0 0.0
  %841 = vmatpush1.msra.mxu0 0.0
  %842 = vmatprep.subr.mxu0 0.0
  %843 = vmatpush1.msra.mxu0 0.0
  %844 = vmatprep.subr.mxu0 0.0
  %845 = vmatpush1.msra.mxu0 0.0
  %846 = vmatprep.subr.mxu0 0.0
  %847 = vmatpush1.msra.mxu0 0.0
  %848 = vmatprep.subr.mxu0 0.0
  %849 = vmatpush1.msra.mxu0 0.0
  %850 = vmatprep.subr.mxu0 0.0
  %851 = vmatpush1.msra.mxu0 0.0
  %852 = vmatprep.subr.mxu0 0.0
  %853 = vmatpush1.msra.mxu0 0.0
  %854 = vmatprep.subr.mxu0 0.0
  %855 = vmatpush1.msra.mxu0 0.0
  %856 = vmatprep.subr.mxu0 0.0
  %857 = vmatpush1.msra.mxu0 0.0
  %858 = vmatprep.subr.mxu0 0.0
  %859 = vmatpush1.msra.mxu0 0.0
  %860 = vmatprep.subr.mxu0 0.0
  %861 = vmatpush1.msra.mxu0 0.0
  %862 = vmatprep.subr.mxu0 0.0
  %863 = vmatpush1.msra.mxu0 0.0
  %864 = vmatprep.subr.mxu0 0.0
  %865 = vmatpush1.msra.mxu0 0.0
  %866 = vmatprep.subr.mxu0 0.0
  %867 = vmatpush1.msra.mxu0 0.0
  %868 = vmatprep.mubr.f32.mxu0 0.0
  %869 = vmatmul.mubr.f32.gmra.mrb[0].mxu0 %v802
  %v870 = vpop.f32.mrb[0].mxu0
  %v871 = vadd.f32 0.0, %v870
  %v872 = vpop.f32.mrb[0].mxu0
  %873 = vdwg.mxu0
  %875 = vrot.lane.b32.xlu0 %v793, 96
  %v876 = vpop.permute.xlu0 %875
  %v877 = vsel %vm152, %v876, 0
  %879 = vmatprep.subr.mxu0 0.0
  %880 = vmatpush1.msra.mxu0 %v163
  %881 = vmatprep.subr.mxu0 0.0
  %882 = vmatpush1.msra.mxu0 %v164
  %883 = vmatprep.subr.mxu0 0.0
  %884 = vmatpush1.msra.mxu0 %v165
  %885 = vmatprep.subr.mxu0 0.0
  %886 = vmatpush1.msra.mxu0 %v166
  %887 = vmatprep.subr.mxu0 0.0
  %888 = vmatpush1.msra.mxu0 0.0
  %889 = vmatprep.subr.mxu0 0.0
  %890 = vmatpush1.msra.mxu0 0.0
  %891 = vmatprep.subr.mxu0 0.0
  %892 = vmatpush1.msra.mxu0 0.0
  %893 = vmatprep.subr.mxu0 0.0
  %894 = vmatpush1.msra.mxu0 0.0
  %895 = vmatprep.subr.mxu0 0.0
  %896 = vmatpush1.msra.mxu0 0.0
  %897 = vmatprep.subr.mxu0 0.0
  %898 = vmatpush1.msra.mxu0 0.0
  %899 = vmatprep.subr.mxu0 0.0
  %900 = vmatpush1.msra.mxu0 0.0
  %901 = vmatprep.subr.mxu0 0.0
  %902 = vmatpush1.msra.mxu0 0.0
  %903 = vmatprep.subr.mxu0 0.0
  %904 = vmatpush1.msra.mxu0 0.0
  %905 = vmatprep.subr.mxu0 0.0
  %906 = vmatpush1.msra.mxu0 0.0
  %907 = vmatprep.subr.mxu0 0.0
  %908 = vmatpush1.msra.mxu0 0.0
  %909 = vmatprep.subr.mxu0 0.0
  %910 = vmatpush1.msra.mxu0 0.0
  %911 = vmatprep.subr.mxu0 0.0
  %912 = vmatpush1.msra.mxu0 0.0
  %913 = vmatprep.subr.mxu0 0.0
  %914 = vmatpush1.msra.mxu0 0.0
  %915 = vmatprep.subr.mxu0 0.0
  %916 = vmatpush1.msra.mxu0 0.0
  %917 = vmatprep.subr.mxu0 0.0
  %918 = vmatpush1.msra.mxu0 0.0
  %919 = vmatprep.subr.mxu0 0.0
  %920 = vmatpush1.msra.mxu0 0.0
  %921 = vmatprep.subr.mxu0 0.0
  %922 = vmatpush1.msra.mxu0 0.0
  %923 = vmatprep.subr.mxu0 0.0
  %924 = vmatpush1.msra.mxu0 0.0
  %925 = vmatprep.subr.mxu0 0.0
  %926 = vmatpush1.msra.mxu0 0.0
  %927 = vmatprep.subr.mxu0 0.0
  %928 = vmatpush1.msra.mxu0 0.0
  %929 = vmatprep.subr.mxu0 0.0
  %930 = vmatpush1.msra.mxu0 0.0
  %931 = vmatprep.subr.mxu0 0.0
  %932 = vmatpush1.msra.mxu0 0.0
  %933 = vmatprep.subr.mxu0 0.0
  %934 = vmatpush1.msra.mxu0 0.0
  %935 = vmatprep.subr.mxu0 0.0
  %936 = vmatpush1.msra.mxu0 0.0
  %937 = vmatprep.subr.mxu0 0.0
  %938 = vmatpush1.msra.mxu0 0.0
  %939 = vmatprep.subr.mxu0 0.0
  %940 = vmatpush1.msra.mxu0 0.0
  %941 = vmatprep.subr.mxu0 0.0
  %942 = vmatpush1.msra.mxu0 0.0
  %943 = vmatprep.mubr.f32.mxu0 0.0
  %944 = vmatmul.mubr.f32.gmra.mrb[0].mxu0 %v877
  %v945 = vpop.f32.mrb[0].mxu0
  %v946 = vadd.f32 0.0, %v945
  %v947 = vpop.f32.mrb[0].mxu0
  %948 = vdwg.mxu0
  %s949 = scalar_lea.vmem [#allocation2], 6
  %v950 = vld [vmem:[%s949] sm:$0x3]
  %v951 = vadd.f32 %v950, %v871
  %v952 = vmul.f32 %v951, 0.5
  %v953 = vtanh.pop %v952
  %v954 = vadd.f32 %v953, 1.0
  %v955 = vmul.f32 %v954, 0.5
  %v956 = vadd.f32 %v871, %v323
  %958 = vrot.lane.b32.xlu0 %v956, 64
  %v959 = vpop.permute.xlu0 %958
  %v961 = vmul.f32 %v955, %v959
  %963 = vrot.lane.b32.xlu0 %v961, 64
  %v964 = vpop.permute.xlu0 %963
  %v966 = vadd.f32 %v950, %v964
  %v967 = vtanh.pop %v966
  %v968 = vsub.f32 1.0, %v955
  %970 = vrot.lane.b32.xlu0 %v967, 96
  %v971 = vpop.permute.xlu0 %970
  %v973 = vmul.f32 %v968, %v971
  %v974 = vmul.f32 %v955, %v766
  %v975 = vadd.f32 %v973, %v974
  %s976 = scalar_lea.vmem [#allocation3], 8
  %v977 = vld [vmem:[%s976] sm:$0x3]
  %v978 = vadd.f32 %v977, %v946
  %v979 = vmul.f32 %v978, 0.5
  %v980 = vtanh.pop %v979
  %v981 = vadd.f32 %v980, 1.0
  %v982 = vmul.f32 %v981, 0.5
  %v983 = vadd.f32 %v946, %v353
  %985 = vrot.lane.b32.xlu0 %v983, 64
  %v986 = vpop.permute.xlu0 %985
  %v988 = vmul.f32 %v982, %v986
  %990 = vrot.lane.b32.xlu0 %v988, 64
  %v991 = vpop.permute.xlu0 %990
  %v993 = vadd.f32 %v977, %v991
  %v994 = vtanh.pop %v993
  %v995 = vsub.f32 1.0, %v982
  %997 = vrot.lane.b32.xlu0 %v994, 96
  %v998 = vpop.permute.xlu0 %997
  %v1000 = vmul.f32 %v995, %v998
  %v1001 = vmul.f32 %v982, %v793
  %v1002 = vadd.f32 %v1000, %v1001
  %1004 = vrot.lane.b32.xlu0 %v975, 96
  %v1005 = vpop.permute.xlu0 %1004
  %s1007 = scalar_lea.vmem %s6, 6
  %1008 = vst.msk [vmem:[%s1007] sm:$0x3] %vm379, %v1005
  %s1009 = scalar_lea.vmem %s6, 8
  %1010 = vst.msk [vmem:[%s1009] sm:$0x3] %vm382, %v1002
  %v1011 = vsel %vm152, %v1005, 0
  %1013 = vmatprep.subr.mxu0 0.0
  %1014 = vmatpush1.msra.mxu0 %v159
  %1015 = vmatprep.subr.mxu0 0.0
  %1016 = vmatpush1.msra.mxu0 %v160
  %1017 = vmatprep.subr.mxu0 0.0
  %1018 = vmatpush1.msra.mxu0 %v161
  %1019 = vmatprep.subr.mxu0 0.0
  %1020 = vmatpush1.msra.mxu0 %v162
  %1021 = vmatprep.subr.mxu0 0.0
  %1022 = vmatpush1.msra.mxu0 0.0
  %1023 = vmatprep.subr.mxu0 0.0
  %1024 = vmatpush1.msra.mxu0 0.0
  %1025 = vmatprep.subr.mxu0 0.0
  %1026 = vmatpush1.msra.mxu0 0.0
  %1027 = vmatprep.subr.mxu0 0.0
  %1028 = vmatpush1.msra.mxu0 0.0
  %1029 = vmatprep.subr.mxu0 0.0
  %1030 = vmatpush1.msra.mxu0 0.0
  %1031 = vmatprep.subr.mxu0 0.0
  %1032 = vmatpush1.msra.mxu0 0.0
  %1033 = vmatprep.subr.mxu0 0.0
  %1034 = vmatpush1.msra.mxu0 0.0
  %1035 = vmatprep.subr.mxu0 0.0
  %1036 = vmatpush1.msra.mxu0 0.0
  %1037 = vmatprep.subr.mxu0 0.0
  %1038 = vmatpush1.msra.mxu0 0.0
  %1039 = vmatprep.subr.mxu0 0.0
  %1040 = vmatpush1.msra.mxu0 0.0
  %1041 = vmatprep.subr.mxu0 0.0
  %1042 = vmatpush1.msra.mxu0 0.0
  %1043 = vmatprep.subr.mxu0 0.0
  %1044 = vmatpush1.msra.mxu0 0.0
  %1045 = vmatprep.subr.mxu0 0.0
  %1046 = vmatpush1.msra.mxu0 0.0
  %1047 = vmatprep.subr.mxu0 0.0
  %1048 = vmatpush1.msra.mxu0 0.0
  %1049 = vmatprep.subr.mxu0 0.0
  %1050 = vmatpush1.msra.mxu0 0.0
  %1051 = vmatprep.subr.mxu0 0.0
  %1052 = vmatpush1.msra.mxu0 0.0
  %1053 = vmatprep.subr.mxu0 0.0
  %1054 = vmatpush1.msra.mxu0 0.0
  %1055 = vmatprep.subr.mxu0 0.0
  %1056 = vmatpush1.msra.mxu0 0.0
  %1057 = vmatprep.subr.mxu0 0.0
  %1058 = vmatpush1.msra.mxu0 0.0
  %1059 = vmatprep.subr.mxu0 0.0
  %1060 = vmatpush1.msra.mxu0 0.0
  %1061 = vmatprep.subr.mxu0 0.0
  %1062 = vmatpush1.msra.mxu0 0.0
  %1063 = vmatprep.subr.mxu0 0.0
  %1064 = vmatpush1.msra.mxu0 0.0
  %1065 = vmatprep.subr.mxu0 0.0
  %1066 = vmatpush1.msra.mxu0 0.0
  %1067 = vmatprep.subr.mxu0 0.0
  %1068 = vmatpush1.msra.mxu0 0.0
  %1069 = vmatprep.subr.mxu0 0.0
  %1070 = vmatpush1.msra.mxu0 0.0
  %1071 = vmatprep.subr.mxu0 0.0
  %1072 = vmatpush1.msra.mxu0 0.0
  %1073 = vmatprep.subr.mxu0 0.0
  %1074 = vmatpush1.msra.mxu0 0.0
  %1075 = vmatprep.subr.mxu0 0.0
  %1076 = vmatpush1.msra.mxu0 0.0
  %1077 = vmatprep.mubr.f32.mxu0 0.0
  %1078 = vmatmul.mubr.f32.gmra.mrb[0].mxu0 %v1011
  %v1079 = vpop.f32.mrb[0].mxu0
  %v1080 = vadd.f32 0.0, %v1079
  %v1081 = vpop.f32.mrb[0].mxu0
  %1082 = vdwg.mxu0
  %1084 = vrot.lane.b32.xlu0 %v1002, 96
  %v1085 = vpop.permute.xlu0 %1084
  %v1086 = vsel %vm152, %v1085, 0
  %1088 = vmatprep.subr.mxu0 0.0
  %1089 = vmatpush1.msra.mxu0 %v163
  %1090 = vmatprep.subr.mxu0 0.0
  %1091 = vmatpush1.msra.mxu0 %v164
  %1092 = vmatprep.subr.mxu0 0.0
  %1093 = vmatpush1.msra.mxu0 %v165
  %1094 = vmatprep.subr.mxu0 0.0
  %1095 = vmatpush1.msra.mxu0 %v166
  %1096 = vmatprep.subr.mxu0 0.0
  %1097 = vmatpush1.msra.mxu0 0.0
  %1098 = vmatprep.subr.mxu0 0.0
  %1099 = vmatpush1.msra.mxu0 0.0
  %1100 = vmatprep.subr.mxu0 0.0
  %1101 = vmatpush1.msra.mxu0 0.0
  %1102 = vmatprep.subr.mxu0 0.0
  %1103 = vmatpush1.msra.mxu0 0.0
  %1104 = vmatprep.subr.mxu0 0.0
  %1105 = vmatpush1.msra.mxu0 0.0
  %1106 = vmatprep.subr.mxu0 0.0
  %1107 = vmatpush1.msra.mxu0 0.0
  %1108 = vmatprep.subr.mxu0 0.0
  %1109 = vmatpush1.msra.mxu0 0.0
  %1110 = vmatprep.subr.mxu0 0.0
  %1111 = vmatpush1.msra.mxu0 0.0
  %1112 = vmatprep.subr.mxu0 0.0
  %1113 = vmatpush1.msra.mxu0 0.0
  %1114 = vmatprep.subr.mxu0 0.0
  %1115 = vmatpush1.msra.mxu0 0.0
  %1116 = vmatprep.subr.mxu0 0.0
  %1117 = vmatpush1.msra.mxu0 0.0
  %1118 = vmatprep.subr.mxu0 0.0
  %1119 = vmatpush1.msra.mxu0 0.0
  %1120 = vmatprep.subr.mxu0 0.0
  %1121 = vmatpush1.msra.mxu0 0.0
  %1122 = vmatprep.subr.mxu0 0.0
  %1123 = vmatpush1.msra.mxu0 0.0
  %1124 = vmatprep.subr.mxu0 0.0
  %1125 = vmatpush1.msra.mxu0 0.0
  %1126 = vmatprep.subr.mxu0 0.0
  %1127 = vmatpush1.msra.mxu0 0.0
  %1128 = vmatprep.subr.mxu0 0.0
  %1129 = vmatpush1.msra.mxu0 0.0
  %1130 = vmatprep.subr.mxu0 0.0
  %1131 = vmatpush1.msra.mxu0 0.0
  %1132 = vmatprep.subr.mxu0 0.0
  %1133 = vmatpush1.msra.mxu0 0.0
  %1134 = vmatprep.subr.mxu0 0.0
  %1135 = vmatpush1.msra.mxu0 0.0
  %1136 = vmatprep.subr.mxu0 0.0
  %1137 = vmatpush1.msra.mxu0 0.0
  %1138 = vmatprep.subr.mxu0 0.0
  %1139 = vmatpush1.msra.mxu0 0.0
  %1140 = vmatprep.subr.mxu0 0.0
  %1141 = vmatpush1.msra.mxu0 0.0
  %1142 = vmatprep.subr.mxu0 0.0
  %1143 = vmatpush1.msra.mxu0 0.0
  %1144 = vmatprep.subr.mxu0 0.0
  %1145 = vmatpush1.msra.mxu0 0.0
  %1146 = vmatprep.subr.mxu0 0.0
  %1147 = vmatpush1.msra.mxu0 0.0
  %1148 = vmatprep.subr.mxu0 0.0
  %1149 = vmatpush1.msra.mxu0 0.0
  %1150 = vmatprep.subr.mxu0 0.0
  %1151 = vmatpush1.msra.mxu0 0.0
  %1152 = vmatprep.mubr.f32.mxu0 0.0
  %1153 = vmatmul.mubr.f32.gmra.mrb[0].mxu0 %v1086
  %v1154 = vpop.f32.mrb[0].mxu0
  %v1155 = vadd.f32 0.0, %v1154
  %v1156 = vpop.f32.mrb[0].mxu0
  %1157 = vdwg.mxu0
  %s1158 = scalar_lea.vmem [#allocation2], 8
  %v1159 = vld [vmem:[%s1158] sm:$0x3]
  %v1160 = vadd.f32 %v1159, %v1080
  %v1161 = vmul.f32 %v1160, 0.5
  %v1162 = vtanh.pop %v1161
  %v1163 = vadd.f32 %v1162, 1.0
  %v1164 = vmul.f32 %v1163, 0.5
  %v1165 = vadd.f32 %v1080, %v323
  %1167 = vrot.lane.b32.xlu0 %v1165, 64
  %v1168 = vpop.permute.xlu0 %1167
  %v1170 = vmul.f32 %v1164, %v1168
  %1172 = vrot.lane.b32.xlu0 %v1170, 64
  %v1173 = vpop.permute.xlu0 %1172
  %v1175 = vadd.f32 %v1159, %v1173
  %v1176 = vtanh.pop %v1175
  %v1177 = vsub.f32 1.0, %v1164
  %1179 = vrot.lane.b32.xlu0 %v1176, 96
  %v1180 = vpop.permute.xlu0 %1179
  %v1182 = vmul.f32 %v1177, %v1180
  %v1183 = vmul.f32 %v1164, %v975
  %v1184 = vadd.f32 %v1182, %v1183
  %s1185 = scalar_lea.vmem [#allocation3], 6
  %v1186 = vld [vmem:[%s1185] sm:$0x3]
  %v1187 = vadd.f32 %v1186, %v1155
  %v1188 = vmul.f32 %v1187, 0.5
  %v1189 = vtanh.pop %v1188
  %v1190 = vadd.f32 %v1189, 1.0
  %v1191 = vmul.f32 %v1190, 0.5
  %v1192 = vadd.f32 %v1155, %v353
  %1194 = vrot.lane.b32.xlu0 %v1192, 64
  %v1195 = vpop.permute.xlu0 %1194
  %v1197 = vmul.f32 %v1191, %v1195
  %1199 = vrot.lane.b32.xlu0 %v1197, 64
  %v1200 = vpop.permute.xlu0 %1199
  %v1202 = vadd.f32 %v1186, %v1200
  %v1203 = vtanh.pop %v1202
  %v1204 = vsub.f32 1.0, %v1191
  %1206 = vrot.lane.b32.xlu0 %v1203, 96
  %v1207 = vpop.permute.xlu0 %1206
  %v1209 = vmul.f32 %v1204, %v1207
  %v1210 = vmul.f32 %v1191, %v1002
  %v1211 = vadd.f32 %v1209, %v1210
  %1213 = vrot.lane.b32.xlu0 %v1184, 96
  %v1214 = vpop.permute.xlu0 %1213
  %1216 = vst.msk [vmem:[%s1009] sm:$0x3] %vm379, %v1214
  %1217 = vst.msk [vmem:[%s1007] sm:$0x3] %vm382, %v1211
  %v1218 = vsel %vm152, %v1214, 0
  %1220 = vmatprep.subr.mxu0 0.0
  %1221 = vmatpush1.msra.mxu0 %v159
  %1222 = vmatprep.subr.mxu0 0.0
  %1223 = vmatpush1.msra.mxu0 %v160
  %1224 = vmatprep.subr.mxu0 0.0
  %1225 = vmatpush1.msra.mxu0 %v161
  %1226 = vmatprep.subr.mxu0 0.0
  %1227 = vmatpush1.msra.mxu0 %v162
  %1228 = vmatprep.subr.mxu0 0.0
  %1229 = vmatpush1.msra.mxu0 0.0
  %1230 = vmatprep.subr.mxu0 0.0
  %1231 = vmatpush1.msra.mxu0 0.0
  %1232 = vmatprep.subr.mxu0 0.0
  %1233 = vmatpush1.msra.mxu0 0.0
  %1234 = vmatprep.subr.mxu0 0.0
  %1235 = vmatpush1.msra.mxu0 0.0
  %1236 = vmatprep.subr.mxu0 0.0
  %1237 = vmatpush1.msra.mxu0 0.0
  %1238 = vmatprep.subr.mxu0 0.0
  %1239 = vmatpush1.msra.mxu0 0.0
  %1240 = vmatprep.subr.mxu0 0.0
  %1241 = vmatpush1.msra.mxu0 0.0
  %1242 = vmatprep.subr.mxu0 0.0
  %1243 = vmatpush1.msra.mxu0 0.0
  %1244 = vmatprep.subr.mxu0 0.0
  %1245 = vmatpush1.msra.mxu0 0.0
  %1246 = vmatprep.subr.mxu0 0.0
  %1247 = vmatpush1.msra.mxu0 0.0
  %1248 = vmatprep.subr.mxu0 0.0
  %1249 = vmatpush1.msra.mxu0 0.0
  %1250 = vmatprep.subr.mxu0 0.0
  %1251 = vmatpush1.msra.mxu0 0.0
  %1252 = vmatprep.subr.mxu0 0.0
  %1253 = vmatpush1.msra.mxu0 0.0
  %1254 = vmatprep.subr.mxu0 0.0
  %1255 = vmatpush1.msra.mxu0 0.0
  %1256 = vmatprep.subr.mxu0 0.0
  %1257 = vmatpush1.msra.mxu0 0.0
  %1258 = vmatprep.subr.mxu0 0.0
  %1259 = vmatpush1.msra.mxu0 0.0
  %1260 = vmatprep.subr.mxu0 0.0
  %1261 = vmatpush1.msra.mxu0 0.0
  %1262 = vmatprep.subr.mxu0 0.0
  %1263 = vmatpush1.msra.mxu0 0.0
  %1264 = vmatprep.subr.mxu0 0.0
  %1265 = vmatpush1.msra.mxu0 0.0
  %1266 = vmatprep.subr.mxu0 0.0
  %1267 = vmatpush1.msra.mxu0 0.0
  %1268 = vmatprep.subr.mxu0 0.0
  %1269 = vmatpush1.msra.mxu0 0.0
  %1270 = vmatprep.subr.mxu0 0.0
  %1271 = vmatpush1.msra.mxu0 0.0
  %1272 = vmatprep.subr.mxu0 0.0
  %1273 = vmatpush1.msra.mxu0 0.0
  %1274 = vmatprep.subr.mxu0 0.0
  %1275 = vmatpush1.msra.mxu0 0.0
  %1276 = vmatprep.subr.mxu0 0.0
  %1277 = vmatpush1.msra.mxu0 0.0
  %1278 = vmatprep.subr.mxu0 0.0
  %1279 = vmatpush1.msra.mxu0 0.0
  %1280 = vmatprep.subr.mxu0 0.0
  %1281 = vmatpush1.msra.mxu0 0.0
  %1282 = vmatprep.subr.mxu0 0.0
  %1283 = vmatpush1.msra.mxu0 0.0
  %1284 = vmatprep.mubr.f32.mxu0 0.0
  %1285 = vmatmul.mubr.f32.gmra.mrb[0].mxu0 %v1218
  %v1286 = vpop.f32.mrb[0].mxu0
  %v1287 = vadd.f32 0.0, %v1286
  %v1288 = vpop.f32.mrb[0].mxu0
  %1289 = vdwg.mxu0
  %1291 = vrot.lane.b32.xlu0 %v1211, 96
  %v1292 = vpop.permute.xlu0 %1291
  %v1293 = vsel %vm152, %v1292, 0
  %1295 = vmatprep.subr.mxu0 0.0
  %1296 = vmatpush1.msra.mxu0 %v163
  %1297 = vmatprep.subr.mxu0 0.0
  %1298 = vmatpush1.msra.mxu0 %v164
  %1299 = vmatprep.subr.mxu0 0.0
  %1300 = vmatpush1.msra.mxu0 %v165
  %1301 = vmatprep.subr.mxu0 0.0
  %1302 = vmatpush1.msra.mxu0 %v166
  %1303 = vmatprep.subr.mxu0 0.0
  %1304 = vmatpush1.msra.mxu0 0.0
  %1305 = vmatprep.subr.mxu0 0.0
  %1306 = vmatpush1.msra.mxu0 0.0
  %1307 = vmatprep.subr.mxu0 0.0
  %1308 = vmatpush1.msra.mxu0 0.0
  %1309 = vmatprep.subr.mxu0 0.0
  %1310 = vmatpush1.msra.mxu0 0.0
  %1311 = vmatprep.subr.mxu0 0.0
  %1312 = vmatpush1.msra.mxu0 0.0
  %1313 = vmatprep.subr.mxu0 0.0
  %1314 = vmatpush1.msra.mxu0 0.0
  %1315 = vmatprep.subr.mxu0 0.0
  %1316 = vmatpush1.msra.mxu0 0.0
  %1317 = vmatprep.subr.mxu0 0.0
  %1318 = vmatpush1.msra.mxu0 0.0
  %1319 = vmatprep.subr.mxu0 0.0
  %1320 = vmatpush1.msra.mxu0 0.0
  %1321 = vmatprep.subr.mxu0 0.0
  %1322 = vmatpush1.msra.mxu0 0.0
  %1323 = vmatprep.subr.mxu0 0.0
  %1324 = vmatpush1.msra.mxu0 0.0
  %1325 = vmatprep.subr.mxu0 0.0
  %1326 = vmatpush1.msra.mxu0 0.0
  %1327 = vmatprep.subr.mxu0 0.0
  %1328 = vmatpush1.msra.mxu0 0.0
  %1329 = vmatprep.subr.mxu0 0.0
  %1330 = vmatpush1.msra.mxu0 0.0
  %1331 = vmatprep.subr.mxu0 0.0
  %1332 = vmatpush1.msra.mxu0 0.0
  %1333 = vmatprep.subr.mxu0 0.0
  %1334 = vmatpush1.msra.mxu0 0.0
  %1335 = vmatprep.subr.mxu0 0.0
  %1336 = vmatpush1.msra.mxu0 0.0
  %1337 = vmatprep.subr.mxu0 0.0
  %1338 = vmatpush1.msra.mxu0 0.0
  %1339 = vmatprep.subr.mxu0 0.0
  %1340 = vmatpush1.msra.mxu0 0.0
  %1341 = vmatprep.subr.mxu0 0.0
  %1342 = vmatpush1.msra.mxu0 0.0
  %1343 = vmatprep.subr.mxu0 0.0
  %1344 = vmatpush1.msra.mxu0 0.0
  %1345 = vmatprep.subr.mxu0 0.0
  %1346 = vmatpush1.msra.mxu0 0.0
  %1347 = vmatprep.subr.mxu0 0.0
  %1348 = vmatpush1.msra.mxu0 0.0
  %1349 = vmatprep.subr.mxu0 0.0
  %1350 = vmatpush1.msra.mxu0 0.0
  %1351 = vmatprep.subr.mxu0 0.0
  %1352 = vmatpush1.msra.mxu0 0.0
  %1353 = vmatprep.subr.mxu0 0.0
  %1354 = vmatpush1.msra.mxu0 0.0
  %1355 = vmatprep.subr.mxu0 0.0
  %1356 = vmatpush1.msra.mxu0 0.0
  %1357 = vmatprep.subr.mxu0 0.0
  %1358 = vmatpush1.msra.mxu0 0.0
  %1359 = vmatprep.mubr.f32.mxu0 0.0
  %1360 = vmatmul.mubr.f32.gmra.mrb[0].mxu0 %v1293
  %v1361 = vpop.f32.mrb[0].mxu0
  %v1362 = vadd.f32 0.0, %v1361
  %v1363 = vpop.f32.mrb[0].mxu0
  %1364 = vdwg.mxu0
  %s1365 = scalar_lea.vmem [#allocation2], 10
  %v1366 = vld [vmem:[%s1365] sm:$0x3]
  %v1367 = vadd.f32 %v1366, %v1287
  %v1368 = vmul.f32 %v1367, 0.5
  %v1369 = vtanh.pop %v1368
  %v1370 = vadd.f32 %v1369, 1.0
  %v1371 = vmul.f32 %v1370, 0.5
  %v1372 = vadd.f32 %v1287, %v323
  %1374 = vrot.lane.b32.xlu0 %v1372, 64
  %v1375 = vpop.permute.xlu0 %1374
  %v1377 = vmul.f32 %v1371, %v1375
  %1379 = vrot.lane.b32.xlu0 %v1377, 64
  %v1380 = vpop.permute.xlu0 %1379
  %v1382 = vadd.f32 %v1366, %v1380
  %v1383 = vtanh.pop %v1382
  %v1384 = vsub.f32 1.0, %v1371
  %1386 = vrot.lane.b32.xlu0 %v1383, 96
  %v1387 = vpop.permute.xlu0 %1386
  %v1389 = vmul.f32 %v1384, %v1387
  %v1390 = vmul.f32 %v1371, %v1184
  %v1391 = vadd.f32 %v1389, %v1390
  %s1392 = scalar_lea.vmem [#allocation3], 4
  %v1393 = vld [vmem:[%s1392] sm:$0x3]
  %v1394 = vadd.f32 %v1393, %v1362
  %v1395 = vmul.f32 %v1394, 0.5
  %v1396 = vtanh.pop %v1395
  %v1397 = vadd.f32 %v1396, 1.0
  %v1398 = vmul.f32 %v1397, 0.5
  %v1399 = vadd.f32 %v1362, %v353
  %1401 = vrot.lane.b32.xlu0 %v1399, 64
  %v1402 = vpop.permute.xlu0 %1401
  %v1404 = vmul.f32 %v1398, %v1402
  %1406 = vrot.lane.b32.xlu0 %v1404, 64
  %v1407 = vpop.permute.xlu0 %1406
  %v1409 = vadd.f32 %v1393, %v1407
  %v1410 = vtanh.pop %v1409
  %v1411 = vsub.f32 1.0, %v1398
  %1413 = vrot.lane.b32.xlu0 %v1410, 96
  %v1414 = vpop.permute.xlu0 %1413
  %v1416 = vmul.f32 %v1411, %v1414
  %v1417 = vmul.f32 %v1398, %v1211
  %v1418 = vadd.f32 %v1416, %v1417
  %1420 = vrot.lane.b32.xlu0 %v1391, 96
  %v1421 = vpop.permute.xlu0 %1420
  %1423 = vst.msk [vmem:[%s800] sm:$0x3] %vm379, %v1421
  %1424 = vst.msk [vmem:[%s798] sm:$0x3] %vm382, %v1418
  %v1425 = vsel %vm152, %v1421, 0
  %1427 = vmatprep.subr.mxu0 0.0
  %1428 = vmatpush1.msra.mxu0 %v159
  %1429 = vmatprep.subr.mxu0 0.0
  %1430 = vmatpush1.msra.mxu0 %v160
  %1431 = vmatprep.subr.mxu0 0.0
  %1432 = vmatpush1.msra.mxu0 %v161
  %1433 = vmatprep.subr.mxu0 0.0
  %1434 = vmatpush1.msra.mxu0 %v162
  %1435 = vmatprep.subr.mxu0 0.0
  %1436 = vmatpush1.msra.mxu0 0.0
  %1437 = vmatprep.subr.mxu0 0.0
  %1438 = vmatpush1.msra.mxu0 0.0
  %1439 = vmatprep.subr.mxu0 0.0
  %1440 = vmatpush1.msra.mxu0 0.0
  %1441 = vmatprep.subr.mxu0 0.0
  %1442 = vmatpush1.msra.mxu0 0.0
  %1443 = vmatprep.subr.mxu0 0.0
  %1444 = vmatpush1.msra.mxu0 0.0
  %1445 = vmatprep.subr.mxu0 0.0
  %1446 = vmatpush1.msra.mxu0 0.0
  %1447 = vmatprep.subr.mxu0 0.0
  %1448 = vmatpush1.msra.mxu0 0.0
  %1449 = vmatprep.subr.mxu0 0.0
  %1450 = vmatpush1.msra.mxu0 0.0
  %1451 = vmatprep.subr.mxu0 0.0
  %1452 = vmatpush1.msra.mxu0 0.0
  %1453 = vmatprep.subr.mxu0 0.0
  %1454 = vmatpush1.msra.mxu0 0.0
  %1455 = vmatprep.subr.mxu0 0.0
  %1456 = vmatpush1.msra.mxu0 0.0
  %1457 = vmatprep.subr.mxu0 0.0
  %1458 = vmatpush1.msra.mxu0 0.0
  %1459 = vmatprep.subr.mxu0 0.0
  %1460 = vmatpush1.msra.mxu0 0.0
  %1461 = vmatprep.subr.mxu0 0.0
  %1462 = vmatpush1.msra.mxu0 0.0
  %1463 = vmatprep.subr.mxu0 0.0
  %1464 = vmatpush1.msra.mxu0 0.0
  %1465 = vmatprep.subr.mxu0 0.0
  %1466 = vmatpush1.msra.mxu0 0.0
  %1467 = vmatprep.subr.mxu0 0.0
  %1468 = vmatpush1.msra.mxu0 0.0
  %1469 = vmatprep.subr.mxu0 0.0
  %1470 = vmatpush1.msra.mxu0 0.0
  %1471 = vmatprep.subr.mxu0 0.0
  %1472 = vmatpush1.msra.mxu0 0.0
  %1473 = vmatprep.subr.mxu0 0.0
  %1474 = vmatpush1.msra.mxu0 0.0
  %1475 = vmatprep.subr.mxu0 0.0
  %1476 = vmatpush1.msra.mxu0 0.0
  %1477 = vmatprep.subr.mxu0 0.0
  %1478 = vmatpush1.msra.mxu0 0.0
  %1479 = vmatprep.subr.mxu0 0.0
  %1480 = vmatpush1.msra.mxu0 0.0
  %1481 = vmatprep.subr.mxu0 0.0
  %1482 = vmatpush1.msra.mxu0 0.0
  %1483 = vmatprep.subr.mxu0 0.0
  %1484 = vmatpush1.msra.mxu0 0.0
  %1485 = vmatprep.subr.mxu0 0.0
  %1486 = vmatpush1.msra.mxu0 0.0
  %1487 = vmatprep.subr.mxu0 0.0
  %1488 = vmatpush1.msra.mxu0 0.0
  %1489 = vmatprep.subr.mxu0 0.0
  %1490 = vmatpush1.msra.mxu0 0.0
  %1491 = vmatprep.mubr.f32.mxu0 0.0
  %1492 = vmatmul.mubr.f32.gmra.mrb[0].mxu0 %v1425
  %v1493 = vpop.f32.mrb[0].mxu0
  %v1494 = vadd.f32 0.0, %v1493
  %v1495 = vpop.f32.mrb[0].mxu0
  %1496 = vdwg.mxu0
  %1498 = vrot.lane.b32.xlu0 %v1418, 96
  %v1499 = vpop.permute.xlu0 %1498
  %v1500 = vsel %vm152, %v1499, 0
  %1502 = vmatprep.subr.mxu0 0.0
  %1503 = vmatpush1.msra.mxu0 %v163
  %1504 = vmatprep.subr.mxu0 0.0
  %1505 = vmatpush1.msra.mxu0 %v164
  %1506 = vmatprep.subr.mxu0 0.0
  %1507 = vmatpush1.msra.mxu0 %v165
  %1508 = vmatprep.subr.mxu0 0.0
  %1509 = vmatpush1.msra.mxu0 %v166
  %1510 = vmatprep.subr.mxu0 0.0
  %1511 = vmatpush1.msra.mxu0 0.0
  %1512 = vmatprep.subr.mxu0 0.0
  %1513 = vmatpush1.msra.mxu0 0.0
  %1514 = vmatprep.subr.mxu0 0.0
  %1515 = vmatpush1.msra.mxu0 0.0
  %1516 = vmatprep.subr.mxu0 0.0
  %1517 = vmatpush1.msra.mxu0 0.0
  %1518 = vmatprep.subr.mxu0 0.0
  %1519 = vmatpush1.msra.mxu0 0.0
  %1520 = vmatprep.subr.mxu0 0.0
  %1521 = vmatpush1.msra.mxu0 0.0
  %1522 = vmatprep.subr.mxu0 0.0
  %1523 = vmatpush1.msra.mxu0 0.0
  %1524 = vmatprep.subr.mxu0 0.0
  %1525 = vmatpush1.msra.mxu0 0.0
  %1526 = vmatprep.subr.mxu0 0.0
  %1527 = vmatpush1.msra.mxu0 0.0
  %1528 = vmatprep.subr.mxu0 0.0
  %1529 = vmatpush1.msra.mxu0 0.0
  %1530 = vmatprep.subr.mxu0 0.0
  %1531 = vmatpush1.msra.mxu0 0.0
  %1532 = vmatprep.subr.mxu0 0.0
  %1533 = vmatpush1.msra.mxu0 0.0
  %1534 = vmatprep.subr.mxu0 0.0
  %1535 = vmatpush1.msra.mxu0 0.0
  %1536 = vmatprep.subr.mxu0 0.0
  %1537 = vmatpush1.msra.mxu0 0.0
  %1538 = vmatprep.subr.mxu0 0.0
  %1539 = vmatpush1.msra.mxu0 0.0
  %1540 = vmatprep.subr.mxu0 0.0
  %1541 = vmatpush1.msra.mxu0 0.0
  %1542 = vmatprep.subr.mxu0 0.0
  %1543 = vmatpush1.msra.mxu0 0.0
  %1544 = vmatprep.subr.mxu0 0.0
  %1545 = vmatpush1.msra.mxu0 0.0
  %1546 = vmatprep.subr.mxu0 0.0
  %1547 = vmatpush1.msra.mxu0 0.0
  %1548 = vmatprep.subr.mxu0 0.0
  %1549 = vmatpush1.msra.mxu0 0.0
  %1550 = vmatprep.subr.mxu0 0.0
  %1551 = vmatpush1.msra.mxu0 0.0
  %1552 = vmatprep.subr.mxu0 0.0
  %1553 = vmatpush1.msra.mxu0 0.0
  %1554 = vmatprep.subr.mxu0 0.0
  %1555 = vmatpush1.msra.mxu0 0.0
  %1556 = vmatprep.subr.mxu0 0.0
  %1557 = vmatpush1.msra.mxu0 0.0
  %1558 = vmatprep.subr.mxu0 0.0
  %1559 = vmatpush1.msra.mxu0 0.0
  %1560 = vmatprep.subr.mxu0 0.0
  %1561 = vmatpush1.msra.mxu0 0.0
  %1562 = vmatprep.subr.mxu0 0.0
  %1563 = vmatpush1.msra.mxu0 0.0
  %1564 = vmatprep.subr.mxu0 0.0
  %1565 = vmatpush1.msra.mxu0 0.0
  %1566 = vmatprep.mubr.f32.mxu0 0.0
  %1567 = vmatmul.mubr.f32.gmra.mrb[0].mxu0 %v1500
  %v1568 = vpop.f32.mrb[0].mxu0
  %v1569 = vadd.f32 0.0, %v1568
  %v1570 = vpop.f32.mrb[0].mxu0
  %1571 = vdwg.mxu0
  %s1572 = scalar_lea.vmem [#allocation2], 12
  %v1573 = vld [vmem:[%s1572] sm:$0x3]
  %v1574 = vadd.f32 %v1573, %v1494
  %v1575 = vmul.f32 %v1574, 0.5
  %v1576 = vtanh.pop %v1575
  %v1577 = vadd.f32 %v1576, 1.0
  %v1578 = vmul.f32 %v1577, 0.5
  %v1579 = vadd.f32 %v1494, %v323
  %1581 = vrot.lane.b32.xlu0 %v1579, 64
  %v1582 = vpop.permute.xlu0 %1581
  %v1584 = vmul.f32 %v1578, %v1582
  %1586 = vrot.lane.b32.xlu0 %v1584, 64
  %v1587 = vpop.permute.xlu0 %1586
  %v1589 = vadd.f32 %v1573, %v1587
  %v1590 = vtanh.pop %v1589
  %v1591 = vsub.f32 1.0, %v1578
  %1593 = vrot.lane.b32.xlu0 %v1590, 96
  %v1594 = vpop.permute.xlu0 %1593
  %v1596 = vmul.f32 %v1591, %v1594
  %v1597 = vmul.f32 %v1578, %v1391
  %v1598 = vadd.f32 %v1596, %v1597
  %s1599 = scalar_lea.vmem [#allocation3], 2
  %v1600 = vld [vmem:[%s1599] sm:$0x3]
  %v1601 = vadd.f32 %v1600, %v1569
  %v1602 = vmul.f32 %v1601, 0.5
  %v1603 = vtanh.pop %v1602
  %v1604 = vadd.f32 %v1603, 1.0
  %v1605 = vmul.f32 %v1604, 0.5
  %v1606 = vadd.f32 %v1569, %v353
  %1608 = vrot.lane.b32.xlu0 %v1606, 64
  %v1609 = vpop.permute.xlu0 %1608
  %v1611 = vmul.f32 %v1605, %v1609
  %1613 = vrot.lane.b32.xlu0 %v1611, 64
  %v1614 = vpop.permute.xlu0 %1613
  %v1616 = vadd.f32 %v1600, %v1614
  %v1617 = vtanh.pop %v1616
  %v1618 = vsub.f32 1.0, %v1605
  %1620 = vrot.lane.b32.xlu0 %v1617, 96
  %v1621 = vpop.permute.xlu0 %1620
  %v1623 = vmul.f32 %v1618, %v1621
  %v1624 = vmul.f32 %v1605, %v1418
  %v1625 = vadd.f32 %v1623, %v1624
  %1627 = vrot.lane.b32.xlu0 %v1598, 96
  %v1628 = vpop.permute.xlu0 %1627
  %1630 = vst.msk [vmem:[%s591] sm:$0x3] %vm379, %v1628
  %1631 = vst.msk [vmem:[%s589] sm:$0x3] %vm382, %v1625
  %v1632 = vsel %vm152, %v1628, 0
  %1634 = vmatprep.subr.mxu0 0.0
  %1635 = vmatpush1.msra.mxu0 %v159
  %1636 = vmatprep.subr.mxu0 0.0
  %1637 = vmatpush1.msra.mxu0 %v160
  %1638 = vmatprep.subr.mxu0 0.0
  %1639 = vmatpush1.msra.mxu0 %v161
  %1640 = vmatprep.subr.mxu0 0.0
  %1641 = vmatpush1.msra.mxu0 %v162
  %1642 = vmatprep.subr.mxu0 0.0
  %1643 = vmatpush1.msra.mxu0 0.0
  %1644 = vmatprep.subr.mxu0 0.0
  %1645 = vmatpush1.msra.mxu0 0.0
  %1646 = vmatprep.subr.mxu0 0.0
  %1647 = vmatpush1.msra.mxu0 0.0
  %1648 = vmatprep.subr.mxu0 0.0
  %1649 = vmatpush1.msra.mxu0 0.0
  %1650 = vmatprep.subr.mxu0 0.0
  %1651 = vmatpush1.msra.mxu0 0.0
  %1652 = vmatprep.subr.mxu0 0.0
  %1653 = vmatpush1.msra.mxu0 0.0
  %1654 = vmatprep.subr.mxu0 0.0
  %1655 = vmatpush1.msra.mxu0 0.0
  %1656 = vmatprep.subr.mxu0 0.0
  %1657 = vmatpush1.msra.mxu0 0.0
  %1658 = vmatprep.subr.mxu0 0.0
  %1659 = vmatpush1.msra.mxu0 0.0
  %1660 = vmatprep.subr.mxu0 0.0
  %1661 = vmatpush1.msra.mxu0 0.0
  %1662 = vmatprep.subr.mxu0 0.0
  %1663 = vmatpush1.msra.mxu0 0.0
  %1664 = vmatprep.subr.mxu0 0.0
  %1665 = vmatpush1.msra.mxu0 0.0
  %1666 = vmatprep.subr.mxu0 0.0
  %1667 = vmatpush1.msra.mxu0 0.0
  %1668 = vmatprep.subr.mxu0 0.0
  %1669 = vmatpush1.msra.mxu0 0.0
  %1670 = vmatprep.subr.mxu0 0.0
  %1671 = vmatpush1.msra.mxu0 0.0
  %1672 = vmatprep.subr.mxu0 0.0
  %1673 = vmatpush1.msra.mxu0 0.0
  %1674 = vmatprep.subr.mxu0 0.0
  %1675 = vmatpush1.msra.mxu0 0.0
  %1676 = vmatprep.subr.mxu0 0.0
  %1677 = vmatpush1.msra.mxu0 0.0
  %1678 = vmatprep.subr.mxu0 0.0
  %1679 = vmatpush1.msra.mxu0 0.0
  %1680 = vmatprep.subr.mxu0 0.0
  %1681 = vmatpush1.msra.mxu0 0.0
  %1682 = vmatprep.subr.mxu0 0.0
  %1683 = vmatpush1.msra.mxu0 0.0
  %1684 = vmatprep.subr.mxu0 0.0
  %1685 = vmatpush1.msra.mxu0 0.0
  %1686 = vmatprep.subr.mxu0 0.0
  %1687 = vmatpush1.msra.mxu0 0.0
  %1688 = vmatprep.subr.mxu0 0.0
  %1689 = vmatpush1.msra.mxu0 0.0
  %1690 = vmatprep.subr.mxu0 0.0
  %1691 = vmatpush1.msra.mxu0 0.0
  %1692 = vmatprep.subr.mxu0 0.0
  %1693 = vmatpush1.msra.mxu0 0.0
  %1694 = vmatprep.subr.mxu0 0.0
  %1695 = vmatpush1.msra.mxu0 0.0
  %1696 = vmatprep.subr.mxu0 0.0
  %1697 = vmatpush1.msra.mxu0 0.0
  %1698 = vmatprep.mubr.f32.mxu0 0.0
  %1699 = vmatmul.mubr.f32.gmra.mrb[0].mxu0 %v1632
  %v1700 = vpop.f32.mrb[0].mxu0
  %v1701 = vadd.f32 0.0, %v1700
  %v1702 = vpop.f32.mrb[0].mxu0
  %1703 = vdwg.mxu0
  %1705 = vrot.lane.b32.xlu0 %v1625, 96
  %v1706 = vpop.permute.xlu0 %1705
  %v1707 = vsel %vm152, %v1706, 0
  %1709 = vmatprep.subr.mxu0 0.0
  %1710 = vmatpush1.msra.mxu0 %v163
  %1711 = vmatprep.subr.mxu0 0.0
  %1712 = vmatpush1.msra.mxu0 %v164
  %1713 = vmatprep.subr.mxu0 0.0
  %1714 = vmatpush1.msra.mxu0 %v165
  %1715 = vmatprep.subr.mxu0 0.0
  %1716 = vmatpush1.msra.mxu0 %v166
  %1717 = vmatprep.subr.mxu0 0.0
  %1718 = vmatpush1.msra.mxu0 0.0
  %1719 = vmatprep.subr.mxu0 0.0
  %1720 = vmatpush1.msra.mxu0 0.0
  %1721 = vmatprep.subr.mxu0 0.0
  %1722 = vmatpush1.msra.mxu0 0.0
  %1723 = vmatprep.subr.mxu0 0.0
  %1724 = vmatpush1.msra.mxu0 0.0
  %1725 = vmatprep.subr.mxu0 0.0
  %1726 = vmatpush1.msra.mxu0 0.0
  %1727 = vmatprep.subr.mxu0 0.0
  %1728 = vmatpush1.msra.mxu0 0.0
  %1729 = vmatprep.subr.mxu0 0.0
  %1730 = vmatpush1.msra.mxu0 0.0
  %1731 = vmatprep.subr.mxu0 0.0
  %1732 = vmatpush1.msra.mxu0 0.0
  %1733 = vmatprep.subr.mxu0 0.0
  %1734 = vmatpush1.msra.mxu0 0.0
  %1735 = vmatprep.subr.mxu0 0.0
  %1736 = vmatpush1.msra.mxu0 0.0
  %1737 = vmatprep.subr.mxu0 0.0
  %1738 = vmatpush1.msra.mxu0 0.0
  %1739 = vmatprep.subr.mxu0 0.0
  %1740 = vmatpush1.msra.mxu0 0.0
  %1741 = vmatprep.subr.mxu0 0.0
  %1742 = vmatpush1.msra.mxu0 0.0
  %1743 = vmatprep.subr.mxu0 0.0
  %1744 = vmatpush1.msra.mxu0 0.0
  %1745 = vmatprep.subr.mxu0 0.0
  %1746 = vmatpush1.msra.mxu0 0.0
  %1747 = vmatprep.subr.mxu0 0.0
  %1748 = vmatpush1.msra.mxu0 0.0
  %1749 = vmatprep.subr.mxu0 0.0
  %1750 = vmatpush1.msra.mxu0 0.0
  %1751 = vmatprep.subr.mxu0 0.0
  %1752 = vmatpush1.msra.mxu0 0.0
  %1753 = vmatprep.subr.mxu0 0.0
  %1754 = vmatpush1.msra.mxu0 0.0
  %1755 = vmatprep.subr.mxu0 0.0
  %1756 = vmatpush1.msra.mxu0 0.0
  %1757 = vmatprep.subr.mxu0 0.0
  %1758 = vmatpush1.msra.mxu0 0.0
  %1759 = vmatprep.subr.mxu0 0.0
  %1760 = vmatpush1.msra.mxu0 0.0
  %1761 = vmatprep.subr.mxu0 0.0
  %1762 = vmatpush1.msra.mxu0 0.0
  %1763 = vmatprep.subr.mxu0 0.0
  %1764 = vmatpush1.msra.mxu0 0.0
  %1765 = vmatprep.subr.mxu0 0.0
  %1766 = vmatpush1.msra.mxu0 0.0
  %1767 = vmatprep.subr.mxu0 0.0
  %1768 = vmatpush1.msra.mxu0 0.0
  %1769 = vmatprep.subr.mxu0 0.0
  %1770 = vmatpush1.msra.mxu0 0.0
  %1771 = vmatprep.subr.mxu0 0.0
  %1772 = vmatpush1.msra.mxu0 0.0
  %1773 = vmatprep.mubr.f32.mxu0 0.0
  %1774 = vmatmul.mubr.f32.gmra.mrb[0].mxu0 %v1707
  %v1775 = vpop.f32.mrb[0].mxu0
  %v1776 = vadd.f32 0.0, %v1775
  %v1777 = vpop.f32.mrb[0].mxu0
  %1778 = vdwg.mxu0
  %s1779 = scalar_lea.vmem [#allocation2], 14
  %v1780 = vld [vmem:[%s1779] sm:$0x3]
  %v1781 = vadd.f32 %v1780, %v1701
  %v1782 = vmul.f32 %v1781, 0.5
  %v1783 = vtanh.pop %v1782
  %v1784 = vadd.f32 %v1783, 1.0
  %v1785 = vmul.f32 %v1784, 0.5
  %v1786 = vadd.f32 %v1701, %v323
  %1788 = vrot.lane.b32.xlu0 %v1786, 64
  %v1789 = vpop.permute.xlu0 %1788
  %v1791 = vmul.f32 %v1785, %v1789
  %1793 = vrot.lane.b32.xlu0 %v1791, 64
  %v1794 = vpop.permute.xlu0 %1793
  %v1796 = vadd.f32 %v1780, %v1794
  %v1797 = vtanh.pop %v1796
  %v1798 = vsub.f32 1.0, %v1785
  %1800 = vrot.lane.b32.xlu0 %v1797, 96
  %v1801 = vpop.permute.xlu0 %1800
  %v1803 = vmul.f32 %v1798, %v1801
  %v1804 = vmul.f32 %v1785, %v1598
  %v1805 = vadd.f32 %v1803, %v1804
  %v1806 = vld [vmem:[#allocation3] sm:$0x3]
  %v1807 = vadd.f32 %v1806, %v1776
  %v1808 = vmul.f32 %v1807, 0.5
  %v1809 = vtanh.pop %v1808
  %v1810 = vadd.f32 %v1809, 1.0
  %v1811 = vmul.f32 %v1810, 0.5
  %v1812 = vadd.f32 %v1776, %v353
  %1814 = vrot.lane.b32.xlu0 %v1812, 64
  %v1815 = vpop.permute.xlu0 %1814
  %v1817 = vmul.f32 %v1811, %v1815
  %1819 = vrot.lane.b32.xlu0 %v1817, 64
  %v1820 = vpop.permute.xlu0 %1819
  %v1822 = vadd.f32 %v1806, %v1820
  %v1823 = vtanh.pop %v1822
  %v1824 = vsub.f32 1.0, %v1811
  %1826 = vrot.lane.b32.xlu0 %v1823, 96
  %v1827 = vpop.permute.xlu0 %1826
  %v1829 = vmul.f32 %v1824, %v1827
  %v1830 = vmul.f32 %v1811, %v1625
  %v1831 = vadd.f32 %v1829, %v1830
  %1833 = vrot.lane.b32.xlu0 %v1805, 96
  %v1834 = vpop.permute.xlu0 %1833
  %1836 = vst.msk [vmem:[%s381] sm:$0x3] %vm379, %v1834
  %1837 = vst.msk [vmem:[%s6] sm:$0x3] %vm382, %v1831
  // Predicated region
  $region26: #{gru_forward.3} parent=0 // pred_check
    _
  $region27: #{gru_forward.3} parent=0 // pred_check_branch
    %1839 = sbr.rel (0) target = $region29
  $region28: #{gru_forward.3} parent=0 // pred_region
    _
  $region29: #{gru_forward.3} parent=0 // pred_fallthru
    _
  // Predicated region
  $region30: #{gru_forward.3} parent=0 // pred_check
    _
  $region31: #{gru_forward.3} parent=0 // pred_check_branch
    %1841 = sbr.rel (0) target = $region33
  $region32: #{gru_forward.3} parent=0 // pred_region
    _
  $region33: #{gru_forward.3} parent=0 // pred_fallthru
    _

// kernel: gru_forward.2
$region0: #{gru_forward.2}
  #allocation0 [shape = 'u32[]', space=smem, size = 0x4, offset = 0x4, fixed_abs, tag = 'smem constant byte address 0x4 - core index']
  #allocation1 [shape = 'u32[144,128]{1,0:T(1,128)}', space=vmem, size = 0x12000, scoped, tag = 'internal scratch']
  #allocation2 [shape = 'f32[16,96]{1,0:T(8,128)}', space=vmem, size = 0x2000, scoped, tag = 'scratch operand']
  #allocation3 [shape = 'f32[16,96]{1,0:T(8,128)}', space=vmem, size = 0x2000, scoped, tag = 'scratch operand']
  %s0 = inlined_call_operand.vmem [shape: f32[16,16], index: 0, kind: input, shape index: {}]
  %s1 = inlined_call_operand.vmem [shape: f32[16,192], index: 1, kind: input, shape index: {}]
  %s2 = inlined_call_operand.vmem [shape: f32[32,96], index: 2, kind: input, shape index: {}]
  %s3 = inlined_call_operand.vmem [shape: f32[32,96], index: 3, kind: input, shape index: {}]
  %s4 = inlined_call_operand.vmem [shape: f32[1,192], index: 4, kind: input, shape index: {}]
  %s5 = inlined_call_operand.vmem [shape: f32[1,64], index: 5, kind: input, shape index: {}]
  %s6 = inlined_call_operand.vmem [shape: f32[16,64], index: 6, kind: output, shape index: {}]
  %s7 = sld [smem:[#allocation0]]
  $region34: #{gru_forward.2} parent=0
    _
  %s9 = ssub.s32 1, %s7
  %s10 = scalar_select 0, %s9, %s7
  // Predicated region
  $region2: #{gru_forward.2} parent=0 // pred_check
    _
  $region3: #{gru_forward.2} parent=0 // pred_check_branch
    %12 = sbr.rel (0) target = $region5
  $region4: #{gru_forward.2} parent=0 // pred_region
    _
  $region5: #{gru_forward.2} parent=0 // pred_fallthru
    _
  // Predicated region
  $region6: #{gru_forward.2} parent=0 // pred_check
    _
  $region7: #{gru_forward.2} parent=0 // pred_check_branch
    %14 = sbr.rel (0) target = $region9
  $region8: #{gru_forward.2} parent=0 // pred_region
    _
  $region9: #{gru_forward.2} parent=0 // pred_fallthru
    _
  // Predicated region
  $region10: #{gru_forward.2} parent=0 // pred_check
    _
  $region11: #{gru_forward.2} parent=0 // pred_check_branch
    %16 = sbr.rel (0) target = $region13
  $region12: #{gru_forward.2} parent=0 // pred_region
    _
  $region13: #{gru_forward.2} parent=0 // pred_fallthru
    _
  // Predicated region
  $region14: #{gru_forward.2} parent=0 // pred_check
    _
  $region15: #{gru_forward.2} parent=0 // pred_check_branch
    %18 = sbr.rel (0) target = $region17
  $region16: #{gru_forward.2} parent=0 // pred_region
    _
  $region17: #{gru_forward.2} parent=0 // pred_fallthru
    _
  // Predicated region
  $region18: #{gru_forward.2} parent=0 // pred_check
    _
  $region19: #{gru_forward.2} parent=0 // pred_check_branch
    %20 = sbr.rel (0) target = $region21
  $region20: #{gru_forward.2} parent=0 // pred_region
    _
  $region21: #{gru_forward.2} parent=0 // pred_fallthru
    _
  // Predicated region
  $region22: #{gru_forward.2} parent=0 // pred_check
    _
  $region23: #{gru_forward.2} parent=0 // pred_check_branch
    %22 = sbr.rel (0) target = $region25
  $region24: #{gru_forward.2} parent=0 // pred_region
    _
  $region25: #{gru_forward.2} parent=0 // pred_fallthru
    _
  %v23 = vld [vmem:[%s0] sm:$0xff]
  %v24 = vld [vmem:[%s0 + $0x8] sm:$0xff]
  %v25 = vld [vmem:[%s1] sm:$0xff]
  %v26 = vld [vmem:[%s1 + $0x8] sm:$0xff]
  %v27 = vld [vmem:[%s1 + $0x10] sm:$0xff]
  %v28 = vld [vmem:[%s1 + $0x18] sm:$0xff]
  %v29 = vld [vmem:[%s4] sm:$0x3]
  %v31 = vlaneseq
  %v32 = vshrl.u32 %v31, 7
  %v33 = vsub.s32 0, %v32
  %v34 = vrot.slane %v29, %v33
  %v35 = vlaneseq
  %v36 = vshrl.u32 %v35, 7
  %v37 = vsub.s32 1, %v36
  %v38 = vrot.slane %v29, %v37
  %vm41 = vcmask 130048
  %v43 = vsel %vm41, %v23, 0
  %v46 = vsel %vm41, %v24, 0
  %48 = vmatprep.subr.mxu0 %v26
  %49 = vmatpush1.msra.mxu0 %v25
  %50 = vmatprep.subr.mxu0 %v28
  %51 = vmatpush1.msra.mxu0 %v27
  %52 = vmatprep.subr.mxu0 0.0
  %53 = vmatpush1.msra.mxu0 0.0
  %54 = vmatprep.subr.mxu0 0.0
  %55 = vmatpush1.msra.mxu0 0.0
  %56 = vmatprep.subr.mxu0 0.0
  %57 = vmatpush1.msra.mxu0 0.0
  %58 = vmatprep.subr.mxu0 0.0
  %59 = vmatpush1.msra.mxu0 0.0
  %60 = vmatprep.subr.mxu0 0.0
  %61 = vmatpush1.msra.mxu0 0.0
  %62 = vmatprep.subr.mxu0 0.0
  %63 = vmatpush1.msra.mxu0 0.0
  %64 = vmatprep.subr.mxu0 0.0
  %65 = vmatpush1.msra.mxu0 0.0
  %66 = vmatprep.subr.mxu0 0.0
  %67 = vmatpush1.msra.mxu0 0.0
  %68 = vmatprep.subr.mxu0 0.0
  %69 = vmatpush1.msra.mxu0 0.0
  %70 = vmatprep.subr.mxu0 0.0
  %71 = vmatpush1.msra.mxu0 0.0
  %72 = vmatprep.subr.mxu0 0.0
  %73 = vmatpush1.msra.mxu0 0.0
  %74 = vmatprep.subr.mxu0 0.0
  %75 = vmatpush1.msra.mxu0 0.0
  %76 = vmatprep.subr.mxu0 0.0
  %77 = vmatpush1.msra.mxu0 0.0
  %78 = vmatprep.subr.mxu0 0.0
  %79 = vmatpush1.msra.mxu0 0.0
  %80 = vmatprep.subr.mxu0 0.0
  %81 = vmatpush1.msra.mxu0 0.0
  %82 = vmatprep.subr.mxu0 0.0
  %83 = vmatpush1.msra.mxu0 0.0
  %84 = vmatprep.subr.mxu0 0.0
  %85 = vmatpush1.msra.mxu0 0.0
  %86 = vmatprep.subr.mxu0 0.0
  %87 = vmatpush1.msra.mxu0 0.0
  %88 = vmatprep.subr.mxu0 0.0
  %89 = vmatpush1.msra.mxu0 0.0
  %90 = vmatprep.subr.mxu0 0.0
  %91 = vmatpush1.msra.mxu0 0.0
  %92 = vmatprep.subr.mxu0 0.0
  %93 = vmatpush1.msra.mxu0 0.0
  %94 = vmatprep.subr.mxu0 0.0
  %95 = vmatpush1.msra.mxu0 0.0
  %96 = vmatprep.subr.mxu0 0.0
  %97 = vmatpush1.msra.mxu0 0.0
  %98 = vmatprep.subr.mxu0 0.0
  %99 = vmatpush1.msra.mxu0 0.0
  %100 = vmatprep.subr.mxu0 0.0
  %101 = vmatpush1.msra.mxu0 0.0
  %102 = vmatprep.subr.mxu0 0.0
  %103 = vmatpush1.msra.mxu0 0.0
  %104 = vmatprep.subr.mxu0 0.0
  %105 = vmatpush1.msra.mxu0 0.0
  %106 = vmatprep.subr.mxu0 0.0
  %107 = vmatpush1.msra.mxu0 0.0
  %108 = vmatprep.subr.mxu0 0.0
  %109 = vmatpush1.msra.mxu0 0.0
  %110 = vmatprep.subr.mxu0 0.0
  %111 = vmatpush1.msra.mxu0 0.0
  %112 = vmatprep.mubr.f32.mxu0 0.0
  %113 = vmatmul.mubr.f32.gmra.mrb[0].mxu0 %v43
  %v114 = vpop.f32.mrb[0].mxu0
  %v115 = vadd.f32 %v34, %v114
  %v116 = vpop.f32.mrb[0].mxu0
  %v117 = vadd.f32 %v38, %v116
  %118 = vmatprep.mubr.f32.mxu0 0.0
  %119 = vmatmul.mubr.f32.gmra.mrb[0].mxu0 %v46
  %v120 = vpop.f32.mrb[0].mxu0
  %v121 = vadd.f32 %v34, %v120
  %v122 = vpop.f32.mrb[0].mxu0
  %v123 = vadd.f32 %v38, %v122
  %124 = vdwg.mxu0
  %vm125 = vcmask 785408
  %126 = vst.msk [vmem:[#allocation2] sm:$0xff] %vm125, %v115
  %127 = vst.msk [vmem:[#allocation2 + $0x8] sm:$0xff] %vm125, %v121
  %132 = vrot.lane.b32.xlu0 %v115, 32
  %v133 = vpop.permute.xlu0 %132
  %134 = vrot.lane.b32.xlu0 %v117, 32
  %v135 = vpop.permute.xlu0 %134
  %136 = vrot.lane.b32.xlu0 %v121, 32
  %v137 = vpop.permute.xlu0 %136
  %138 = vrot.lane.b32.xlu0 %v123, 32
  %v139 = vpop.permute.xlu0 %138
  %vm140 = vcmask 261120
  %v141 = vsel %vm140, %v133, %v135
  %v142 = vsel %vm140, %v137, %v139
  %145 = vst.msk [vmem:[#allocation3] sm:$0xff] %vm125, %v141
  %146 = vst.msk [vmem:[#allocation3 + $0x8] sm:$0xff] %vm125, %v142
  %v147 = vld [vmem:[%s2] sm:$0xff]
  %v148 = vld [vmem:[%s2 + $0x8] sm:$0xff]
  %v149 = vld [vmem:[%s2 + $0x10] sm:$0xff]
  %v150 = vld [vmem:[%s2 + $0x18] sm:$0xff]
  %v151 = vld [vmem:[%s3] sm:$0xff]
  %v152 = vld [vmem:[%s3 + $0x8] sm:$0xff]
  %v153 = vld [vmem:[%s3 + $0x10] sm:$0xff]
  %v154 = vld [vmem:[%s3 + $0x18] sm:$0xff]
  %v155 = vld [vmem:[%s5] sm:$0x1]
  %v157 = vlaneseq
  %v158 = vshrl.u32 %v157, 7
  %v159 = vsub.s32 0, %v158
  %v160 = vrot.slane %v155, %v159
  %v162 = vsel %vm140, 0.0, 0
  %164 = vmatprep.subr.mxu0 0.0
  %165 = vmatpush1.msra.mxu0 %v147
  %166 = vmatprep.subr.mxu0 0.0
  %167 = vmatpush1.msra.mxu0 %v148
  %168 = vmatprep.subr.mxu0 0.0
  %169 = vmatpush1.msra.mxu0 %v149
  %170 = vmatprep.subr.mxu0 0.0
  %171 = vmatpush1.msra.mxu0 %v150
  %172 = vmatprep.subr.mxu0 0.0
  %173 = vmatpush1.msra.mxu0 0.0
  %174 = vmatprep.subr.mxu0 0.0
  %175 = vmatpush1.msra.mxu0 0.0
  %176 = vmatprep.subr.mxu0 0.0
  %177 = vmatpush1.msra.mxu0 0.0
  %178 = vmatprep.subr.mxu0 0.0
  %179 = vmatpush1.msra.mxu0 0.0
  %180 = vmatprep.subr.mxu0 0.0
  %181 = vmatpush1.msra.mxu0 0.0
  %182 = vmatprep.subr.mxu0 0.0
  %183 = vmatpush1.msra.mxu0 0.0
  %184 = vmatprep.subr.mxu0 0.0
  %185 = vmatpush1.msra.mxu0 0.0
  %186 = vmatprep.subr.mxu0 0.0
  %187 = vmatpush1.msra.mxu0 0.0
  %188 = vmatprep.subr.mxu0 0.0
  %189 = vmatpush1.msra.mxu0 0.0
  %190 = vmatprep.subr.mxu0 0.0
  %191 = vmatpush1.msra.mxu0 0.0
  %192 = vmatprep.subr.mxu0 0.0
  %193 = vmatpush1.msra.mxu0 0.0
  %194 = vmatprep.subr.mxu0 0.0
  %195 = vmatpush1.msra.mxu0 0.0
  %196 = vmatprep.subr.mxu0 0.0
  %197 = vmatpush1.msra.mxu0 0.0
  %198 = vmatprep.subr.mxu0 0.0
  %199 = vmatpush1.msra.mxu0 0.0
  %200 = vmatprep.subr.mxu0 0.0
  %201 = vmatpush1.msra.mxu0 0.0
  %202 = vmatprep.subr.mxu0 0.0
  %203 = vmatpush1.msra.mxu0 0.0
  %204 = vmatprep.subr.mxu0 0.0
  %205 = vmatpush1.msra.mxu0 0.0
  %206 = vmatprep.subr.mxu0 0.0
  %207 = vmatpush1.msra.mxu0 0.0
  %208 = vmatprep.subr.mxu0 0.0
  %209 = vmatpush1.msra.mxu0 0.0
  %210 = vmatprep.subr.mxu0 0.0
  %211 = vmatpush1.msra.mxu0 0.0
  %212 = vmatprep.subr.mxu0 0.0
  %213 = vmatpush1.msra.mxu0 0.0
  %214 = vmatprep.subr.mxu0 0.0
  %215 = vmatpush1.msra.mxu0 0.0
  %216 = vmatprep.subr.mxu0 0.0
  %217 = vmatpush1.msra.mxu0 0.0
  %218 = vmatprep.subr.mxu0 0.0
  %219 = vmatpush1.msra.mxu0 0.0
  %220 = vmatprep.subr.mxu0 0.0
  %221 = vmatpush1.msra.mxu0 0.0
  %222 = vmatprep.subr.mxu0 0.0
  %223 = vmatpush1.msra.mxu0 0.0
  %224 = vmatprep.subr.mxu0 0.0
  %225 = vmatpush1.msra.mxu0 0.0
  %226 = vmatprep.subr.mxu0 0.0
  %227 = vmatpush1.msra.mxu0 0.0
  %228 = vmatprep.mubr.f32.mxu0 0.0
  %229 = vmatmul.mubr.f32.gmra.mrb[0].mxu0 %v162
  %v230 = vpop.f32.mrb[0].mxu0
  %v231 = vadd.f32 0.0, %v230
  %v232 = vpop.f32.mrb[0].mxu0
  %233 = vdwg.mxu0
  %234 = vmatprep.subr.mxu0 0.0
  %235 = vmatpush1.msra.mxu0 %v151
  %236 = vmatprep.subr.mxu0 0.0
  %237 = vmatpush1.msra.mxu0 %v152
  %238 = vmatprep.subr.mxu0 0.0
  %239 = vmatpush1.msra.mxu0 %v153
  %240 = vmatprep.subr.mxu0 0.0
  %241 = vmatpush1.msra.mxu0 %v154
  %242 = vmatprep.subr.mxu0 0.0
  %243 = vmatpush1.msra.mxu0 0.0
  %244 = vmatprep.subr.mxu0 0.0
  %245 = vmatpush1.msra.mxu0 0.0
  %246 = vmatprep.subr.mxu0 0.0
  %247 = vmatpush1.msra.mxu0 0.0
  %248 = vmatprep.subr.mxu0 0.0
  %249 = vmatpush1.msra.mxu0 0.0
  %250 = vmatprep.subr.mxu0 0.0
  %251 = vmatpush1.msra.mxu0 0.0
  %252 = vmatprep.subr.mxu0 0.0
  %253 = vmatpush1.msra.mxu0 0.0
  %254 = vmatprep.subr.mxu0 0.0
  %255 = vmatpush1.msra.mxu0 0.0
  %256 = vmatprep.subr.mxu0 0.0
  %257 = vmatpush1.msra.mxu0 0.0
  %258 = vmatprep.subr.mxu0 0.0
  %259 = vmatpush1.msra.mxu0 0.0
  %260 = vmatprep.subr.mxu0 0.0
  %261 = vmatpush1.msra.mxu0 0.0
  %262 = vmatprep.subr.mxu0 0.0
  %263 = vmatpush1.msra.mxu0 0.0
  %264 = vmatprep.subr.mxu0 0.0
  %265 = vmatpush1.msra.mxu0 0.0
  %266 = vmatprep.subr.mxu0 0.0
  %267 = vmatpush1.msra.mxu0 0.0
  %268 = vmatprep.subr.mxu0 0.0
  %269 = vmatpush1.msra.mxu0 0.0
  %270 = vmatprep.subr.mxu0 0.0
  %271 = vmatpush1.msra.mxu0 0.0
  %272 = vmatprep.subr.mxu0 0.0
  %273 = vmatpush1.msra.mxu0 0.0
  %274 = vmatprep.subr.mxu0 0.0
  %275 = vmatpush1.msra.mxu0 0.0
  %276 = vmatprep.subr.mxu0 0.0
  %277 = vmatpush1.msra.mxu0 0.0
  %278 = vmatprep.subr.mxu0 0.0
  %279 = vmatpush1.msra.mxu0 0.0
  %280 = vmatprep.subr.mxu0 0.0
  %281 = vmatpush1.msra.mxu0 0.0
  %282 = vmatprep.subr.mxu0 0.0
  %283 = vmatpush1.msra.mxu0 0.0
  %284 = vmatprep.subr.mxu0 0.0
  %285 = vmatpush1.msra.mxu0 0.0
  %286 = vmatprep.subr.mxu0 0.0
  %287 = vmatpush1.msra.mxu0 0.0
  %288 = vmatprep.subr.mxu0 0.0
  %289 = vmatpush1.msra.mxu0 0.0
  %290 = vmatprep.subr.mxu0 0.0
  %291 = vmatpush1.msra.mxu0 0.0
  %292 = vmatprep.subr.mxu0 0.0
  %293 = vmatpush1.msra.mxu0 0.0
  %294 = vmatprep.subr.mxu0 0.0
  %295 = vmatpush1.msra.mxu0 0.0
  %296 = vmatprep.subr.mxu0 0.0
  %297 = vmatpush1.msra.mxu0 0.0
  %298 = vmatprep.mubr.f32.mxu0 0.0
  %299 = vmatmul.mubr.f32.gmra.mrb[0].mxu0 %v162
  %v300 = vpop.f32.mrb[0].mxu0
  %v301 = vadd.f32 0.0, %v300
  %v302 = vpop.f32.mrb[0].mxu0
  %303 = vdwg.mxu0
  %v304 = vld [vmem:[#allocation2] sm:$0x3]
  %v305 = vadd.f32 %v304, %v231
  %v306 = vmul.f32 %v305, 0.5
  %v307 = vtanh.pop %v306
  %v308 = vadd.f32 %v307, 1.0
  %v309 = vmul.f32 %v308, 0.5
  %310 = vrot.lane.b32.xlu0 %v160, 64
  %v311 = vpop.permute.xlu0 %310
  %v313 = vadd.f32 %v231, %v311
  %315 = vrot.lane.b32.xlu0 %v313, 64
  %v316 = vpop.permute.xlu0 %315
  %v318 = vmul.f32 %v309, %v316
  %320 = vrot.lane.b32.xlu0 %v318, 64
  %v321 = vpop.permute.xlu0 %320
  %v323 = vadd.f32 %v304, %v321
  %v324 = vtanh.pop %v323
  %v325 = vsub.f32 1.0, %v309
  %327 = vrot.lane.b32.xlu0 %v324, 96
  %v328 = vpop.permute.xlu0 %327
  %v330 = vmul.f32 %v325, %v328
  %v331 = vmul.f32 %v309, 0.0
  %v332 = vadd.f32 %v330, %v331
  %s333 = scalar_lea.vmem [#allocation3], 14
  %v334 = vld [vmem:[%s333] sm:$0x3]
  %v335 = vadd.f32 %v334, %v301
  %v336 = vmul.f32 %v335, 0.5
  %v337 = vtanh.pop %v336
  %v338 = vadd.f32 %v337, 1.0
  %v339 = vmul.f32 %v338, 0.5
  %340 = vrot.lane.b32.xlu0 %v160, 32
  %v341 = vpop.permute.xlu0 %340
  %v343 = vadd.f32 %v301, %v341
  %345 = vrot.lane.b32.xlu0 %v343, 64
  %v346 = vpop.permute.xlu0 %345
  %v348 = vmul.f32 %v339, %v346
  %350 = vrot.lane.b32.xlu0 %v348, 64
  %v351 = vpop.permute.xlu0 %350
  %v353 = vadd.f32 %v334, %v351
  %v354 = vtanh.pop %v353
  %v355 = vsub.f32 1.0, %v339
  %357 = vrot.lane.b32.xlu0 %v354, 96
  %v358 = vpop.permute.xlu0 %357
  %v360 = vmul.f32 %v355, %v358
  %v361 = vmul.f32 %v339, 0.0
  %v362 = vadd.f32 %v360, %v361
  %364 = vrot.lane.b32.xlu0 %v332, 96
  %v365 = vpop.permute.xlu0 %364
  %vm367 = vcmask 254976
  %368 = vst.msk [vmem:[%s6] sm:$0x3] %vm367, %v365
  %s369 = scalar_lea.vmem %s6, 14
  %vm370 = vcmask 517376
  %371 = vst.msk [vmem:[%s369] sm:$0x3] %vm370, %v362
  %v372 = vsel %vm140, %v365, 0
  %374 = vmatprep.subr.mxu0 0.0
  %375 = vmatpush1.msra.mxu0 %v147
  %376 = vmatprep.subr.mxu0 0.0
  %377 = vmatpush1.msra.mxu0 %v148
  %378 = vmatprep.subr.mxu0 0.0
  %379 = vmatpush1.msra.mxu0 %v149
  %380 = vmatprep.subr.mxu0 0.0
  %381 = vmatpush1.msra.mxu0 %v150
  %382 = vmatprep.subr.mxu0 0.0
  %383 = vmatpush1.msra.mxu0 0.0
  %384 = vmatprep.subr.mxu0 0.0
  %385 = vmatpush1.msra.mxu0 0.0
  %386 = vmatprep.subr.mxu0 0.0
  %387 = vmatpush1.msra.mxu0 0.0
  %388 = vmatprep.subr.mxu0 0.0
  %389 = vmatpush1.msra.mxu0 0.0
  %390 = vmatprep.subr.mxu0 0.0
  %391 = vmatpush1.msra.mxu0 0.0
  %392 = vmatprep.subr.mxu0 0.0
  %393 = vmatpush1.msra.mxu0 0.0
  %394 = vmatprep.subr.mxu0 0.0
  %395 = vmatpush1.msra.mxu0 0.0
  %396 = vmatprep.subr.mxu0 0.0
  %397 = vmatpush1.msra.mxu0 0.0
  %398 = vmatprep.subr.mxu0 0.0
  %399 = vmatpush1.msra.mxu0 0.0
  %400 = vmatprep.subr.mxu0 0.0
  %401 = vmatpush1.msra.mxu0 0.0
  %402 = vmatprep.subr.mxu0 0.0
  %403 = vmatpush1.msra.mxu0 0.0
  %404 = vmatprep.subr.mxu0 0.0
  %405 = vmatpush1.msra.mxu0 0.0
  %406 = vmatprep.subr.mxu0 0.0
  %407 = vmatpush1.msra.mxu0 0.0
  %408 = vmatprep.subr.mxu0 0.0
  %409 = vmatpush1.msra.mxu0 0.0
  %410 = vmatprep.subr.mxu0 0.0
  %411 = vmatpush1.msra.mxu0 0.0
  %412 = vmatprep.subr.mxu0 0.0
  %413 = vmatpush1.msra.mxu0 0.0
  %414 = vmatprep.subr.mxu0 0.0
  %415 = vmatpush1.msra.mxu0 0.0
  %416 = vmatprep.subr.mxu0 0.0
  %417 = vmatpush1.msra.mxu0 0.0
  %418 = vmatprep.subr.mxu0 0.0
  %419 = vmatpush1.msra.mxu0 0.0
  %420 = vmatprep.subr.mxu0 0.0
  %421 = vmatpush1.msra.mxu0 0.0
  %422 = vmatprep.subr.mxu0 0.0
  %423 = vmatpush1.msra.mxu0 0.0
  %424 = vmatprep.subr.mxu0 0.0
  %425 = vmatpush1.msra.mxu0 0.0
  %426 = vmatprep.subr.mxu0 0.0
  %427 = vmatpush1.msra.mxu0 0.0
  %428 = vmatprep.subr.mxu0 0.0
  %429 = vmatpush1.msra.mxu0 0.0
  %430 = vmatprep.subr.mxu0 0.0
  %431 = vmatpush1.msra.mxu0 0.0
  %432 = vmatprep.subr.mxu0 0.0
  %433 = vmatpush1.msra.mxu0 0.0
  %434 = vmatprep.subr.mxu0 0.0
  %435 = vmatpush1.msra.mxu0 0.0
  %436 = vmatprep.subr.mxu0 0.0
  %437 = vmatpush1.msra.mxu0 0.0
  %438 = vmatprep.mubr.f32.mxu0 0.0
  %439 = vmatmul.mubr.f32.gmra.mrb[0].mxu0 %v372
  %v440 = vpop.f32.mrb[0].mxu0
  %v441 = vadd.f32 0.0, %v440
  %v442 = vpop.f32.mrb[0].mxu0
  %443 = vdwg.mxu0
  %445 = vrot.lane.b32.xlu0 %v362, 96
  %v446 = vpop.permute.xlu0 %445
  %v447 = vsel %vm140, %v446, 0
  %449 = vmatprep.subr.mxu0 0.0
  %450 = vmatpush1.msra.mxu0 %v151
  %451 = vmatprep.subr.mxu0 0.0
  %452 = vmatpush1.msra.mxu0 %v152
  %453 = vmatprep.subr.mxu0 0.0
  %454 = vmatpush1.msra.mxu0 %v153
  %455 = vmatprep.subr.mxu0 0.0
  %456 = vmatpush1.msra.mxu0 %v154
  %457 = vmatprep.subr.mxu0 0.0
  %458 = vmatpush1.msra.mxu0 0.0
  %459 = vmatprep.subr.mxu0 0.0
  %460 = vmatpush1.msra.mxu0 0.0
  %461 = vmatprep.subr.mxu0 0.0
  %462 = vmatpush1.msra.mxu0 0.0
  %463 = vmatprep.subr.mxu0 0.0
  %464 = vmatpush1.msra.mxu0 0.0
  %465 = vmatprep.subr.mxu0 0.0
  %466 = vmatpush1.msra.mxu0 0.0
  %467 = vmatprep.subr.mxu0 0.0
  %468 = vmatpush1.msra.mxu0 0.0
  %469 = vmatprep.subr.mxu0 0.0
  %470 = vmatpush1.msra.mxu0 0.0
  %471 = vmatprep.subr.mxu0 0.0
  %472 = vmatpush1.msra.mxu0 0.0
  %473 = vmatprep.subr.mxu0 0.0
  %474 = vmatpush1.msra.mxu0 0.0
  %475 = vmatprep.subr.mxu0 0.0
  %476 = vmatpush1.msra.mxu0 0.0
  %477 = vmatprep.subr.mxu0 0.0
  %478 = vmatpush1.msra.mxu0 0.0
  %479 = vmatprep.subr.mxu0 0.0
  %480 = vmatpush1.msra.mxu0 0.0
  %481 = vmatprep.subr.mxu0 0.0
  %482 = vmatpush1.msra.mxu0 0.0
  %483 = vmatprep.subr.mxu0 0.0
  %484 = vmatpush1.msra.mxu0 0.0
  %485 = vmatprep.subr.mxu0 0.0
  %486 = vmatpush1.msra.mxu0 0.0
  %487 = vmatprep.subr.mxu0 0.0
  %488 = vmatpush1.msra.mxu0 0.0
  %489 = vmatprep.subr.mxu0 0.0
  %490 = vmatpush1.msra.mxu0 0.0
  %491 = vmatprep.subr.mxu0 0.0
  %492 = vmatpush1.msra.mxu0 0.0
  %493 = vmatprep.subr.mxu0 0.0
  %494 = vmatpush1.msra.mxu0 0.0
  %495 = vmatprep.subr.mxu0 0.0
  %496 = vmatpush1.msra.mxu0 0.0
  %497 = vmatprep.subr.mxu0 0.0
  %498 = vmatpush1.msra.mxu0 0.0
  %499 = vmatprep.subr.mxu0 0.0
  %500 = vmatpush1.msra.mxu0 0.0
  %501 = vmatprep.subr.mxu0 0.0
  %502 = vmatpush1.msra.mxu0 0.0
  %503 = vmatprep.subr.mxu0 0.0
  %504 = vmatpush1.msra.mxu0 0.0
  %505 = vmatprep.subr.mxu0 0.0
  %506 = vmatpush1.msra.mxu0 0.0
  %507 = vmatprep.subr.mxu0 0.0
  %508 = vmatpush1.msra.mxu0 0.0
  %509 = vmatprep.subr.mxu0 0.0
  %510 = vmatpush1.msra.mxu0 0.0
  %511 = vmatprep.subr.mxu0 0.0
  %512 = vmatpush1.msra.mxu0 0.0
  %513 = vmatprep.mubr.f32.mxu0 0.0
  %514 = vmatmul.mubr.f32.gmra.mrb[0].mxu0 %v447
  %v515 = vpop.f32.mrb[0].mxu0
  %v516 = vadd.f32 0.0, %v515
  %v517 = vpop.f32.mrb[0].mxu0
  %518 = vdwg.mxu0
  %s519 = scalar_lea.vmem [#allocation2], 2
  %v520 = vld [vmem:[%s519] sm:$0x3]
  %v521 = vadd.f32 %v520, %v441
  %v522 = vmul.f32 %v521, 0.5
  %v523 = vtanh.pop %v522
  %v524 = vadd.f32 %v523, 1.0
  %v525 = vmul.f32 %v524, 0.5
  %v526 = vadd.f32 %v441, %v311
  %528 = vrot.lane.b32.xlu0 %v526, 64
  %v529 = vpop.permute.xlu0 %528
  %v531 = vmul.f32 %v525, %v529
  %533 = vrot.lane.b32.xlu0 %v531, 64
  %v534 = vpop.permute.xlu0 %533
  %v536 = vadd.f32 %v520, %v534
  %v537 = vtanh.pop %v536
  %v538 = vsub.f32 1.0, %v525
  %540 = vrot.lane.b32.xlu0 %v537, 96
  %v541 = vpop.permute.xlu0 %540
  %v543 = vmul.f32 %v538, %v541
  %v544 = vmul.f32 %v525, %v332
  %v545 = vadd.f32 %v543, %v544
  %s546 = scalar_lea.vmem [#allocation3], 12
  %v547 = vld [vmem:[%s546] sm:$0x3]
  %v548 = vadd.f32 %v547, %v516
  %v549 = vmul.f32 %v548, 0.5
  %v550 = vtanh.pop %v549
  %v551 = vadd.f32 %v550, 1.0
  %v552 = vmul.f32 %v551, 0.5
  %v553 = vadd.f32 %v516, %v341
  %555 = vrot.lane.b32.xlu0 %v553, 64
  %v556 = vpop.permute.xlu0 %555
  %v558 = vmul.f32 %v552, %v556
  %560 = vrot.lane.b32.xlu0 %v558, 64
  %v561 = vpop.permute.xlu0 %560
  %v563 = vadd.f32 %v547, %v561
  %v564 = vtanh.pop %v563
  %v565 = vsub.f32 1.0, %v552
  %567 = vrot.lane.b32.xlu0 %v564, 96
  %v568 = vpop.permute.xlu0 %567
  %v570 = vmul.f32 %v565, %v568
  %v571 = vmul.f32 %v552, %v362
  %v572 = vadd.f32 %v570, %v571
  %574 = vrot.lane.b32.xlu0 %v545, 96
  %v575 = vpop.permute.xlu0 %574
  %s577 = scalar_lea.vmem %s6, 2
  %578 = vst.msk [vmem:[%s577] sm:$0x3] %vm367, %v575
  %s579 = scalar_lea.vmem %s6, 12
  %580 = vst.msk [vmem:[%s579] sm:$0x3] %vm370, %v572
  %v581 = vsel %vm140, %v575, 0
  %583 = vmatprep.subr.mxu0 0.0
  %584 = vmatpush1.msra.mxu0 %v147
  %585 = vmatprep.subr.mxu0 0.0
  %586 = vmatpush1.msra.mxu0 %v148
  %587 = vmatprep.subr.mxu0 0.0
  %588 = vmatpush1.msra.mxu0 %v149
  %589 = vmatprep.subr.mxu0 0.0
  %590 = vmatpush1.msra.mxu0 %v150
  %591 = vmatprep.subr.mxu0 0.0
  %592 = vmatpush1.msra.mxu0 0.0
  %593 = vmatprep.subr.mxu0 0.0
  %594 = vmatpush1.msra.mxu0 0.0
  %595 = vmatprep.subr.mxu0 0.0
  %596 = vmatpush1.msra.mxu0 0.0
  %597 = vmatprep.subr.mxu0 0.0
  %598 = vmatpush1.msra.mxu0 0.0
  %599 = vmatprep.subr.mxu0 0.0
  %600 = vmatpush1.msra.mxu0 0.0
  %601 = vmatprep.subr.mxu0 0.0
  %602 = vmatpush1.msra.mxu0 0.0
  %603 = vmatprep.subr.mxu0 0.0
  %604 = vmatpush1.msra.mxu0 0.0
  %605 = vmatprep.subr.mxu0 0.0
  %606 = vmatpush1.msra.mxu0 0.0
  %607 = vmatprep.subr.mxu0 0.0
  %608 = vmatpush1.msra.mxu0 0.0
  %609 = vmatprep.subr.mxu0 0.0
  %610 = vmatpush1.msra.mxu0 0.0
  %611 = vmatprep.subr.mxu0 0.0
  %612 = vmatpush1.msra.mxu0 0.0
  %613 = vmatprep.subr.mxu0 0.0
  %614 = vmatpush1.msra.mxu0 0.0
  %615 = vmatprep.subr.mxu0 0.0
  %616 = vmatpush1.msra.mxu0 0.0
  %617 = vmatprep.subr.mxu0 0.0
  %618 = vmatpush1.msra.mxu0 0.0
  %619 = vmatprep.subr.mxu0 0.0
  %620 = vmatpush1.msra.mxu0 0.0
  %621 = vmatprep.subr.mxu0 0.0
  %622 = vmatpush1.msra.mxu0 0.0
  %623 = vmatprep.subr.mxu0 0.0
  %624 = vmatpush1.msra.mxu0 0.0
  %625 = vmatprep.subr.mxu0 0.0
  %626 = vmatpush1.msra.mxu0 0.0
  %627 = vmatprep.subr.mxu0 0.0
  %628 = vmatpush1.msra.mxu0 0.0
  %629 = vmatprep.subr.mxu0 0.0
  %630 = vmatpush1.msra.mxu0 0.0
  %631 = vmatprep.subr.mxu0 0.0
  %632 = vmatpush1.msra.mxu0 0.0
  %633 = vmatprep.subr.mxu0 0.0
  %634 = vmatpush1.msra.mxu0 0.0
  %635 = vmatprep.subr.mxu0 0.0
  %636 = vmatpush1.msra.mxu0 0.0
  %637 = vmatprep.subr.mxu0 0.0
  %638 = vmatpush1.msra.mxu0 0.0
  %639 = vmatprep.subr.mxu0 0.0
  %640 = vmatpush1.msra.mxu0 0.0
  %641 = vmatprep.subr.mxu0 0.0
  %642 = vmatpush1.msra.mxu0 0.0
  %643 = vmatprep.subr.mxu0 0.0
  %644 = vmatpush1.msra.mxu0 0.0
  %645 = vmatprep.subr.mxu0 0.0
  %646 = vmatpush1.msra.mxu0 0.0
  %647 = vmatprep.mubr.f32.mxu0 0.0
  %648 = vmatmul.mubr.f32.gmra.mrb[0].mxu0 %v581
  %v649 = vpop.f32.mrb[0].mxu0
  %v650 = vadd.f32 0.0, %v649
  %v651 = vpop.f32.mrb[0].mxu0
  %652 = vdwg.mxu0
  %654 = vrot.lane.b32.xlu0 %v572, 96
  %v655 = vpop.permute.xlu0 %654
  %v656 = vsel %vm140, %v655, 0
  %658 = vmatprep.subr.mxu0 0.0
  %659 = vmatpush1.msra.mxu0 %v151
  %660 = vmatprep.subr.mxu0 0.0
  %661 = vmatpush1.msra.mxu0 %v152
  %662 = vmatprep.subr.mxu0 0.0
  %663 = vmatpush1.msra.mxu0 %v153
  %664 = vmatprep.subr.mxu0 0.0
  %665 = vmatpush1.msra.mxu0 %v154
  %666 = vmatprep.subr.mxu0 0.0
  %667 = vmatpush1.msra.mxu0 0.0
  %668 = vmatprep.subr.mxu0 0.0
  %669 = vmatpush1.msra.mxu0 0.0
  %670 = vmatprep.subr.mxu0 0.0
  %671 = vmatpush1.msra.mxu0 0.0
  %672 = vmatprep.subr.mxu0 0.0
  %673 = vmatpush1.msra.mxu0 0.0
  %674 = vmatprep.subr.mxu0 0.0
  %675 = vmatpush1.msra.mxu0 0.0
  %676 = vmatprep.subr.mxu0 0.0
  %677 = vmatpush1.msra.mxu0 0.0
  %678 = vmatprep.subr.mxu0 0.0
  %679 = vmatpush1.msra.mxu0 0.0
  %680 = vmatprep.subr.mxu0 0.0
  %681 = vmatpush1.msra.mxu0 0.0
  %682 = vmatprep.subr.mxu0 0.0
  %683 = vmatpush1.msra.mxu0 0.0
  %684 = vmatprep.subr.mxu0 0.0
  %685 = vmatpush1.msra.mxu0 0.0
  %686 = vmatprep.subr.mxu0 0.0
  %687 = vmatpush1.msra.mxu0 0.0
  %688 = vmatprep.subr.mxu0 0.0
  %689 = vmatpush1.msra.mxu0 0.0
  %690 = vmatprep.subr.mxu0 0.0
  %691 = vmatpush1.msra.mxu0 0.0
  %692 = vmatprep.subr.mxu0 0.0
  %693 = vmatpush1.msra.mxu0 0.0
  %694 = vmatprep.subr.mxu0 0.0
  %695 = vmatpush1.msra.mxu0 0.0
  %696 = vmatprep.subr.mxu0 0.0
  %697 = vmatpush1.msra.mxu0 0.0
  %698 = vmatprep.subr.mxu0 0.0
  %699 = vmatpush1.msra.mxu0 0.0
  %700 = vmatprep.subr.mxu0 0.0
  %701 = vmatpush1.msra.mxu0 0.0
  %702 = vmatprep.subr.mxu0 0.0
  %703 = vmatpush1.msra.mxu0 0.0
  %704 = vmatprep.subr.mxu0 0.0
  %705 = vmatpush1.msra.mxu0 0.0
  %706 = vmatprep.subr.mxu0 0.0
  %707 = vmatpush1.msra.mxu0 0.0
  %708 = vmatprep.subr.mxu0 0.0
  %709 = vmatpush1.msra.mxu0 0.0
  %710 = vmatprep.subr.mxu0 0.0
  %711 = vmatpush1.msra.mxu0 0.0
  %712 = vmatprep.subr.mxu0 0.0
  %713 = vmatpush1.msra.mxu0 0.0
  %714 = vmatprep.subr.mxu0 0.0
  %715 = vmatpush1.msra.mxu0 0.0
  %716 = vmatprep.subr.mxu0 0.0
  %717 = vmatpush1.msra.mxu0 0.0
  %718 = vmatprep.subr.mxu0 0.0
  %719 = vmatpush1.msra.mxu0 0.0
  %720 = vmatprep.subr.mxu0 0.0
  %721 = vmatpush1.msra.mxu0 0.0
  %722 = vmatprep.mubr.f32.mxu0 0.0
  %723 = vmatmul.mubr.f32.gmra.mrb[0].mxu0 %v656
  %v724 = vpop.f32.mrb[0].mxu0
  %v725 = vadd.f32 0.0, %v724
  %v726 = vpop.f32.mrb[0].mxu0
  %727 = vdwg.mxu0
  %s728 = scalar_lea.vmem [#allocation2], 4
  %v729 = vld [vmem:[%s728] sm:$0x3]
  %v730 = vadd.f32 %v729, %v650
  %v731 = vmul.f32 %v730, 0.5
  %v732 = vtanh.pop %v731
  %v733 = vadd.f32 %v732, 1.0
  %v734 = vmul.f32 %v733, 0.5
  %v735 = vadd.f32 %v650, %v311
  %737 = vrot.lane.b32.xlu0 %v735, 64
  %v738 = vpop.permute.xlu0 %737
  %v740 = vmul.f32 %v734, %v738
  %742 = vrot.lane.b32.xlu0 %v740, 64
  %v743 = vpop.permute.xlu0 %742
  %v745 = vadd.f32 %v729, %v743
  %v746 = vtanh.pop %v745
  %v747 = vsub.f32 1.0, %v734
  %749 = vrot.lane.b32.xlu0 %v746, 96
  %v750 = vpop.permute.xlu0 %749
  %v752 = vmul.f32 %v747, %v750
  %v753 = vmul.f32 %v734, %v545
  %v754 = vadd.f32 %v752, %v753
  %s755 = scalar_lea.vmem [#allocation3], 10
  %v756 = vld [vmem:[%s755] sm:$0x3]
  %v757 = vadd.f32 %v756, %v725
  %v758 = vmul.f32 %v757, 0.5
  %v759 = vtanh.pop %v758
  %v760 = vadd.f32 %v759, 1.0
  %v761 = vmul.f32 %v760, 0.5
  %v762 = vadd.f32 %v725, %v341
  %764 = vrot.lane.b32.xlu0 %v762, 64
  %v765 = vpop.permute.xlu0 %764
  %v767 = vmul.f32 %v761, %v765
  %769 = vrot.lane.b32.xlu0 %v767, 64
  %v770 = vpop.permute.xlu0 %769
  %v772 = vadd.f32 %v756, %v770
  %v773 = vtanh.pop %v772
  %v774 = vsub.f32 1.0, %v761
  %776 = vrot.lane.b32.xlu0 %v773, 96
  %v777 = vpop.permute.xlu0 %776
  %v779 = vmul.f32 %v774, %v777
  %v780 = vmul.f32 %v761, %v572
  %v781 = vadd.f32 %v779, %v780
  %783 = vrot.lane.b32.xlu0 %v754, 96
  %v784 = vpop.permute.xlu0 %783
  %s786 = scalar_lea.vmem %s6, 4
  %787 = vst.msk [vmem:[%s786] sm:$0x3] %vm367, %v784
  %s788 = scalar_lea.vmem %s6, 10
  %789 = vst.msk [vmem:[%s788] sm:$0x3] %vm370, %v781
  %v790 = vsel %vm140, %v784, 0
  %792 = vmatprep.subr.mxu0 0.0
  %793 = vmatpush1.msra.mxu0 %v147
  %794 = vmatprep.subr.mxu0 0.0
  %795 = vmatpush1.msra.mxu0 %v148
  %796 = vmatprep.subr.mxu0 0.0
  %797 = vmatpush1.msra.mxu0 %v149
  %798 = vmatprep.subr.mxu0 0.0
  %799 = vmatpush1.msra.mxu0 %v150
  %800 = vmatprep.subr.mxu0 0.0
  %801 = vmatpush1.msra.mxu0 0.0
  %802 = vmatprep.subr.mxu0 0.0
  %803 = vmatpush1.msra.mxu0 0.0
  %804 = vmatprep.subr.mxu0 0.0
  %805 = vmatpush1.msra.mxu0 0.0
  %806 = vmatprep.subr.mxu0 0.0
  %807 = vmatpush1.msra.mxu0 0.0
  %808 = vmatprep.subr.mxu0 0.0
  %809 = vmatpush1.msra.mxu0 0.0
  %810 = vmatprep.subr.mxu0 0.0
  %811 = vmatpush1.msra.mxu0 0.0
  %812 = vmatprep.subr.mxu0 0.0
  %813 = vmatpush1.msra.mxu0 0.0
  %814 = vmatprep.subr.mxu0 0.0
  %815 = vmatpush1.msra.mxu0 0.0
  %816 = vmatprep.subr.mxu0 0.0
  %817 = vmatpush1.msra.mxu0 0.0
  %818 = vmatprep.subr.mxu0 0.0
  %819 = vmatpush1.msra.mxu0 0.0
  %820 = vmatprep.subr.mxu0 0.0
  %821 = vmatpush1.msra.mxu0 0.0
  %822 = vmatprep.subr.mxu0 0.0
  %823 = vmatpush1.msra.mxu0 0.0
  %824 = vmatprep.subr.mxu0 0.0
  %825 = vmatpush1.msra.mxu0 0.0
  %826 = vmatprep.subr.mxu0 0.0
  %827 = vmatpush1.msra.mxu0 0.0
  %828 = vmatprep.subr.mxu0 0.0
  %829 = vmatpush1.msra.mxu0 0.0
  %830 = vmatprep.subr.mxu0 0.0
  %831 = vmatpush1.msra.mxu0 0.0
  %832 = vmatprep.subr.mxu0 0.0
  %833 = vmatpush1.msra.mxu0 0.0
  %834 = vmatprep.subr.mxu0 0.0
  %835 = vmatpush1.msra.mxu0 0.0
  %836 = vmatprep.subr.mxu0 0.0
  %837 = vmatpush1.msra.mxu0 0.0
  %838 = vmatprep.subr.mxu0 0.0
  %839 = vmatpush1.msra.mxu0 0.0
  %840 = vmatprep.subr.mxu0 0.0
  %841 = vmatpush1.msra.mxu0 0.0
  %842 = vmatprep.subr.mxu0 0.0
  %843 = vmatpush1.msra.mxu0 0.0
  %844 = vmatprep.subr.mxu0 0.0
  %845 = vmatpush1.msra.mxu0 0.0
  %846 = vmatprep.subr.mxu0 0.0
  %847 = vmatpush1.msra.mxu0 0.0
  %848 = vmatprep.subr.mxu0 0.0
  %849 = vmatpush1.msra.mxu0 0.0
  %850 = vmatprep.subr.mxu0 0.0
  %851 = vmatpush1.msra.mxu0 0.0
  %852 = vmatprep.subr.mxu0 0.0
  %853 = vmatpush1.msra.mxu0 0.0
  %854 = vmatprep.subr.mxu0 0.0
  %855 = vmatpush1.msra.mxu0 0.0
  %856 = vmatprep.mubr.f32.mxu0 0.0
  %857 = vmatmul.mubr.f32.gmra.mrb[0].mxu0 %v790
  %v858 = vpop.f32.mrb[0].mxu0
  %v859 = vadd.f32 0.0, %v858
  %v860 = vpop.f32.mrb[0].mxu0
  %861 = vdwg.mxu0
  %863 = vrot.lane.b32.xlu0 %v781, 96
  %v864 = vpop.permute.xlu0 %863
  %v865 = vsel %vm140, %v864, 0
  %867 = vmatprep.subr.mxu0 0.0
  %868 = vmatpush1.msra.mxu0 %v151
  %869 = vmatprep.subr.mxu0 0.0
  %870 = vmatpush1.msra.mxu0 %v152
  %871 = vmatprep.subr.mxu0 0.0
  %872 = vmatpush1.msra.mxu0 %v153
  %873 = vmatprep.subr.mxu0 0.0
  %874 = vmatpush1.msra.mxu0 %v154
  %875 = vmatprep.subr.mxu0 0.0
  %876 = vmatpush1.msra.mxu0 0.0
  %877 = vmatprep.subr.mxu0 0.0
  %878 = vmatpush1.msra.mxu0 0.0
  %879 = vmatprep.subr.mxu0 0.0
  %880 = vmatpush1.msra.mxu0 0.0
  %881 = vmatprep.subr.mxu0 0.0
  %882 = vmatpush1.msra.mxu0 0.0
  %883 = vmatprep.subr.mxu0 0.0
  %884 = vmatpush1.msra.mxu0 0.0
  %885 = vmatprep.subr.mxu0 0.0
  %886 = vmatpush1.msra.mxu0 0.0
  %887 = vmatprep.subr.mxu0 0.0
  %888 = vmatpush1.msra.mxu0 0.0
  %889 = vmatprep.subr.mxu0 0.0
  %890 = vmatpush1.msra.mxu0 0.0
  %891 = vmatprep.subr.mxu0 0.0
  %892 = vmatpush1.msra.mxu0 0.0
  %893 = vmatprep.subr.mxu0 0.0
  %894 = vmatpush1.msra.mxu0 0.0
  %895 = vmatprep.subr.mxu0 0.0
  %896 = vmatpush1.msra.mxu0 0.0
  %897 = vmatprep.subr.mxu0 0.0
  %898 = vmatpush1.msra.mxu0 0.0
  %899 = vmatprep.subr.mxu0 0.0
  %900 = vmatpush1.msra.mxu0 0.0
  %901 = vmatprep.subr.mxu0 0.0
  %902 = vmatpush1.msra.mxu0 0.0
  %903 = vmatprep.subr.mxu0 0.0
  %904 = vmatpush1.msra.mxu0 0.0
  %905 = vmatprep.subr.mxu0 0.0
  %906 = vmatpush1.msra.mxu0 0.0
  %907 = vmatprep.subr.mxu0 0.0
  %908 = vmatpush1.msra.mxu0 0.0
  %909 = vmatprep.subr.mxu0 0.0
  %910 = vmatpush1.msra.mxu0 0.0
  %911 = vmatprep.subr.mxu0 0.0
  %912 = vmatpush1.msra.mxu0 0.0
  %913 = vmatprep.subr.mxu0 0.0
  %914 = vmatpush1.msra.mxu0 0.0
  %915 = vmatprep.subr.mxu0 0.0
  %916 = vmatpush1.msra.mxu0 0.0
  %917 = vmatprep.subr.mxu0 0.0
  %918 = vmatpush1.msra.mxu0 0.0
  %919 = vmatprep.subr.mxu0 0.0
  %920 = vmatpush1.msra.mxu0 0.0
  %921 = vmatprep.subr.mxu0 0.0
  %922 = vmatpush1.msra.mxu0 0.0
  %923 = vmatprep.subr.mxu0 0.0
  %924 = vmatpush1.msra.mxu0 0.0
  %925 = vmatprep.subr.mxu0 0.0
  %926 = vmatpush1.msra.mxu0 0.0
  %927 = vmatprep.subr.mxu0 0.0
  %928 = vmatpush1.msra.mxu0 0.0
  %929 = vmatprep.subr.mxu0 0.0
  %930 = vmatpush1.msra.mxu0 0.0
  %931 = vmatprep.mubr.f32.mxu0 0.0
  %932 = vmatmul.mubr.f32.gmra.mrb[0].mxu0 %v865
  %v933 = vpop.f32.mrb[0].mxu0
  %v934 = vadd.f32 0.0, %v933
  %v935 = vpop.f32.mrb[0].mxu0
  %936 = vdwg.mxu0
  %s937 = scalar_lea.vmem [#allocation2], 6
  %v938 = vld [vmem:[%s937] sm:$0x3]
  %v939 = vadd.f32 %v938, %v859
  %v940 = vmul.f32 %v939, 0.5
  %v941 = vtanh.pop %v940
  %v942 = vadd.f32 %v941, 1.0
  %v943 = vmul.f32 %v942, 0.5
  %v944 = vadd.f32 %v859, %v311
  %946 = vrot.lane.b32.xlu0 %v944, 64
  %v947 = vpop.permute.xlu0 %946
  %v949 = vmul.f32 %v943, %v947
  %951 = vrot.lane.b32.xlu0 %v949, 64
  %v952 = vpop.permute.xlu0 %951
  %v954 = vadd.f32 %v938, %v952
  %v955 = vtanh.pop %v954
  %v956 = vsub.f32 1.0, %v943
  %958 = vrot.lane.b32.xlu0 %v955, 96
  %v959 = vpop.permute.xlu0 %958
  %v961 = vmul.f32 %v956, %v959
  %v962 = vmul.f32 %v943, %v754
  %v963 = vadd.f32 %v961, %v962
  %s964 = scalar_lea.vmem [#allocation3], 8
  %v965 = vld [vmem:[%s964] sm:$0x3]
  %v966 = vadd.f32 %v965, %v934
  %v967 = vmul.f32 %v966, 0.5
  %v968 = vtanh.pop %v967
  %v969 = vadd.f32 %v968, 1.0
  %v970 = vmul.f32 %v969, 0.5
  %v971 = vadd.f32 %v934, %v341
  %973 = vrot.lane.b32.xlu0 %v971, 64
  %v974 = vpop.permute.xlu0 %973
  %v976 = vmul.f32 %v970, %v974
  %978 = vrot.lane.b32.xlu0 %v976, 64
  %v979 = vpop.permute.xlu0 %978
  %v981 = vadd.f32 %v965, %v979
  %v982 = vtanh.pop %v981
  %v983 = vsub.f32 1.0, %v970
  %985 = vrot.lane.b32.xlu0 %v982, 96
  %v986 = vpop.permute.xlu0 %985
  %v988 = vmul.f32 %v983, %v986
  %v989 = vmul.f32 %v970, %v781
  %v990 = vadd.f32 %v988, %v989
  %992 = vrot.lane.b32.xlu0 %v963, 96
  %v993 = vpop.permute.xlu0 %992
  %s995 = scalar_lea.vmem %s6, 6
  %996 = vst.msk [vmem:[%s995] sm:$0x3] %vm367, %v993
  %s997 = scalar_lea.vmem %s6, 8
  %998 = vst.msk [vmem:[%s997] sm:$0x3] %vm370, %v990
  %v999 = vsel %vm140, %v993, 0
  %1001 = vmatprep.subr.mxu0 0.0
  %1002 = vmatpush1.msra.mxu0 %v147
  %1003 = vmatprep.subr.mxu0 0.0
  %1004 = vmatpush1.msra.mxu0 %v148
  %1005 = vmatprep.subr.mxu0 0.0
  %1006 = vmatpush1.msra.mxu0 %v149
  %1007 = vmatprep.subr.mxu0 0.0
  %1008 = vmatpush1.msra.mxu0 %v150
  %1009 = vmatprep.subr.mxu0 0.0
  %1010 = vmatpush1.msra.mxu0 0.0
  %1011 = vmatprep.subr.mxu0 0.0
  %1012 = vmatpush1.msra.mxu0 0.0
  %1013 = vmatprep.subr.mxu0 0.0
  %1014 = vmatpush1.msra.mxu0 0.0
  %1015 = vmatprep.subr.mxu0 0.0
  %1016 = vmatpush1.msra.mxu0 0.0
  %1017 = vmatprep.subr.mxu0 0.0
  %1018 = vmatpush1.msra.mxu0 0.0
  %1019 = vmatprep.subr.mxu0 0.0
  %1020 = vmatpush1.msra.mxu0 0.0
  %1021 = vmatprep.subr.mxu0 0.0
  %1022 = vmatpush1.msra.mxu0 0.0
  %1023 = vmatprep.subr.mxu0 0.0
  %1024 = vmatpush1.msra.mxu0 0.0
  %1025 = vmatprep.subr.mxu0 0.0
  %1026 = vmatpush1.msra.mxu0 0.0
  %1027 = vmatprep.subr.mxu0 0.0
  %1028 = vmatpush1.msra.mxu0 0.0
  %1029 = vmatprep.subr.mxu0 0.0
  %1030 = vmatpush1.msra.mxu0 0.0
  %1031 = vmatprep.subr.mxu0 0.0
  %1032 = vmatpush1.msra.mxu0 0.0
  %1033 = vmatprep.subr.mxu0 0.0
  %1034 = vmatpush1.msra.mxu0 0.0
  %1035 = vmatprep.subr.mxu0 0.0
  %1036 = vmatpush1.msra.mxu0 0.0
  %1037 = vmatprep.subr.mxu0 0.0
  %1038 = vmatpush1.msra.mxu0 0.0
  %1039 = vmatprep.subr.mxu0 0.0
  %1040 = vmatpush1.msra.mxu0 0.0
  %1041 = vmatprep.subr.mxu0 0.0
  %1042 = vmatpush1.msra.mxu0 0.0
  %1043 = vmatprep.subr.mxu0 0.0
  %1044 = vmatpush1.msra.mxu0 0.0
  %1045 = vmatprep.subr.mxu0 0.0
  %1046 = vmatpush1.msra.mxu0 0.0
  %1047 = vmatprep.subr.mxu0 0.0
  %1048 = vmatpush1.msra.mxu0 0.0
  %1049 = vmatprep.subr.mxu0 0.0
  %1050 = vmatpush1.msra.mxu0 0.0
  %1051 = vmatprep.subr.mxu0 0.0
  %1052 = vmatpush1.msra.mxu0 0.0
  %1053 = vmatprep.subr.mxu0 0.0
  %1054 = vmatpush1.msra.mxu0 0.0
  %1055 = vmatprep.subr.mxu0 0.0
  %1056 = vmatpush1.msra.mxu0 0.0
  %1057 = vmatprep.subr.mxu0 0.0
  %1058 = vmatpush1.msra.mxu0 0.0
  %1059 = vmatprep.subr.mxu0 0.0
  %1060 = vmatpush1.msra.mxu0 0.0
  %1061 = vmatprep.subr.mxu0 0.0
  %1062 = vmatpush1.msra.mxu0 0.0
  %1063 = vmatprep.subr.mxu0 0.0
  %1064 = vmatpush1.msra.mxu0 0.0
  %1065 = vmatprep.mubr.f32.mxu0 0.0
  %1066 = vmatmul.mubr.f32.gmra.mrb[0].mxu0 %v999
  %v1067 = vpop.f32.mrb[0].mxu0
  %v1068 = vadd.f32 0.0, %v1067
  %v1069 = vpop.f32.mrb[0].mxu0
  %1070 = vdwg.mxu0
  %1072 = vrot.lane.b32.xlu0 %v990, 96
  %v1073 = vpop.permute.xlu0 %1072
  %v1074 = vsel %vm140, %v1073, 0
  %1076 = vmatprep.subr.mxu0 0.0
  %1077 = vmatpush1.msra.mxu0 %v151
  %1078 = vmatprep.subr.mxu0 0.0
  %1079 = vmatpush1.msra.mxu0 %v152
  %1080 = vmatprep.subr.mxu0 0.0
  %1081 = vmatpush1.msra.mxu0 %v153
  %1082 = vmatprep.subr.mxu0 0.0
  %1083 = vmatpush1.msra.mxu0 %v154
  %1084 = vmatprep.subr.mxu0 0.0
  %1085 = vmatpush1.msra.mxu0 0.0
  %1086 = vmatprep.subr.mxu0 0.0
  %1087 = vmatpush1.msra.mxu0 0.0
  %1088 = vmatprep.subr.mxu0 0.0
  %1089 = vmatpush1.msra.mxu0 0.0
  %1090 = vmatprep.subr.mxu0 0.0
  %1091 = vmatpush1.msra.mxu0 0.0
  %1092 = vmatprep.subr.mxu0 0.0
  %1093 = vmatpush1.msra.mxu0 0.0
  %1094 = vmatprep.subr.mxu0 0.0
  %1095 = vmatpush1.msra.mxu0 0.0
  %1096 = vmatprep.subr.mxu0 0.0
  %1097 = vmatpush1.msra.mxu0 0.0
  %1098 = vmatprep.subr.mxu0 0.0
  %1099 = vmatpush1.msra.mxu0 0.0
  %1100 = vmatprep.subr.mxu0 0.0
  %1101 = vmatpush1.msra.mxu0 0.0
  %1102 = vmatprep.subr.mxu0 0.0
  %1103 = vmatpush1.msra.mxu0 0.0
  %1104 = vmatprep.subr.mxu0 0.0
  %1105 = vmatpush1.msra.mxu0 0.0
  %1106 = vmatprep.subr.mxu0 0.0
  %1107 = vmatpush1.msra.mxu0 0.0
  %1108 = vmatprep.subr.mxu0 0.0
  %1109 = vmatpush1.msra.mxu0 0.0
  %1110 = vmatprep.subr.mxu0 0.0
  %1111 = vmatpush1.msra.mxu0 0.0
  %1112 = vmatprep.subr.mxu0 0.0
  %1113 = vmatpush1.msra.mxu0 0.0
  %1114 = vmatprep.subr.mxu0 0.0
  %1115 = vmatpush1.msra.mxu0 0.0
  %1116 = vmatprep.subr.mxu0 0.0
  %1117 = vmatpush1.msra.mxu0 0.0
  %1118 = vmatprep.subr.mxu0 0.0
  %1119 = vmatpush1.msra.mxu0 0.0
  %1120 = vmatprep.subr.mxu0 0.0
  %1121 = vmatpush1.msra.mxu0 0.0
  %1122 = vmatprep.subr.mxu0 0.0
  %1123 = vmatpush1.msra.mxu0 0.0
  %1124 = vmatprep.subr.mxu0 0.0
  %1125 = vmatpush1.msra.mxu0 0.0
  %1126 = vmatprep.subr.mxu0 0.0
  %1127 = vmatpush1.msra.mxu0 0.0
  %1128 = vmatprep.subr.mxu0 0.0
  %1129 = vmatpush1.msra.mxu0 0.0
  %1130 = vmatprep.subr.mxu0 0.0
  %1131 = vmatpush1.msra.mxu0 0.0
  %1132 = vmatprep.subr.mxu0 0.0
  %1133 = vmatpush1.msra.mxu0 0.0
  %1134 = vmatprep.subr.mxu0 0.0
  %1135 = vmatpush1.msra.mxu0 0.0
  %1136 = vmatprep.subr.mxu0 0.0
  %1137 = vmatpush1.msra.mxu0 0.0
  %1138 = vmatprep.subr.mxu0 0.0
  %1139 = vmatpush1.msra.mxu0 0.0
  %1140 = vmatprep.mubr.f32.mxu0 0.0
  %1141 = vmatmul.mubr.f32.gmra.mrb[0].mxu0 %v1074
  %v1142 = vpop.f32.mrb[0].mxu0
  %v1143 = vadd.f32 0.0, %v1142
  %v1144 = vpop.f32.mrb[0].mxu0
  %1145 = vdwg.mxu0
  %s1146 = scalar_lea.vmem [#allocation2], 8
  %v1147 = vld [vmem:[%s1146] sm:$0x3]
  %v1148 = vadd.f32 %v1147, %v1068
  %v1149 = vmul.f32 %v1148, 0.5
  %v1150 = vtanh.pop %v1149
  %v1151 = vadd.f32 %v1150, 1.0
  %v1152 = vmul.f32 %v1151, 0.5
  %v1153 = vadd.f32 %v1068, %v311
  %1155 = vrot.lane.b32.xlu0 %v1153, 64
  %v1156 = vpop.permute.xlu0 %1155
  %v1158 = vmul.f32 %v1152, %v1156
  %1160 = vrot.lane.b32.xlu0 %v1158, 64
  %v1161 = vpop.permute.xlu0 %1160
  %v1163 = vadd.f32 %v1147, %v1161
  %v1164 = vtanh.pop %v1163
  %v1165 = vsub.f32 1.0, %v1152
  %1167 = vrot.lane.b32.xlu0 %v1164, 96
  %v1168 = vpop.permute.xlu0 %1167
  %v1170 = vmul.f32 %v1165, %v1168
  %v1171 = vmul.f32 %v1152, %v963
  %v1172 = vadd.f32 %v1170, %v1171
  %s1173 = scalar_lea.vmem [#allocation3], 6
  %v1174 = vld [vmem:[%s1173] sm:$0x3]
  %v1175 = vadd.f32 %v1174, %v1143
  %v1176 = vmul.f32 %v1175, 0.5
  %v1177 = vtanh.pop %v1176
  %v1178 = vadd.f32 %v1177, 1.0
  %v1179 = vmul.f32 %v1178, 0.5
  %v1180 = vadd.f32 %v1143, %v341
  %1182 = vrot.lane.b32.xlu0 %v1180, 64
  %v1183 = vpop.permute.xlu0 %1182
  %v1185 = vmul.f32 %v1179, %v1183
  %1187 = vrot.lane.b32.xlu0 %v1185, 64
  %v1188 = vpop.permute.xlu0 %1187
  %v1190 = vadd.f32 %v1174, %v1188
  %v1191 = vtanh.pop %v1190
  %v1192 = vsub.f32 1.0, %v1179
  %1194 = vrot.lane.b32.xlu0 %v1191, 96
  %v1195 = vpop.permute.xlu0 %1194
  %v1197 = vmul.f32 %v1192, %v1195
  %v1198 = vmul.f32 %v1179, %v990
  %v1199 = vadd.f32 %v1197, %v1198
  %1201 = vrot.lane.b32.xlu0 %v1172, 96
  %v1202 = vpop.permute.xlu0 %1201
  %1204 = vst.msk [vmem:[%s997] sm:$0x3] %vm367, %v1202
  %1205 = vst.msk [vmem:[%s995] sm:$0x3] %vm370, %v1199
  %v1206 = vsel %vm140, %v1202, 0
  %1208 = vmatprep.subr.mxu0 0.0
  %1209 = vmatpush1.msra.mxu0 %v147
  %1210 = vmatprep.subr.mxu0 0.0
  %1211 = vmatpush1.msra.mxu0 %v148
  %1212 = vmatprep.subr.mxu0 0.0
  %1213 = vmatpush1.msra.mxu0 %v149
  %1214 = vmatprep.subr.mxu0 0.0
  %1215 = vmatpush1.msra.mxu0 %v150
  %1216 = vmatprep.subr.mxu0 0.0
  %1217 = vmatpush1.msra.mxu0 0.0
  %1218 = vmatprep.subr.mxu0 0.0
  %1219 = vmatpush1.msra.mxu0 0.0
  %1220 = vmatprep.subr.mxu0 0.0
  %1221 = vmatpush1.msra.mxu0 0.0
  %1222 = vmatprep.subr.mxu0 0.0
  %1223 = vmatpush1.msra.mxu0 0.0
  %1224 = vmatprep.subr.mxu0 0.0
  %1225 = vmatpush1.msra.mxu0 0.0
  %1226 = vmatprep.subr.mxu0 0.0
  %1227 = vmatpush1.msra.mxu0 0.0
  %1228 = vmatprep.subr.mxu0 0.0
  %1229 = vmatpush1.msra.mxu0 0.0
  %1230 = vmatprep.subr.mxu0 0.0
  %1231 = vmatpush1.msra.mxu0 0.0
  %1232 = vmatprep.subr.mxu0 0.0
  %1233 = vmatpush1.msra.mxu0 0.0
  %1234 = vmatprep.subr.mxu0 0.0
  %1235 = vmatpush1.msra.mxu0 0.0
  %1236 = vmatprep.subr.mxu0 0.0
  %1237 = vmatpush1.msra.mxu0 0.0
  %1238 = vmatprep.subr.mxu0 0.0
  %1239 = vmatpush1.msra.mxu0 0.0
  %1240 = vmatprep.subr.mxu0 0.0
  %1241 = vmatpush1.msra.mxu0 0.0
  %1242 = vmatprep.subr.mxu0 0.0
  %1243 = vmatpush1.msra.mxu0 0.0
  %1244 = vmatprep.subr.mxu0 0.0
  %1245 = vmatpush1.msra.mxu0 0.0
  %1246 = vmatprep.subr.mxu0 0.0
  %1247 = vmatpush1.msra.mxu0 0.0
  %1248 = vmatprep.subr.mxu0 0.0
  %1249 = vmatpush1.msra.mxu0 0.0
  %1250 = vmatprep.subr.mxu0 0.0
  %1251 = vmatpush1.msra.mxu0 0.0
  %1252 = vmatprep.subr.mxu0 0.0
  %1253 = vmatpush1.msra.mxu0 0.0
  %1254 = vmatprep.subr.mxu0 0.0
  %1255 = vmatpush1.msra.mxu0 0.0
  %1256 = vmatprep.subr.mxu0 0.0
  %1257 = vmatpush1.msra.mxu0 0.0
  %1258 = vmatprep.subr.mxu0 0.0
  %1259 = vmatpush1.msra.mxu0 0.0
  %1260 = vmatprep.subr.mxu0 0.0
  %1261 = vmatpush1.msra.mxu0 0.0
  %1262 = vmatprep.subr.mxu0 0.0
  %1263 = vmatpush1.msra.mxu0 0.0
  %1264 = vmatprep.subr.mxu0 0.0
  %1265 = vmatpush1.msra.mxu0 0.0
  %1266 = vmatprep.subr.mxu0 0.0
  %1267 = vmatpush1.msra.mxu0 0.0
  %1268 = vmatprep.subr.mxu0 0.0
  %1269 = vmatpush1.msra.mxu0 0.0
  %1270 = vmatprep.subr.mxu0 0.0
  %1271 = vmatpush1.msra.mxu0 0.0
  %1272 = vmatprep.mubr.f32.mxu0 0.0
  %1273 = vmatmul.mubr.f32.gmra.mrb[0].mxu0 %v1206
  %v1274 = vpop.f32.mrb[0].mxu0
  %v1275 = vadd.f32 0.0, %v1274
  %v1276 = vpop.f32.mrb[0].mxu0
  %1277 = vdwg.mxu0
  %1279 = vrot.lane.b32.xlu0 %v1199, 96
  %v1280 = vpop.permute.xlu0 %1279
  %v1281 = vsel %vm140, %v1280, 0
  %1283 = vmatprep.subr.mxu0 0.0
  %1284 = vmatpush1.msra.mxu0 %v151
  %1285 = vmatprep.subr.mxu0 0.0
  %1286 = vmatpush1.msra.mxu0 %v152
  %1287 = vmatprep.subr.mxu0 0.0
  %1288 = vmatpush1.msra.mxu0 %v153
  %1289 = vmatprep.subr.mxu0 0.0
  %1290 = vmatpush1.msra.mxu0 %v154
  %1291 = vmatprep.subr.mxu0 0.0
  %1292 = vmatpush1.msra.mxu0 0.0
  %1293 = vmatprep.subr.mxu0 0.0
  %1294 = vmatpush1.msra.mxu0 0.0
  %1295 = vmatprep.subr.mxu0 0.0
  %1296 = vmatpush1.msra.mxu0 0.0
  %1297 = vmatprep.subr.mxu0 0.0
  %1298 = vmatpush1.msra.mxu0 0.0
  %1299 = vmatprep.subr.mxu0 0.0
  %1300 = vmatpush1.msra.mxu0 0.0
  %1301 = vmatprep.subr.mxu0 0.0
  %1302 = vmatpush1.msra.mxu0 0.0
  %1303 = vmatprep.subr.mxu0 0.0
  %1304 = vmatpush1.msra.mxu0 0.0
  %1305 = vmatprep.subr.mxu0 0.0
  %1306 = vmatpush1.msra.mxu0 0.0
  %1307 = vmatprep.subr.mxu0 0.0
  %1308 = vmatpush1.msra.mxu0 0.0
  %1309 = vmatprep.subr.mxu0 0.0
  %1310 = vmatpush1.msra.mxu0 0.0
  %1311 = vmatprep.subr.mxu0 0.0
  %1312 = vmatpush1.msra.mxu0 0.0
  %1313 = vmatprep.subr.mxu0 0.0
  %1314 = vmatpush1.msra.mxu0 0.0
  %1315 = vmatprep.subr.mxu0 0.0
  %1316 = vmatpush1.msra.mxu0 0.0
  %1317 = vmatprep.subr.mxu0 0.0
  %1318 = vmatpush1.msra.mxu0 0.0
  %1319 = vmatprep.subr.mxu0 0.0
  %1320 = vmatpush1.msra.mxu0 0.0
  %1321 = vmatprep.subr.mxu0 0.0
  %1322 = vmatpush1.msra.mxu0 0.0
  %1323 = vmatprep.subr.mxu0 0.0
  %1324 = vmatpush1.msra.mxu0 0.0
  %1325 = vmatprep.subr.mxu0 0.0
  %1326 = vmatpush1.msra.mxu0 0.0
  %1327 = vmatprep.subr.mxu0 0.0
  %1328 = vmatpush1.msra.mxu0 0.0
  %1329 = vmatprep.subr.mxu0 0.0
  %1330 = vmatpush1.msra.mxu0 0.0
  %1331 = vmatprep.subr.mxu0 0.0
  %1332 = vmatpush1.msra.mxu0 0.0
  %1333 = vmatprep.subr.mxu0 0.0
  %1334 = vmatpush1.msra.mxu0 0.0
  %1335 = vmatprep.subr.mxu0 0.0
  %1336 = vmatpush1.msra.mxu0 0.0
  %1337 = vmatprep.subr.mxu0 0.0
  %1338 = vmatpush1.msra.mxu0 0.0
  %1339 = vmatprep.subr.mxu0 0.0
  %1340 = vmatpush1.msra.mxu0 0.0
  %1341 = vmatprep.subr.mxu0 0.0
  %1342 = vmatpush1.msra.mxu0 0.0
  %1343 = vmatprep.subr.mxu0 0.0
  %1344 = vmatpush1.msra.mxu0 0.0
  %1345 = vmatprep.subr.mxu0 0.0
  %1346 = vmatpush1.msra.mxu0 0.0
  %1347 = vmatprep.mubr.f32.mxu0 0.0
  %1348 = vmatmul.mubr.f32.gmra.mrb[0].mxu0 %v1281
  %v1349 = vpop.f32.mrb[0].mxu0
  %v1350 = vadd.f32 0.0, %v1349
  %v1351 = vpop.f32.mrb[0].mxu0
  %1352 = vdwg.mxu0
  %s1353 = scalar_lea.vmem [#allocation2], 10
  %v1354 = vld [vmem:[%s1353] sm:$0x3]
  %v1355 = vadd.f32 %v1354, %v1275
  %v1356 = vmul.f32 %v1355, 0.5
  %v1357 = vtanh.pop %v1356
  %v1358 = vadd.f32 %v1357, 1.0
  %v1359 = vmul.f32 %v1358, 0.5
  %v1360 = vadd.f32 %v1275, %v311
  %1362 = vrot.lane.b32.xlu0 %v1360, 64
  %v1363 = vpop.permute.xlu0 %1362
  %v1365 = vmul.f32 %v1359, %v1363
  %1367 = vrot.lane.b32.xlu0 %v1365, 64
  %v1368 = vpop.permute.xlu0 %1367
  %v1370 = vadd.f32 %v1354, %v1368
  %v1371 = vtanh.pop %v1370
  %v1372 = vsub.f32 1.0, %v1359
  %1374 = vrot.lane.b32.xlu0 %v1371, 96
  %v1375 = vpop.permute.xlu0 %1374
  %v1377 = vmul.f32 %v1372, %v1375
  %v1378 = vmul.f32 %v1359, %v1172
  %v1379 = vadd.f32 %v1377, %v1378
  %s1380 = scalar_lea.vmem [#allocation3], 4
  %v1381 = vld [vmem:[%s1380] sm:$0x3]
  %v1382 = vadd.f32 %v1381, %v1350
  %v1383 = vmul.f32 %v1382, 0.5
  %v1384 = vtanh.pop %v1383
  %v1385 = vadd.f32 %v1384, 1.0
  %v1386 = vmul.f32 %v1385, 0.5
  %v1387 = vadd.f32 %v1350, %v341
  %1389 = vrot.lane.b32.xlu0 %v1387, 64
  %v1390 = vpop.permute.xlu0 %1389
  %v1392 = vmul.f32 %v1386, %v1390
  %1394 = vrot.lane.b32.xlu0 %v1392, 64
  %v1395 = vpop.permute.xlu0 %1394
  %v1397 = vadd.f32 %v1381, %v1395
  %v1398 = vtanh.pop %v1397
  %v1399 = vsub.f32 1.0, %v1386
  %1401 = vrot.lane.b32.xlu0 %v1398, 96
  %v1402 = vpop.permute.xlu0 %1401
  %v1404 = vmul.f32 %v1399, %v1402
  %v1405 = vmul.f32 %v1386, %v1199
  %v1406 = vadd.f32 %v1404, %v1405
  %1408 = vrot.lane.b32.xlu0 %v1379, 96
  %v1409 = vpop.permute.xlu0 %1408
  %1411 = vst.msk [vmem:[%s788] sm:$0x3] %vm367, %v1409
  %1412 = vst.msk [vmem:[%s786] sm:$0x3] %vm370, %v1406
  %v1413 = vsel %vm140, %v1409, 0
  %1415 = vmatprep.subr.mxu0 0.0
  %1416 = vmatpush1.msra.mxu0 %v147
  %1417 = vmatprep.subr.mxu0 0.0
  %1418 = vmatpush1.msra.mxu0 %v148
  %1419 = vmatprep.subr.mxu0 0.0
  %1420 = vmatpush1.msra.mxu0 %v149
  %1421 = vmatprep.subr.mxu0 0.0
  %1422 = vmatpush1.msra.mxu0 %v150
  %1423 = vmatprep.subr.mxu0 0.0
  %1424 = vmatpush1.msra.mxu0 0.0
  %1425 = vmatprep.subr.mxu0 0.0
  %1426 = vmatpush1.msra.mxu0 0.0
  %1427 = vmatprep.subr.mxu0 0.0
  %1428 = vmatpush1.msra.mxu0 0.0
  %1429 = vmatprep.subr.mxu0 0.0
  %1430 = vmatpush1.msra.mxu0 0.0
  %1431 = vmatprep.subr.mxu0 0.0
  %1432 = vmatpush1.msra.mxu0 0.0
  %1433 = vmatprep.subr.mxu0 0.0
  %1434 = vmatpush1.msra.mxu0 0.0
  %1435 = vmatprep.subr.mxu0 0.0
  %1436 = vmatpush1.msra.mxu0 0.0
  %1437 = vmatprep.subr.mxu0 0.0
  %1438 = vmatpush1.msra.mxu0 0.0
  %1439 = vmatprep.subr.mxu0 0.0
  %1440 = vmatpush1.msra.mxu0 0.0
  %1441 = vmatprep.subr.mxu0 0.0
  %1442 = vmatpush1.msra.mxu0 0.0
  %1443 = vmatprep.subr.mxu0 0.0
  %1444 = vmatpush1.msra.mxu0 0.0
  %1445 = vmatprep.subr.mxu0 0.0
  %1446 = vmatpush1.msra.mxu0 0.0
  %1447 = vmatprep.subr.mxu0 0.0
  %1448 = vmatpush1.msra.mxu0 0.0
  %1449 = vmatprep.subr.mxu0 0.0
  %1450 = vmatpush1.msra.mxu0 0.0
  %1451 = vmatprep.subr.mxu0 0.0
  %1452 = vmatpush1.msra.mxu0 0.0
  %1453 = vmatprep.subr.mxu0 0.0
  %1454 = vmatpush1.msra.mxu0 0.0
  %1455 = vmatprep.subr.mxu0 0.0
  %1456 = vmatpush1.msra.mxu0 0.0
  %1457 = vmatprep.subr.mxu0 0.0
  %1458 = vmatpush1.msra.mxu0 0.0
  %1459 = vmatprep.subr.mxu0 0.0
  %1460 = vmatpush1.msra.mxu0 0.0
  %1461 = vmatprep.subr.mxu0 0.0
  %1462 = vmatpush1.msra.mxu0 0.0
  %1463 = vmatprep.subr.mxu0 0.0
  %1464 = vmatpush1.msra.mxu0 0.0
  %1465 = vmatprep.subr.mxu0 0.0
  %1466 = vmatpush1.msra.mxu0 0.0
  %1467 = vmatprep.subr.mxu0 0.0
  %1468 = vmatpush1.msra.mxu0 0.0
  %1469 = vmatprep.subr.mxu0 0.0
  %1470 = vmatpush1.msra.mxu0 0.0
  %1471 = vmatprep.subr.mxu0 0.0
  %1472 = vmatpush1.msra.mxu0 0.0
  %1473 = vmatprep.subr.mxu0 0.0
  %1474 = vmatpush1.msra.mxu0 0.0
  %1475 = vmatprep.subr.mxu0 0.0
  %1476 = vmatpush1.msra.mxu0 0.0
  %1477 = vmatprep.subr.mxu0 0.0
  %1478 = vmatpush1.msra.mxu0 0.0
  %1479 = vmatprep.mubr.f32.mxu0 0.0
  %1480 = vmatmul.mubr.f32.gmra.mrb[0].mxu0 %v1413
  %v1481 = vpop.f32.mrb[0].mxu0
  %v1482 = vadd.f32 0.0, %v1481
  %v1483 = vpop.f32.mrb[0].mxu0
  %1484 = vdwg.mxu0
  %1486 = vrot.lane.b32.xlu0 %v1406, 96
  %v1487 = vpop.permute.xlu0 %1486
  %v1488 = vsel %vm140, %v1487, 0
  %1490 = vmatprep.subr.mxu0 0.0
  %1491 = vmatpush1.msra.mxu0 %v151
  %1492 = vmatprep.subr.mxu0 0.0
  %1493 = vmatpush1.msra.mxu0 %v152
  %1494 = vmatprep.subr.mxu0 0.0
  %1495 = vmatpush1.msra.mxu0 %v153
  %1496 = vmatprep.subr.mxu0 0.0
  %1497 = vmatpush1.msra.mxu0 %v154
  %1498 = vmatprep.subr.mxu0 0.0
  %1499 = vmatpush1.msra.mxu0 0.0
  %1500 = vmatprep.subr.mxu0 0.0
  %1501 = vmatpush1.msra.mxu0 0.0
  %1502 = vmatprep.subr.mxu0 0.0
  %1503 = vmatpush1.msra.mxu0 0.0
  %1504 = vmatprep.subr.mxu0 0.0
  %1505 = vmatpush1.msra.mxu0 0.0
  %1506 = vmatprep.subr.mxu0 0.0
  %1507 = vmatpush1.msra.mxu0 0.0
  %1508 = vmatprep.subr.mxu0 0.0
  %1509 = vmatpush1.msra.mxu0 0.0
  %1510 = vmatprep.subr.mxu0 0.0
  %1511 = vmatpush1.msra.mxu0 0.0
  %1512 = vmatprep.subr.mxu0 0.0
  %1513 = vmatpush1.msra.mxu0 0.0
  %1514 = vmatprep.subr.mxu0 0.0
  %1515 = vmatpush1.msra.mxu0 0.0
  %1516 = vmatprep.subr.mxu0 0.0
  %1517 = vmatpush1.msra.mxu0 0.0
  %1518 = vmatprep.subr.mxu0 0.0
  %1519 = vmatpush1.msra.mxu0 0.0
  %1520 = vmatprep.subr.mxu0 0.0
  %1521 = vmatpush1.msra.mxu0 0.0
  %1522 = vmatprep.subr.mxu0 0.0
  %1523 = vmatpush1.msra.mxu0 0.0
  %1524 = vmatprep.subr.mxu0 0.0
  %1525 = vmatpush1.msra.mxu0 0.0
  %1526 = vmatprep.subr.mxu0 0.0
  %1527 = vmatpush1.msra.mxu0 0.0
  %1528 = vmatprep.subr.mxu0 0.0
  %1529 = vmatpush1.msra.mxu0 0.0
  %1530 = vmatprep.subr.mxu0 0.0
  %1531 = vmatpush1.msra.mxu0 0.0
  %1532 = vmatprep.subr.mxu0 0.0
  %1533 = vmatpush1.msra.mxu0 0.0
  %1534 = vmatprep.subr.mxu0 0.0
  %1535 = vmatpush1.msra.mxu0 0.0
  %1536 = vmatprep.subr.mxu0 0.0
  %1537 = vmatpush1.msra.mxu0 0.0
  %1538 = vmatprep.subr.mxu0 0.0
  %1539 = vmatpush1.msra.mxu0 0.0
  %1540 = vmatprep.subr.mxu0 0.0
  %1541 = vmatpush1.msra.mxu0 0.0
  %1542 = vmatprep.subr.mxu0 0.0
  %1543 = vmatpush1.msra.mxu0 0.0
  %1544 = vmatprep.subr.mxu0 0.0
  %1545 = vmatpush1.msra.mxu0 0.0
  %1546 = vmatprep.subr.mxu0 0.0
  %1547 = vmatpush1.msra.mxu0 0.0
  %1548 = vmatprep.subr.mxu0 0.0
  %1549 = vmatpush1.msra.mxu0 0.0
  %1550 = vmatprep.subr.mxu0 0.0
  %1551 = vmatpush1.msra.mxu0 0.0
  %1552 = vmatprep.subr.mxu0 0.0
  %1553 = vmatpush1.msra.mxu0 0.0
  %1554 = vmatprep.mubr.f32.mxu0 0.0
  %1555 = vmatmul.mubr.f32.gmra.mrb[0].mxu0 %v1488
  %v1556 = vpop.f32.mrb[0].mxu0
  %v1557 = vadd.f32 0.0, %v1556
  %v1558 = vpop.f32.mrb[0].mxu0
  %1559 = vdwg.mxu0
  %s1560 = scalar_lea.vmem [#allocation2], 12
  %v1561 = vld [vmem:[%s1560] sm:$0x3]
  %v1562 = vadd.f32 %v1561, %v1482
  %v1563 = vmul.f32 %v1562, 0.5
  %v1564 = vtanh.pop %v1563
  %v1565 = vadd.f32 %v1564, 1.0
  %v1566 = vmul.f32 %v1565, 0.5
  %v1567 = vadd.f32 %v1482, %v311
  %1569 = vrot.lane.b32.xlu0 %v1567, 64
  %v1570 = vpop.permute.xlu0 %1569
  %v1572 = vmul.f32 %v1566, %v1570
  %1574 = vrot.lane.b32.xlu0 %v1572, 64
  %v1575 = vpop.permute.xlu0 %1574
  %v1577 = vadd.f32 %v1561, %v1575
  %v1578 = vtanh.pop %v1577
  %v1579 = vsub.f32 1.0, %v1566
  %1581 = vrot.lane.b32.xlu0 %v1578, 96
  %v1582 = vpop.permute.xlu0 %1581
  %v1584 = vmul.f32 %v1579, %v1582
  %v1585 = vmul.f32 %v1566, %v1379
  %v1586 = vadd.f32 %v1584, %v1585
  %s1587 = scalar_lea.vmem [#allocation3], 2
  %v1588 = vld [vmem:[%s1587] sm:$0x3]
  %v1589 = vadd.f32 %v1588, %v1557
  %v1590 = vmul.f32 %v1589, 0.5
  %v1591 = vtanh.pop %v1590
  %v1592 = vadd.f32 %v1591, 1.0
  %v1593 = vmul.f32 %v1592, 0.5
  %v1594 = vadd.f32 %v1557, %v341
  %1596 = vrot.lane.b32.xlu0 %v1594, 64
  %v1597 = vpop.permute.xlu0 %1596
  %v1599 = vmul.f32 %v1593, %v1597
  %1601 = vrot.lane.b32.xlu0 %v1599, 64
  %v1602 = vpop.permute.xlu0 %1601
  %v1604 = vadd.f32 %v1588, %v1602
  %v1605 = vtanh.pop %v1604
  %v1606 = vsub.f32 1.0, %v1593
  %1608 = vrot.lane.b32.xlu0 %v1605, 96
  %v1609 = vpop.permute.xlu0 %1608
  %v1611 = vmul.f32 %v1606, %v1609
  %v1612 = vmul.f32 %v1593, %v1406
  %v1613 = vadd.f32 %v1611, %v1612
  %1615 = vrot.lane.b32.xlu0 %v1586, 96
  %v1616 = vpop.permute.xlu0 %1615
  %1618 = vst.msk [vmem:[%s579] sm:$0x3] %vm367, %v1616
  %1619 = vst.msk [vmem:[%s577] sm:$0x3] %vm370, %v1613
  %v1620 = vsel %vm140, %v1616, 0
  %1622 = vmatprep.subr.mxu0 0.0
  %1623 = vmatpush1.msra.mxu0 %v147
  %1624 = vmatprep.subr.mxu0 0.0
  %1625 = vmatpush1.msra.mxu0 %v148
  %1626 = vmatprep.subr.mxu0 0.0
  %1627 = vmatpush1.msra.mxu0 %v149
  %1628 = vmatprep.subr.mxu0 0.0
  %1629 = vmatpush1.msra.mxu0 %v150
  %1630 = vmatprep.subr.mxu0 0.0
  %1631 = vmatpush1.msra.mxu0 0.0
  %1632 = vmatprep.subr.mxu0 0.0
  %1633 = vmatpush1.msra.mxu0 0.0
  %1634 = vmatprep.subr.mxu0 0.0
  %1635 = vmatpush1.msra.mxu0 0.0
  %1636 = vmatprep.subr.mxu0 0.0
  %1637 = vmatpush1.msra.mxu0 0.0
  %1638 = vmatprep.subr.mxu0 0.0
  %1639 = vmatpush1.msra.mxu0 0.0
  %1640 = vmatprep.subr.mxu0 0.0
  %1641 = vmatpush1.msra.mxu0 0.0
  %1642 = vmatprep.subr.mxu0 0.0
  %1643 = vmatpush1.msra.mxu0 0.0
  %1644 = vmatprep.subr.mxu0 0.0
  %1645 = vmatpush1.msra.mxu0 0.0
  %1646 = vmatprep.subr.mxu0 0.0
  %1647 = vmatpush1.msra.mxu0 0.0
  %1648 = vmatprep.subr.mxu0 0.0
  %1649 = vmatpush1.msra.mxu0 0.0
  %1650 = vmatprep.subr.mxu0 0.0
  %1651 = vmatpush1.msra.mxu0 0.0
  %1652 = vmatprep.subr.mxu0 0.0
  %1653 = vmatpush1.msra.mxu0 0.0
  %1654 = vmatprep.subr.mxu0 0.0
  %1655 = vmatpush1.msra.mxu0 0.0
  %1656 = vmatprep.subr.mxu0 0.0
  %1657 = vmatpush1.msra.mxu0 0.0
  %1658 = vmatprep.subr.mxu0 0.0
  %1659 = vmatpush1.msra.mxu0 0.0
  %1660 = vmatprep.subr.mxu0 0.0
  %1661 = vmatpush1.msra.mxu0 0.0
  %1662 = vmatprep.subr.mxu0 0.0
  %1663 = vmatpush1.msra.mxu0 0.0
  %1664 = vmatprep.subr.mxu0 0.0
  %1665 = vmatpush1.msra.mxu0 0.0
  %1666 = vmatprep.subr.mxu0 0.0
  %1667 = vmatpush1.msra.mxu0 0.0
  %1668 = vmatprep.subr.mxu0 0.0
  %1669 = vmatpush1.msra.mxu0 0.0
  %1670 = vmatprep.subr.mxu0 0.0
  %1671 = vmatpush1.msra.mxu0 0.0
  %1672 = vmatprep.subr.mxu0 0.0
  %1673 = vmatpush1.msra.mxu0 0.0
  %1674 = vmatprep.subr.mxu0 0.0
  %1675 = vmatpush1.msra.mxu0 0.0
  %1676 = vmatprep.subr.mxu0 0.0
  %1677 = vmatpush1.msra.mxu0 0.0
  %1678 = vmatprep.subr.mxu0 0.0
  %1679 = vmatpush1.msra.mxu0 0.0
  %1680 = vmatprep.subr.mxu0 0.0
  %1681 = vmatpush1.msra.mxu0 0.0
  %1682 = vmatprep.subr.mxu0 0.0
  %1683 = vmatpush1.msra.mxu0 0.0
  %1684 = vmatprep.subr.mxu0 0.0
  %1685 = vmatpush1.msra.mxu0 0.0
  %1686 = vmatprep.mubr.f32.mxu0 0.0
  %1687 = vmatmul.mubr.f32.gmra.mrb[0].mxu0 %v1620
  %v1688 = vpop.f32.mrb[0].mxu0
  %v1689 = vadd.f32 0.0, %v1688
  %v1690 = vpop.f32.mrb[0].mxu0
  %1691 = vdwg.mxu0
  %1693 = vrot.lane.b32.xlu0 %v1613, 96
  %v1694 = vpop.permute.xlu0 %1693
  %v1695 = vsel %vm140, %v1694, 0
  %1697 = vmatprep.subr.mxu0 0.0
  %1698 = vmatpush1.msra.mxu0 %v151
  %1699 = vmatprep.subr.mxu0 0.0
  %1700 = vmatpush1.msra.mxu0 %v152
  %1701 = vmatprep.subr.mxu0 0.0
  %1702 = vmatpush1.msra.mxu0 %v153
  %1703 = vmatprep.subr.mxu0 0.0
  %1704 = vmatpush1.msra.mxu0 %v154
  %1705 = vmatprep.subr.mxu0 0.0
  %1706 = vmatpush1.msra.mxu0 0.0
  %1707 = vmatprep.subr.mxu0 0.0
  %1708 = vmatpush1.msra.mxu0 0.0
  %1709 = vmatprep.subr.mxu0 0.0
  %1710 = vmatpush1.msra.mxu0 0.0
  %1711 = vmatprep.subr.mxu0 0.0
  %1712 = vmatpush1.msra.mxu0 0.0
  %1713 = vmatprep.subr.mxu0 0.0
  %1714 = vmatpush1.msra.mxu0 0.0
  %1715 = vmatprep.subr.mxu0 0.0
  %1716 = vmatpush1.msra.mxu0 0.0
  %1717 = vmatprep.subr.mxu0 0.0
  %1718 = vmatpush1.msra.mxu0 0.0
  %1719 = vmatprep.subr.mxu0 0.0
  %1720 = vmatpush1.msra.mxu0 0.0
  %1721 = vmatprep.subr.mxu0 0.0
  %1722 = vmatpush1.msra.mxu0 0.0
  %1723 = vmatprep.subr.mxu0 0.0
  %1724 = vmatpush1.msra.mxu0 0.0
  %1725 = vmatprep.subr.mxu0 0.0
  %1726 = vmatpush1.msra.mxu0 0.0
  %1727 = vmatprep.subr.mxu0 0.0
  %1728 = vmatpush1.msra.mxu0 0.0
  %1729 = vmatprep.subr.mxu0 0.0
  %1730 = vmatpush1.msra.mxu0 0.0
  %1731 = vmatprep.subr.mxu0 0.0
  %1732 = vmatpush1.msra.mxu0 0.0
  %1733 = vmatprep.subr.mxu0 0.0
  %1734 = vmatpush1.msra.mxu0 0.0
  %1735 = vmatprep.subr.mxu0 0.0
  %1736 = vmatpush1.msra.mxu0 0.0
  %1737 = vmatprep.subr.mxu0 0.0
  %1738 = vmatpush1.msra.mxu0 0.0
  %1739 = vmatprep.subr.mxu0 0.0
  %1740 = vmatpush1.msra.mxu0 0.0
  %1741 = vmatprep.subr.mxu0 0.0
  %1742 = vmatpush1.msra.mxu0 0.0
  %1743 = vmatprep.subr.mxu0 0.0
  %1744 = vmatpush1.msra.mxu0 0.0
  %1745 = vmatprep.subr.mxu0 0.0
  %1746 = vmatpush1.msra.mxu0 0.0
  %1747 = vmatprep.subr.mxu0 0.0
  %1748 = vmatpush1.msra.mxu0 0.0
  %1749 = vmatprep.subr.mxu0 0.0
  %1750 = vmatpush1.msra.mxu0 0.0
  %1751 = vmatprep.subr.mxu0 0.0
  %1752 = vmatpush1.msra.mxu0 0.0
  %1753 = vmatprep.subr.mxu0 0.0
  %1754 = vmatpush1.msra.mxu0 0.0
  %1755 = vmatprep.subr.mxu0 0.0
  %1756 = vmatpush1.msra.mxu0 0.0
  %1757 = vmatprep.subr.mxu0 0.0
  %1758 = vmatpush1.msra.mxu0 0.0
  %1759 = vmatprep.subr.mxu0 0.0
  %1760 = vmatpush1.msra.mxu0 0.0
  %1761 = vmatprep.mubr.f32.mxu0 0.0
  %1762 = vmatmul.mubr.f32.gmra.mrb[0].mxu0 %v1695
  %v1763 = vpop.f32.mrb[0].mxu0
  %v1764 = vadd.f32 0.0, %v1763
  %v1765 = vpop.f32.mrb[0].mxu0
  %1766 = vdwg.mxu0
  %s1767 = scalar_lea.vmem [#allocation2], 14
  %v1768 = vld [vmem:[%s1767] sm:$0x3]
  %v1769 = vadd.f32 %v1768, %v1689
  %v1770 = vmul.f32 %v1769, 0.5
  %v1771 = vtanh.pop %v1770
  %v1772 = vadd.f32 %v1771, 1.0
  %v1773 = vmul.f32 %v1772, 0.5
  %v1774 = vadd.f32 %v1689, %v311
  %1776 = vrot.lane.b32.xlu0 %v1774, 64
  %v1777 = vpop.permute.xlu0 %1776
  %v1779 = vmul.f32 %v1773, %v1777
  %1781 = vrot.lane.b32.xlu0 %v1779, 64
  %v1782 = vpop.permute.xlu0 %1781
  %v1784 = vadd.f32 %v1768, %v1782
  %v1785 = vtanh.pop %v1784
  %v1786 = vsub.f32 1.0, %v1773
  %1788 = vrot.lane.b32.xlu0 %v1785, 96
  %v1789 = vpop.permute.xlu0 %1788
  %v1791 = vmul.f32 %v1786, %v1789
  %v1792 = vmul.f32 %v1773, %v1586
  %v1793 = vadd.f32 %v1791, %v1792
  %v1794 = vld [vmem:[#allocation3] sm:$0x3]
  %v1795 = vadd.f32 %v1794, %v1764
  %v1796 = vmul.f32 %v1795, 0.5
  %v1797 = vtanh.pop %v1796
  %v1798 = vadd.f32 %v1797, 1.0
  %v1799 = vmul.f32 %v1798, 0.5
  %v1800 = vadd.f32 %v1764, %v341
  %1802 = vrot.lane.b32.xlu0 %v1800, 64
  %v1803 = vpop.permute.xlu0 %1802
  %v1805 = vmul.f32 %v1799, %v1803
  %1807 = vrot.lane.b32.xlu0 %v1805, 64
  %v1808 = vpop.permute.xlu0 %1807
  %v1810 = vadd.f32 %v1794, %v1808
  %v1811 = vtanh.pop %v1810
  %v1812 = vsub.f32 1.0, %v1799
  %1814 = vrot.lane.b32.xlu0 %v1811, 96
  %v1815 = vpop.permute.xlu0 %1814
  %v1817 = vmul.f32 %v1812, %v1815
  %v1818 = vmul.f32 %v1799, %v1613
  %v1819 = vadd.f32 %v1817, %v1818
  %1821 = vrot.lane.b32.xlu0 %v1793, 96
  %v1822 = vpop.permute.xlu0 %1821
  %1824 = vst.msk [vmem:[%s369] sm:$0x3] %vm367, %v1822
  %1825 = vst.msk [vmem:[%s6] sm:$0x3] %vm370, %v1819
  // Predicated region
  $region26: #{gru_forward.2} parent=0 // pred_check
    _
  $region27: #{gru_forward.2} parent=0 // pred_check_branch
    %1827 = sbr.rel (0) target = $region29
  $region28: #{gru_forward.2} parent=0 // pred_region
    _
  $region29: #{gru_forward.2} parent=0 // pred_fallthru
    _
  // Predicated region
  $region30: #{gru_forward.2} parent=0 // pred_check
    _
  $region31: #{gru_forward.2} parent=0 // pred_check_branch
    %1829 = sbr.rel (0) target = $region33
  $region32: #{gru_forward.2} parent=0 // pred_region
    _
  $region33: #{gru_forward.2} parent=0 // pred_fallthru
    _

</llo_original>
